<compile_context>
chip_gen: v6e
topology: v6e:2x2x1
jax: 0.10.0
libtpu: 0.0.40
codegen_flags: <defaults>
</compile_context>

<pallas_src>
import functools

import jax
import jax.numpy as jnp
from jax.experimental import pallas as pl
from jax.experimental.pallas import tpu as pltpu

_PREC = jax.lax.Precision.HIGHEST   # keep f32 accuracy parity with PyTorch
_NEG_BIG = -1e30                    # softmax mask value (exp underflows to 0)


def induction_kernel(x_ref, w_ref, o_ref, *, C, S, H, iterations):
    x2d = x_ref[...]                                   # (C*S, H)
    w = w_ref[...]                                     # (H, H)

    # e_ij hoisted out of the routing loop (loop-invariant in the reference),
    # one MXU pass with K=H.  Its transpose is hoisted too: a single XLU
    # transpose total instead of one per routing iteration.
    e2d = jnp.dot(x2d, w, preferred_element_type=jnp.float32,
                  precision=_PREC)                     # (C*S, H)
    e2dT = e2d.T                                       # (H, C*S)

    # Routing logits carried as (C, C*S); column block c*S:(c+1)*S of row c is
    # the "real" b_ij[c, :]; all other entries are masked to -1e30 so exp()
    # underflows to exactly 0 in the per-class softmax.
    row = jax.lax.broadcasted_iota(jnp.int32, (C, C * S), 0)
    col = jax.lax.broadcasted_iota(jnp.int32, (C, C * S), 1)
    block_mask = (col >= row * S) & (col < row * S + S)            # (C, C*S)
    b_full = jnp.where(block_mask, 0.0, _NEG_BIG).astype(jnp.float32)

    c_i = jnp.zeros((C, H), jnp.float32)
    for _ in range(iterations):                        # static, fully unrolled
        # softmax over each class's own S columns (masked entries -> 0)
        m = jnp.max(b_full, axis=1, keepdims=True)
        p = jnp.exp(b_full - m)
        d = p / jnp.sum(p, axis=1, keepdims=True)      # (C, C*S)

        # c_i[c] = sum_s d[c, s] * e[c, s, :]  == one block-diagonal matmul
        c_i = jnp.dot(d, e2d, preferred_element_type=jnp.float32,
                      precision=_PREC)                 # (C, H)

        # squash: divide + sqrt chain replaced by one divide + EUP rsqrt
        sq = jnp.sum(c_i * c_i, axis=1, keepdims=True)  # (C, 1)
        coeff = (sq / (1.0 + sq)) * jax.lax.rsqrt(sq + 1e-9)
        c_i = coeff * c_i

        # b_ij[c, s] += sum_h e[c, s, h] * c_i[c, h]; uses the hoisted e2dT so
        # no per-iteration transpose is materialized.
        delta = jnp.dot(c_i, e2dT, preferred_element_type=jnp.float32,
                        precision=_PREC)               # (C, C*S)
        # Masked entries sit at -1e30 and |delta| << 1e29, so an unmasked add
        # keeps them deep in exp-underflow territory -> select dropped.
        b_full = b_full + delta

    o_ref[...] = c_i.astype(o_ref.dtype)


def induction_forward_batched(xb, W, iterations):
    """xb: (B, C, S, H), W: (H, H) -> (B, C, H).

    One grid step per Induction instance; the batch axis amortizes the fixed
    pallas_call launch/DMA cost and is marked "parallel" so v7x can shard
    instances across both TensorCores.
    """
    B, C, S, H = xb.shape
    x2d = xb.reshape(B, C * S, H).astype(jnp.float32)   # glue reshape (outside kernel)
    W = W.astype(jnp.float32)

    kernel = functools.partial(induction_kernel, C=C, S=S, H=H,
                               iterations=iterations)

    flops = B * (2 * (C * S) * H * H                       # x @ W
                 + iterations * 2 * (2 * C * (C * S) * H))  # d@e2d + c_i@e2dT
    transcendentals = B * iterations * (C * (C * S) + 2 * C)  # exp + rsqrt
    bytes_accessed = 4 * (B * C * S * H + H * H + B * C * H)

    return pl.pallas_call(
        kernel,
        out_shape=jax.ShapeDtypeStruct((B, C, H), jnp.float32),
        grid=(B,),
        in_specs=[
            # per-instance (C*S, H) tile; leading batch dim squeezed away
            pl.BlockSpec((None, C * S, H), lambda b: (b, 0, 0)),
            # W shared across all grid steps
            pl.BlockSpec((H, H), lambda b: (0, 0)),
        ],
        out_specs=pl.BlockSpec((None, C, H), lambda b: (b, 0, 0)),
        compiler_params=pltpu.CompilerParams(
            dimension_semantics=("parallel",)),
        cost_estimate=pl.CostEstimate(
            flops=flops,
            transcendentals=transcendentals,
            bytes_accessed=bytes_accessed),
    )(x2d, W)


def induction_forward(x, W, iterations):
    """Exact PyTorch-module interface: x (C, S, H) -> c_i (C, H)."""
    return induction_forward_batched(x[None], W, iterations)[0]


def induction_reference(x, W, iterations):
    """Plain-JAX mirror of the PyTorch forward (f32), for validation."""
    C, S, H = x.shape
    b_ij = jnp.zeros((C, S), jnp.float32)
    c_i = jnp.zeros((C, H), jnp.float32)
    for _ in range(iterations):
        d_i = jax.nn.softmax(b_ij[:, :, None], axis=1)            # (C, S, 1)
        e_ij = jnp.dot(x.reshape(-1, H), W, precision=_PREC).reshape(C, S, H)
        c_i = jnp.sum(d_i * e_ij, axis=1)                         # (C, H)
        squared = jnp.sum(c_i ** 2, axis=1).reshape(C, -1)        # (C, 1)
        coeff = squared / (1.0 + squared) / jnp.sqrt(squared + 1e-9)
        c_i = coeff * c_i
        c_produce_e = jnp.einsum('csh,ch->cs', e_ij, c_i, precision=_PREC)
        b_ij = b_ij + c_produce_e
    return c_i


if __name__ == "__main__":
    # Small shapes consistent with the module: C classes, S support, H hidden.
    # B = 2 exercises the batched (launch-amortizing) grid from the review.
    B, C, S, H, iterations = 2, 4, 8, 32, 3

    key = jax.random.PRNGKey(0)
    k_x, k_w = jax.random.split(key)
    xb = jax.random.normal(k_x, (B, C, S, H), dtype=jnp.float32)
    W = jax.random.normal(k_w, (H, H), dtype=jnp.float32)

    # Batched kernel (one grid step per instance).
    out_b = jax.block_until_ready(induction_forward_batched(xb, W, iterations))
    assert out_b.shape == (B, C, H)
    for b in range(B):
        expected = induction_reference(xb[b], W, iterations)
        assert jnp.allclose(out_b[b], expected, atol=1e-4, rtol=1e-4), (
            f"batch {b}: max abs err {jnp.max(jnp.abs(out_b[b] - expected))}")

    # Single-instance path (exact PyTorch-module interface).
    out_single = jax.block_until_ready(induction_forward(xb[0], W, iterations))
    expected0 = induction_reference(xb[0], W, iterations)
    assert out_single.shape == (C, H)
    assert jnp.allclose(out_single, expected0, atol=1e-4, rtol=1e-4), (
        f"single: max abs err {jnp.max(jnp.abs(out_single - expected0))}")

    print("KERNEL_OK")
</pallas_src>

<mosaic_0001>
module attributes {stable_mosaic.version = 11 : i64} {
  func.func @induction_kernel(%arg0: i32, %arg1: memref<1x32x32xf32, #tpu.memory_space<vmem>>, %arg2: memref<32x32xf32, #tpu.memory_space<vmem>>, %arg3: memref<1x4x32xf32, #tpu.memory_space<vmem>>) attributes {dimension_semantics = [#tpu.dimension_semantics<parallel>], iteration_bounds = array<i64: 2>, scalar_prefetch = 0 : i64, scratch_operands = 0 : i64, tpu.core_type = #tpu.core_type<tc>, window_params = [{transform_indices = @transform_0, window_bounds = array<i64: 1, 32, 32>}, {pipeline_mode = #tpu.pipeline_mode<synchronous>, transform_indices = @transform_1, window_bounds = array<i64: 32, 32>}, {transform_indices = @transform_2, window_bounds = array<i64: 1, 4, 32>}]} {
    %c0 = arith.constant 0 : index
    %c0_0 = arith.constant 0 : index
    %c0_1 = arith.constant 0 : index
    %0 = vector.load %arg1[%c0, %c0_0, %c0_1] : memref<1x32x32xf32, #tpu.memory_space<vmem>>, vector<1x32x32xf32>
    %1 = vector.shape_cast %0 : vector<1x32x32xf32> to vector<32x32xf32>
    %c0_2 = arith.constant 0 : index
    %c0_3 = arith.constant 0 : index
    %2 = vector.load %arg2[%c0_2, %c0_3] : memref<32x32xf32, #tpu.memory_space<vmem>>, vector<32x32xf32>
    %cst = arith.constant dense<0.000000e+00> : vector<32x32xf32>
    %3 = tpu.matmul %1, %2, %cst {dimension_numbers = #tpu.dot_dimension_numbers<[1], [0], [0], [1], [0, 0, 1, 1], [], []>, precision = #tpu.contract_precision<fp32>} : vector<32x32xf32>, vector<32x32xf32>, vector<32x32xf32> -> vector<32x32xf32>
    %4 = tpu.transpose %3, [1, 0] : vector<32x32xf32> -> vector<32x32xf32>
    %5 = tpu.iota {dimensions = array<i32: 0>} : vector<4x32xi32>
    %6 = tpu.iota {dimensions = array<i32: 1>} : vector<4x32xi32>
    %c8_i32 = arith.constant 8 : i32
    %7 = vector.broadcast %c8_i32 : i32 to vector<4x32xi32>
    %8 = arith.muli %5, %7 : vector<4x32xi32>
    %9 = arith.cmpi sge, %6, %8 : vector<4x32xi32>
    %c8_i32_4 = arith.constant 8 : i32
    %10 = vector.broadcast %c8_i32_4 : i32 to vector<4x32xi32>
    %11 = arith.muli %5, %10 : vector<4x32xi32>
    %c8_i32_5 = arith.constant 8 : i32
    %12 = vector.broadcast %c8_i32_5 : i32 to vector<4x32xi32>
    %13 = arith.addi %11, %12 : vector<4x32xi32>
    %14 = arith.cmpi slt, %6, %13 : vector<4x32xi32>
    %15 = arith.andi %9, %14 : vector<4x32xi1>
    %cst_6 = arith.constant 0.000000e+00 : f32
    %cst_7 = arith.constant -1.000000e+30 : f32
    %16 = vector.broadcast %cst_6 : f32 to vector<4x32xf32>
    %17 = vector.broadcast %cst_7 : f32 to vector<4x32xf32>
    %18 = arith.select %15, %16, %17 : vector<4x32xi1>, vector<4x32xf32>
    %cst_8 = arith.constant dense<0xFF800000> : vector<4xf32>
    %19 = vector.multi_reduction <maximumf>, %18, %cst_8 [1] : vector<4x32xf32> to vector<4xf32>
    %20 = vector.shape_cast %19 : vector<4xf32> to vector<4x1xf32>
    %21 = vector.broadcast %20 : vector<4x1xf32> to vector<4x32xf32>
    %22 = arith.subf %18, %21 : vector<4x32xf32>
    %23 = math.exp %22 : vector<4x32xf32>
    %cst_9 = arith.constant dense<0.000000e+00> : vector<4xf32>
    %24 = vector.multi_reduction <add>, %23, %cst_9 [1] : vector<4x32xf32> to vector<4xf32>
    %25 = vector.shape_cast %24 : vector<4xf32> to vector<4x1xf32>
    %26 = vector.broadcast %25 : vector<4x1xf32> to vector<4x32xf32>
    %27 = arith.divf %23, %26 : vector<4x32xf32>
    %cst_10 = arith.constant dense<0.000000e+00> : vector<4x32xf32>
    %28 = tpu.matmul %27, %3, %cst_10 {dimension_numbers = #tpu.dot_dimension_numbers<[1], [0], [0], [1], [0, 0, 1, 1], [], []>, precision = #tpu.contract_precision<fp32>} : vector<4x32xf32>, vector<32x32xf32>, vector<4x32xf32> -> vector<4x32xf32>
    %29 = arith.mulf %28, %28 : vector<4x32xf32>
    %cst_11 = arith.constant dense<0.000000e+00> : vector<4xf32>
    %30 = vector.multi_reduction <add>, %29, %cst_11 [1] : vector<4x32xf32> to vector<4xf32>
    %31 = vector.shape_cast %30 : vector<4xf32> to vector<4x1xf32>
    %cst_12 = arith.constant 1.000000e+00 : f32
    %32 = vector.broadcast %cst_12 : f32 to vector<4x1xf32>
    %33 = arith.addf %32, %31 : vector<4x1xf32>
    %34 = arith.divf %31, %33 : vector<4x1xf32>
    %cst_13 = arith.constant 9.99999971E-10 : f32
    %35 = vector.broadcast %cst_13 : f32 to vector<4x1xf32>
    %36 = arith.addf %31, %35 : vector<4x1xf32>
    %37 = math.rsqrt %36 : vector<4x1xf32>
    %38 = arith.mulf %34, %37 : vector<4x1xf32>
    %39 = vector.broadcast %38 : vector<4x1xf32> to vector<4x32xf32>
    %40 = arith.mulf %39, %28 : vector<4x32xf32>
    %cst_14 = arith.constant dense<0.000000e+00> : vector<4x32xf32>
    %41 = tpu.matmul %40, %4, %cst_14 {dimension_numbers = #tpu.dot_dimension_numbers<[1], [0], [0], [1], [0, 0, 1, 1], [], []>, precision = #tpu.contract_precision<fp32>} : vector<4x32xf32>, vector<32x32xf32>, vector<4x32xf32> -> vector<4x32xf32>
    %42 = arith.addf %18, %41 : vector<4x32xf32>
    %cst_15 = arith.constant dense<0xFF800000> : vector<4xf32>
    %43 = vector.multi_reduction <maximumf>, %42, %cst_15 [1] : vector<4x32xf32> to vector<4xf32>
    %44 = vector.shape_cast %43 : vector<4xf32> to vector<4x1xf32>
    %45 = vector.broadcast %44 : vector<4x1xf32> to vector<4x32xf32>
    %46 = arith.subf %42, %45 : vector<4x32xf32>
    %47 = math.exp %46 : vector<4x32xf32>
    %cst_16 = arith.constant dense<0.000000e+00> : vector<4xf32>
    %48 = vector.multi_reduction <add>, %47, %cst_16 [1] : vector<4x32xf32> to vector<4xf32>
    %49 = vector.shape_cast %48 : vector<4xf32> to vector<4x1xf32>
    %50 = vector.broadcast %49 : vector<4x1xf32> to vector<4x32xf32>
    %51 = arith.divf %47, %50 : vector<4x32xf32>
    %cst_17 = arith.constant dense<0.000000e+00> : vector<4x32xf32>
    %52 = tpu.matmul %51, %3, %cst_17 {dimension_numbers = #tpu.dot_dimension_numbers<[1], [0], [0], [1], [0, 0, 1, 1], [], []>, precision = #tpu.contract_precision<fp32>} : vector<4x32xf32>, vector<32x32xf32>, vector<4x32xf32> -> vector<4x32xf32>
    %53 = arith.mulf %52, %52 : vector<4x32xf32>
    %cst_18 = arith.constant dense<0.000000e+00> : vector<4xf32>
    %54 = vector.multi_reduction <add>, %53, %cst_18 [1] : vector<4x32xf32> to vector<4xf32>
    %55 = vector.shape_cast %54 : vector<4xf32> to vector<4x1xf32>
    %cst_19 = arith.constant 1.000000e+00 : f32
    %56 = vector.broadcast %cst_19 : f32 to vector<4x1xf32>
    %57 = arith.addf %56, %55 : vector<4x1xf32>
    %58 = arith.divf %55, %57 : vector<4x1xf32>
    %cst_20 = arith.constant 9.99999971E-10 : f32
    %59 = vector.broadcast %cst_20 : f32 to vector<4x1xf32>
    %60 = arith.addf %55, %59 : vector<4x1xf32>
    %61 = math.rsqrt %60 : vector<4x1xf32>
    %62 = arith.mulf %58, %61 : vector<4x1xf32>
    %63 = vector.broadcast %62 : vector<4x1xf32> to vector<4x32xf32>
    %64 = arith.mulf %63, %52 : vector<4x32xf32>
    %cst_21 = arith.constant dense<0.000000e+00> : vector<4x32xf32>
    %65 = tpu.matmul %64, %4, %cst_21 {dimension_numbers = #tpu.dot_dimension_numbers<[1], [0], [0], [1], [0, 0, 1, 1], [], []>, precision = #tpu.contract_precision<fp32>} : vector<4x32xf32>, vector<32x32xf32>, vector<4x32xf32> -> vector<4x32xf32>
    %66 = arith.addf %42, %65 : vector<4x32xf32>
    %cst_22 = arith.constant dense<0xFF800000> : vector<4xf32>
    %67 = vector.multi_reduction <maximumf>, %66, %cst_22 [1] : vector<4x32xf32> to vector<4xf32>
    %68 = vector.shape_cast %67 : vector<4xf32> to vector<4x1xf32>
    %69 = vector.broadcast %68 : vector<4x1xf32> to vector<4x32xf32>
    %70 = arith.subf %66, %69 : vector<4x32xf32>
    %71 = math.exp %70 : vector<4x32xf32>
    %cst_23 = arith.constant dense<0.000000e+00> : vector<4xf32>
    %72 = vector.multi_reduction <add>, %71, %cst_23 [1] : vector<4x32xf32> to vector<4xf32>
    %73 = vector.shape_cast %72 : vector<4xf32> to vector<4x1xf32>
    %74 = vector.broadcast %73 : vector<4x1xf32> to vector<4x32xf32>
    %75 = arith.divf %71, %74 : vector<4x32xf32>
    %cst_24 = arith.constant dense<0.000000e+00> : vector<4x32xf32>
    %76 = tpu.matmul %75, %3, %cst_24 {dimension_numbers = #tpu.dot_dimension_numbers<[1], [0], [0], [1], [0, 0, 1, 1], [], []>, precision = #tpu.contract_precision<fp32>} : vector<4x32xf32>, vector<32x32xf32>, vector<4x32xf32> -> vector<4x32xf32>
    %77 = arith.mulf %76, %76 : vector<4x32xf32>
    %cst_25 = arith.constant dense<0.000000e+00> : vector<4xf32>
    %78 = vector.multi_reduction <add>, %77, %cst_25 [1] : vector<4x32xf32> to vector<4xf32>
    %79 = vector.shape_cast %78 : vector<4xf32> to vector<4x1xf32>
    %cst_26 = arith.constant 1.000000e+00 : f32
    %80 = vector.broadcast %cst_26 : f32 to vector<4x1xf32>
    %81 = arith.addf %80, %79 : vector<4x1xf32>
    %82 = arith.divf %79, %81 : vector<4x1xf32>
    %cst_27 = arith.constant 9.99999971E-10 : f32
    %83 = vector.broadcast %cst_27 : f32 to vector<4x1xf32>
    %84 = arith.addf %79, %83 : vector<4x1xf32>
    %85 = math.rsqrt %84 : vector<4x1xf32>
    %86 = arith.mulf %82, %85 : vector<4x1xf32>
    %87 = vector.broadcast %86 : vector<4x1xf32> to vector<4x32xf32>
    %88 = arith.mulf %87, %76 : vector<4x32xf32>
    %c0_28 = arith.constant 0 : index
    %c0_29 = arith.constant 0 : index
    %c0_30 = arith.constant 0 : index
    %89 = vector.load %arg3[%c0_28, %c0_29, %c0_30] : memref<1x4x32xf32, #tpu.memory_space<vmem>>, vector<1x4x32xf32>
    %90 = vector.shape_cast %89 : vector<1x4x32xf32> to vector<4x32xf32>
    %91 = vector.shape_cast %88 : vector<4x32xf32> to vector<1x4x32xf32>
    tpu.vector_store %arg3[%c0_28, %c0_29, %c0_30], %91 {strides = array<i32>} : memref<1x4x32xf32, #tpu.memory_space<vmem>>, vector<1x4x32xf32>,
    return
  }
  func.func @transform_0(%arg0: i32) -> (i32, i32, i32) {
    %c0_i32 = arith.constant 0 : i32
    %c0_i32_0 = arith.constant 0 : i32
    %c0_i32_1 = arith.constant 0 : i32
    return %arg0, %c0_i32, %c0_i32_0 : i32, i32, i32
  }
  func.func @transform_1(%arg0: i32) -> (i32, i32) {
    %c0_i32 = arith.constant 0 : i32
    %c0_i32_0 = arith.constant 0 : i32
    %c0_i32_1 = arith.constant 0 : i32
    return %c0_i32, %c0_i32_0 : i32, i32
  }
  func.func @transform_2(%arg0: i32) -> (i32, i32, i32) {
    %c0_i32 = arith.constant 0 : i32
    %c0_i32_0 = arith.constant 0 : i32
    %c0_i32_1 = arith.constant 0 : i32
    return %arg0, %c0_i32, %c0_i32_0 : i32, i32, i32
  }
}

</mosaic_0001>

<llo_original>
// kernel: tpu_custom_call.1
$region0: #{tpu_custom_call.1}
  #allocation0 [shape = 'u32[]', space=smem, size = 0x4, offset = 0x4, fixed_abs, tag = 'smem constant byte address 0x4 - core index']
  #allocation1 [shape = 'u32[144,128]{1,0:T(1,128)}', space=vmem, size = 0x12000, scoped, tag = 'internal scratch']
  %s0 = inlined_call_operand.hbm [shape: f32[2,32,32], index: 0, kind: input, shape index: {}]
  %s1 = inlined_call_operand.hbm [shape: f32[32,32], index: 1, kind: input, shape index: {}]
  %s2 = inlined_call_operand.hbm [shape: f32[2,4,32], index: 2, kind: output, shape index: {}]
  %s3 = sld [smem:[#allocation0]]
  $region49: #{tpu_custom_call.1} parent=0
    _
  %s5 = ssub.s32 1, %s3
  %s6 = scalar_select 0, %s5, %s3
  $region1: #{tpu_custom_call.1} parent=0
    #allocation2 [shape = 'u8[32768]{0}', space=vmem, size = 0x8000, scoped, tag = 'input window, operand 0']
    #allocation3 [shape = 's32[2]{0}', space=sflag, size = 0x8, scoped, tag = 'scoped memory for tpu_custom_call.1']
    #allocation4 [shape = 's32[2]{0}', space=sflag, size = 0x8, scoped, tag = 'scoped memory for tpu_custom_call.1']
    #allocation5 [shape = 'u8[16384]{0}', space=vmem, size = 0x4000, scoped, tag = 'input window, operand 1, single buffered']
    #allocation6 [shape = 's32[1]{0}', space=sflag, size = 0x4, scoped, tag = 'scoped memory for tpu_custom_call.1']
    #allocation7 [shape = 'u8[4096]{0}', space=vmem, size = 0x1000, scoped, tag = 'output window, operand 0']
    %7 = vsyncpa [#allocation3], 0
    %s8 = scalar_lea.sflag [#allocation3], 1
    %9 = vsyncpa %s8, 0
    %10 = vsyncpa [#allocation6], 0
    %11 = vsyncpa [#allocation4], 0
    %s12 = scalar_lea.sflag [#allocation4], 1
    %13 = vsyncpa %s12, 0
    loop: start=0, step=1, limit=4
    $region2: #{tpu_custom_call.1} parent=1 // loop_pre_header
      _
    $region3: #{tpu_custom_call.1} parent=1 // loop_header
      %s15 = sphi 0, %s19
      %p16 = scmp.ge.s32.totalorder %s15, 4
      %s25 = sphi 0, %s27
      %s28 = sphi 0, %s25
      %s29 = sphi 0, %s28
      %s45 = sphi 0, %s29
      %s49 = sphi 0, %s49
      %s51 = sphi 0, %s49
      %s52 = sphi 0, %s51
      %s66 = sphi 0, %s52
      %s72 = sphi 0, %s74
      %s75 = sphi 0, %s72
      %s76 = sphi 0, %s75
      %s92 = sphi 0, %s76
    $region4: #{tpu_custom_call.1} parent=1 // loop_header_branch
      %18 = sbr.rel (%p16) target = $region8
    $region5: #{tpu_custom_call.1} parent=1 // loop_body
      %s20 = ssub.s32 %s15, 1
      %s21 = ssub.s32 %s15, 2
      %s22 = sadd.s32 %s15, 1
      %s23 = ssub.s32 %s15, %s22
      %p24 = scmp.eq.s32.totalorder %s23, 0
      %s26 = sadd.s32 %s25, 1
      %s27 = scalar_select %p24, %s25, %s26
      %p30 = pneg %p24
      %p31 = scmp.eq.s32.totalorder %s15, 1
      %p32 = por %p30, %p31
      %p33 = scmp.ne.s32.totalorder %s25, %s28
      %p34 = scmp.eq.s32.totalorder %s15, 0
      %p35 = por %p33, %p34
      %p36 = scmp.ne.s32.totalorder %s25, %s28
      %p37 = scmp.eq.s32.totalorder %s20, 1
      %p38 = por %p36, %p37
      %p39 = scmp.ne.s32.totalorder %s28, %s29
      %p40 = scmp.eq.s32.totalorder %s20, 0
      %p41 = por %p39, %p40
      %p42 = scmp.ne.s32.totalorder %s28, %s29
      %p43 = scmp.eq.s32.totalorder %s21, 1
      %p44 = por %p42, %p43
      %p46 = scmp.ne.s32.totalorder %s29, %s45
      %p47 = scmp.eq.s32.totalorder %s21, 0
      %p48 = por %p46, %p47
      %s50 = sadd.s32 %s49, 1
      %p53 = scmp.eq.s32.totalorder %s15, 1
      %p54 = scmp.ne.s32.totalorder %s49, %s51
      %p55 = scmp.eq.s32.totalorder %s15, 0
      %p56 = por %p54, %p55
      %p57 = scmp.ne.s32.totalorder %s49, %s51
      %p58 = scmp.eq.s32.totalorder %s20, 1
      %p59 = por %p57, %p58
      %p60 = scmp.ne.s32.totalorder %s51, %s52
      %p61 = scmp.eq.s32.totalorder %s20, 0
      %p62 = por %p60, %p61
      %p63 = scmp.ne.s32.totalorder %s51, %s52
      %p64 = scmp.eq.s32.totalorder %s21, 1
      %p65 = por %p63, %p64
      %p67 = scmp.ne.s32.totalorder %s52, %s66
      %p68 = scmp.eq.s32.totalorder %s21, 0
      %p69 = por %p67, %p68
      %s70 = ssub.s32 %s15, %s22
      %p71 = scmp.eq.s32.totalorder %s70, 0
      %s73 = sadd.s32 %s72, 1
      %s74 = scalar_select %p71, %s72, %s73
      %p77 = pneg %p71
      %p78 = scmp.eq.s32.totalorder %s15, 1
      %p79 = por %p77, %p78
      %p80 = scmp.ne.s32.totalorder %s72, %s75
      %p81 = scmp.eq.s32.totalorder %s15, 0
      %p82 = por %p80, %p81
      %p83 = scmp.ne.s32.totalorder %s72, %s75
      %p84 = scmp.eq.s32.totalorder %s20, 1
      %p85 = por %p83, %p84
      %p86 = scmp.ne.s32.totalorder %s75, %s76
      %p87 = scmp.eq.s32.totalorder %s20, 0
      %p88 = por %p86, %p87
      %p89 = scmp.ne.s32.totalorder %s75, %s76
      %p90 = scmp.eq.s32.totalorder %s21, 1
      %p91 = por %p89, %p90
      %p93 = scmp.ne.s32.totalorder %s76, %s92
      %p94 = scmp.eq.s32.totalorder %s21, 0
      %p95 = por %p93, %p94
      %p96 = scmp.le.s32.totalorder 1, %s15
      %p97 = scmp.lt.s32.totalorder %s15, 3
      %p98 = pnand %p96, %p97
      %p99 = pneg %p98
      // Predicated region
      $region9: #{tpu_custom_call.1} parent=5 // pred_check
        _
      $region10: #{tpu_custom_call.1} parent=5 // pred_check_branch
        %101 = sbr.rel (%p98) target = $region12
      $region11: #{tpu_custom_call.1} parent=5 // pred_region
        %s102 = ssub.s32 %s15, 1
        // Predicated region
        $region13: #{tpu_custom_call.1} parent=11 // pred_check
          %p103 = pneg %p62
        $region14: #{tpu_custom_call.1} parent=11 // pred_check_branch
          %105 = sbr.rel (%p103) target = $region16
        $region15: #{tpu_custom_call.1} parent=11 // pred_region
          %s107 = ssub.s32 512, 512
          %108 = vsyncadd [#allocation6], %s107
          %s109 = sshll.u32 [#allocation5], 4
          %s110 = int_to_ptr.vmem [resolvable:$true] %s109
          %115 = dma.hbm_to_vmem [thread:$0]  %s1, 512, %s110, [#allocation6], 128, 128, 8
        $region16: #{tpu_custom_call.1} parent=11 // pred_fallthru
          _
      $region12: #{tpu_custom_call.1} parent=5 // pred_fallthru
        _
      %p116 = scmp.lt.s32.totalorder %s15, 2
      // Predicated region
      $region17: #{tpu_custom_call.1} parent=5 // pred_check
        %p117 = pneg %p116
      $region18: #{tpu_custom_call.1} parent=5 // pred_check_branch
        %119 = sbr.rel (%p117) target = $region20
      $region19: #{tpu_custom_call.1} parent=5 // pred_region
        // Predicated region
        $region21: #{tpu_custom_call.1} parent=19 // pred_check
          %p120 = pneg %p35
        $region22: #{tpu_custom_call.1} parent=19 // pred_check_branch
          %122 = sbr.rel (%p120) target = $region24
        $region23: #{tpu_custom_call.1} parent=19 // pred_region
          %s123 = sand.u32 %s25, 1
          %s124 = scalar_lea.sflag [#allocation3], %s123
          %s125 = sand.u32 %s25, 1
          %s126 = smul.addr %s125, 32
          %s127 = scalar_lea.vmem [#allocation2], %s126
          %s129 = ssub.s32 512, 512
          %130 = vsyncadd %s124, %s129
          %s131 = smul.addr %s15, 4
          %s132 = smul.addr %s131, 128
          %s133 = scalar_lea.hbm %s0, %s132
          %s134 = sshll.u32 %s127, 4
          %s135 = int_to_ptr.vmem [resolvable:$true] %s134
          %140 = dma.hbm_to_vmem [thread:$0]  %s133, 512, %s135, %s124, 128, 128, 8
        $region24: #{tpu_custom_call.1} parent=19 // pred_fallthru
          _
      $region20: #{tpu_custom_call.1} parent=5 // pred_fallthru
        _
      %p141 = scmp.le.s32.totalorder 1, %s15
      %p142 = scmp.lt.s32.totalorder %s15, 3
      %p143 = pnand %p141, %p142
      %p144 = pneg %p143
      // Predicated region
      $region25: #{tpu_custom_call.1} parent=5 // pred_check
        _
      $region26: #{tpu_custom_call.1} parent=5 // pred_check_branch
        %146 = sbr.rel (%p143) target = $region28
      $region27: #{tpu_custom_call.1} parent=5 // pred_region
        %s147 = ssub.s32 %s15, 1
        %s148 = sand.u32 %s28, 1
        %s149 = scalar_lea.sflag [#allocation3], %s148
        %s150 = sand.u32 %s28, 1
        %s151 = smul.addr %s150, 32
        %s152 = scalar_lea.vmem [#allocation2], %s151
        // Predicated region
        $region29: #{tpu_custom_call.1} parent=27 // pred_check
          %p153 = pneg %p41
        $region30: #{tpu_custom_call.1} parent=27 // pred_check_branch
          %155 = sbr.rel (%p153) target = $region32
        $region31: #{tpu_custom_call.1} parent=27 // pred_region
          %156 = dma.done %s149, 512
        $region32: #{tpu_custom_call.1} parent=27 // pred_fallthru
          _
        // Predicated region
        $region33: #{tpu_custom_call.1} parent=27 // pred_check
          %p157 = pneg %p62
        $region34: #{tpu_custom_call.1} parent=27 // pred_check_branch
          %159 = sbr.rel (%p157) target = $region36
        $region35: #{tpu_custom_call.1} parent=27 // pred_region
          %160 = dma.done [#allocation6], 512
        $region36: #{tpu_custom_call.1} parent=27 // pred_fallthru
          _
        %s161 = sand.u32 %s28, 1
        %s162 = scalar_lea.sflag [#allocation3], %s161
        %s163 = sand.u32 %s28, 1
        %s164 = smul.addr %s163, 32
        %s165 = scalar_lea.vmem [#allocation2], %s164
        %p166 = pneg %p41
        %p167 = pneg %p38
        %p168 = pneg %p62
        %p169 = pneg %p59
        %p170 = pneg %p88
        %p171 = pneg %p85
        %s172 = sand.u32 %s75, 1
        %s173 = scalar_lea.sflag [#allocation4], %s172
        %s174 = sand.u32 %s75, 1
        %s175 = smul.addr %s174, 4
        %s176 = scalar_lea.vmem [#allocation7], %s175
        %v177 = vld [vmem:[%s152] sm:$0xff]
        %v178 = vld [vmem:[%s152 + $0x8] sm:$0xff]
        %v179 = vld [vmem:[%s152 + $0x10] sm:$0xff]
        %v180 = vld [vmem:[%s152 + $0x18] sm:$0xff]
        %v181 = vld [vmem:[#allocation5] sm:$0xff]
        %v182 = vld [vmem:[#allocation5 + $0x8] sm:$0xff]
        %v183 = vld [vmem:[#allocation5 + $0x10] sm:$0xff]
        %v184 = vld [vmem:[#allocation5 + $0x18] sm:$0xff]
        %vm185 = vcmask 261120
        %v187 = vsel %vm185, %v177, 0
        %v190 = vsel %vm185, %v178, 0
        %v193 = vsel %vm185, %v179, 0
        %v196 = vsel %vm185, %v180, 0
        %198 = vmatprep.subr.mxu0 0.0
        %199 = vmatpush1.msra.mxu0 0.0
        %200 = vmatprep.subr.mxu0 0.0
        %201 = vmatpush1.msra.mxu0 0.0
        %202 = vmatprep.subr.mxu0 0.0
        %203 = vmatpush1.msra.mxu0 0.0
        %204 = vmatprep.subr.mxu0 0.0
        %205 = vmatpush1.msra.mxu0 0.0
        %206 = vmatprep.subr.mxu0 0.0
        %207 = vmatpush1.msra.mxu0 0.0
        %208 = vmatprep.subr.mxu0 0.0
        %209 = vmatpush1.msra.mxu0 0.0
        %210 = vmatprep.subr.mxu0 0.0
        %211 = vmatpush1.msra.mxu0 0.0
        %212 = vmatprep.subr.mxu0 0.0
        %213 = vmatpush1.msra.mxu0 0.0
        %214 = vmatprep.subr.mxu0 0.0
        %215 = vmatpush1.msra.mxu0 0.0
        %216 = vmatprep.subr.mxu0 0.0
        %217 = vmatpush1.msra.mxu0 0.0
        %218 = vmatprep.subr.mxu0 0.0
        %219 = vmatpush1.msra.mxu0 0.0
        %220 = vmatprep.subr.mxu0 0.0
        %221 = vmatpush1.msra.mxu0 0.0
        %222 = vmatprep.subr.mxu0 0.0
        %v223 = vand.u32 %v184, 4294901760
        %224 = vmatpush1.msra.mxu0 %v223
        %225 = vmatprep.subr.mxu0 0.0
        %v226 = vand.u32 %v183, 4294901760
        %227 = vmatpush1.msra.mxu0 %v226
        %228 = vmatprep.subr.mxu0 0.0
        %v229 = vand.u32 %v182, 4294901760
        %230 = vmatpush1.msra.mxu0 %v229
        %231 = vmatprep.subr.mxu0 0.0
        %v232 = vand.u32 %v181, 4294901760
        %233 = vmatpush1.msra.mxu0 %v232
        %234 = vmatprep.subr.mxu0 0.0
        %235 = vmatpush2.msra.mxu0 0.0
        %236 = vmatprep.subr.mxu0 0.0
        %237 = vmatpush2.msra.mxu0 0.0
        %238 = vmatprep.subr.mxu0 0.0
        %239 = vmatpush2.msra.mxu0 0.0
        %240 = vmatprep.subr.mxu0 0.0
        %241 = vmatpush2.msra.mxu0 0.0
        %242 = vmatprep.subr.mxu0 0.0
        %243 = vmatpush2.msra.mxu0 0.0
        %244 = vmatprep.subr.mxu0 0.0
        %245 = vmatpush2.msra.mxu0 0.0
        %246 = vmatprep.subr.mxu0 0.0
        %247 = vmatpush2.msra.mxu0 0.0
        %248 = vmatprep.subr.mxu0 0.0
        %249 = vmatpush2.msra.mxu0 0.0
        %250 = vmatprep.subr.mxu0 0.0
        %251 = vmatpush2.msra.mxu0 0.0
        %252 = vmatprep.subr.mxu0 0.0
        %253 = vmatpush2.msra.mxu0 0.0
        %254 = vmatprep.subr.mxu0 0.0
        %255 = vmatpush2.msra.mxu0 0.0
        %256 = vmatprep.subr.mxu0 0.0
        %257 = vmatpush2.msra.mxu0 0.0
        %258 = vmatprep.subr.mxu0 0.0
        %259 = vmatpush2.msra.mxu0 0.0
        %260 = vmatprep.subr.mxu0 0.0
        %261 = vmatpush2.msra.mxu0 0.0
        %262 = vmatprep.subr.mxu0 0.0
        %263 = vmatpush2.msra.mxu0 0.0
        %264 = vmatprep.subr.mxu0 0.0
        %265 = vmatpush2.msra.mxu0 0.0
        %266 = vmatprep.mubr.f32.mxu0 0.0
        %v267 = vand.u32 %v187, 4294901760
        %v268 = vsub.f32 %v187, %v267
        %v269 = vand.u32 %v268, 4294901760
        %v270 = vsub.f32 %v268, %v269
        %v271 = vand.u32 %v270, 4294901760
        %272 = vmatmul.mubr.f32.gmra.mxu0 %v271
        %v273 = vpop.f32.mrf.mxu0
        %v274 = vadd.f32 0.0, %v273
        %v275 = vpop.f32.mrf.mxu0
        %276 = vmatprep.mubr.f32.mxu0 0.0
        %v277 = vand.u32 %v190, 4294901760
        %v278 = vsub.f32 %v190, %v277
        %v279 = vand.u32 %v278, 4294901760
        %v280 = vsub.f32 %v278, %v279
        %v281 = vand.u32 %v280, 4294901760
        %282 = vmatmul.mubr.f32.gmra.mxu0 %v281
        %v283 = vpop.f32.mrf.mxu0
        %v284 = vadd.f32 0.0, %v283
        %v285 = vpop.f32.mrf.mxu0
        %286 = vmatprep.mubr.f32.mxu0 0.0
        %v287 = vand.u32 %v193, 4294901760
        %v288 = vsub.f32 %v193, %v287
        %v289 = vand.u32 %v288, 4294901760
        %v290 = vsub.f32 %v288, %v289
        %v291 = vand.u32 %v290, 4294901760
        %292 = vmatmul.mubr.f32.gmra.mxu0 %v291
        %v293 = vpop.f32.mrf.mxu0
        %v294 = vadd.f32 0.0, %v293
        %v295 = vpop.f32.mrf.mxu0
        %296 = vmatprep.mubr.f32.mxu0 0.0
        %v297 = vand.u32 %v196, 4294901760
        %v298 = vsub.f32 %v196, %v297
        %v299 = vand.u32 %v298, 4294901760
        %v300 = vsub.f32 %v298, %v299
        %v301 = vand.u32 %v300, 4294901760
        %302 = vmatmul.mubr.f32.gmra.mxu0 %v301
        %v303 = vpop.f32.mrf.mxu0
        %v304 = vadd.f32 0.0, %v303
        %v305 = vpop.f32.mrf.mxu0
        %306 = vdwg.mxu0
        %307 = vmatprep.subr.mxu0 0.0
        %308 = vmatpush1.msra.mxu0 0.0
        %309 = vmatprep.subr.mxu0 0.0
        %310 = vmatpush1.msra.mxu0 0.0
        %311 = vmatprep.subr.mxu0 0.0
        %312 = vmatpush1.msra.mxu0 0.0
        %313 = vmatprep.subr.mxu0 0.0
        %314 = vmatpush1.msra.mxu0 0.0
        %315 = vmatprep.subr.mxu0 0.0
        %316 = vmatpush1.msra.mxu0 0.0
        %317 = vmatprep.subr.mxu0 0.0
        %318 = vmatpush1.msra.mxu0 0.0
        %319 = vmatprep.subr.mxu0 0.0
        %320 = vmatpush1.msra.mxu0 0.0
        %321 = vmatprep.subr.mxu0 0.0
        %322 = vmatpush1.msra.mxu0 0.0
        %323 = vmatprep.subr.mxu0 0.0
        %324 = vmatpush1.msra.mxu0 0.0
        %325 = vmatprep.subr.mxu0 0.0
        %326 = vmatpush1.msra.mxu0 0.0
        %327 = vmatprep.subr.mxu0 0.0
        %328 = vmatpush1.msra.mxu0 0.0
        %329 = vmatprep.subr.mxu0 0.0
        %330 = vmatpush1.msra.mxu0 0.0
        %331 = vmatprep.subr.mxu0 0.0
        %v332 = vand.u32 %v184, 4294901760
        %v333 = vsub.f32 %v184, %v332
        %v334 = vand.u32 %v333, 4294901760
        %v335 = vsub.f32 %v333, %v334
        %v336 = vand.u32 %v335, 4294901760
        %337 = vmatpush1.msra.mxu0 %v336
        %338 = vmatprep.subr.mxu0 0.0
        %v339 = vand.u32 %v183, 4294901760
        %v340 = vsub.f32 %v183, %v339
        %v341 = vand.u32 %v340, 4294901760
        %v342 = vsub.f32 %v340, %v341
        %v343 = vand.u32 %v342, 4294901760
        %344 = vmatpush1.msra.mxu0 %v343
        %345 = vmatprep.subr.mxu0 0.0
        %v346 = vand.u32 %v182, 4294901760
        %v347 = vsub.f32 %v182, %v346
        %v348 = vand.u32 %v347, 4294901760
        %v349 = vsub.f32 %v347, %v348
        %v350 = vand.u32 %v349, 4294901760
        %351 = vmatpush1.msra.mxu0 %v350
        %352 = vmatprep.subr.mxu0 0.0
        %v353 = vand.u32 %v181, 4294901760
        %v354 = vsub.f32 %v181, %v353
        %v355 = vand.u32 %v354, 4294901760
        %v356 = vsub.f32 %v354, %v355
        %v357 = vand.u32 %v356, 4294901760
        %358 = vmatpush1.msra.mxu0 %v357
        %359 = vmatprep.subr.mxu0 0.0
        %360 = vmatpush2.msra.mxu0 0.0
        %361 = vmatprep.subr.mxu0 0.0
        %362 = vmatpush2.msra.mxu0 0.0
        %363 = vmatprep.subr.mxu0 0.0
        %364 = vmatpush2.msra.mxu0 0.0
        %365 = vmatprep.subr.mxu0 0.0
        %366 = vmatpush2.msra.mxu0 0.0
        %367 = vmatprep.subr.mxu0 0.0
        %368 = vmatpush2.msra.mxu0 0.0
        %369 = vmatprep.subr.mxu0 0.0
        %370 = vmatpush2.msra.mxu0 0.0
        %371 = vmatprep.subr.mxu0 0.0
        %372 = vmatpush2.msra.mxu0 0.0
        %373 = vmatprep.subr.mxu0 0.0
        %374 = vmatpush2.msra.mxu0 0.0
        %375 = vmatprep.subr.mxu0 0.0
        %376 = vmatpush2.msra.mxu0 0.0
        %377 = vmatprep.subr.mxu0 0.0
        %378 = vmatpush2.msra.mxu0 0.0
        %379 = vmatprep.subr.mxu0 0.0
        %380 = vmatpush2.msra.mxu0 0.0
        %381 = vmatprep.subr.mxu0 0.0
        %382 = vmatpush2.msra.mxu0 0.0
        %383 = vmatprep.subr.mxu0 0.0
        %384 = vmatpush2.msra.mxu0 0.0
        %385 = vmatprep.subr.mxu0 0.0
        %386 = vmatpush2.msra.mxu0 0.0
        %387 = vmatprep.subr.mxu0 0.0
        %388 = vmatpush2.msra.mxu0 0.0
        %389 = vmatprep.subr.mxu0 0.0
        %390 = vmatpush2.msra.mxu0 0.0
        %391 = vmatprep.mubr.f32.mxu0 0.0
        %v392 = vand.u32 %v187, 4294901760
        %393 = vmatmul.mubr.f32.gmra.mxu0 %v392
        %v394 = vpop.f32.mrf.mxu0
        %v395 = vadd.f32 %v274, %v394
        %v396 = vpop.f32.mrf.mxu0
        %397 = vmatprep.mubr.f32.mxu0 0.0
        %v398 = vand.u32 %v190, 4294901760
        %399 = vmatmul.mubr.f32.gmra.mxu0 %v398
        %v400 = vpop.f32.mrf.mxu0
        %v401 = vadd.f32 %v284, %v400
        %v402 = vpop.f32.mrf.mxu0
        %403 = vmatprep.mubr.f32.mxu0 0.0
        %v404 = vand.u32 %v193, 4294901760
        %405 = vmatmul.mubr.f32.gmra.mxu0 %v404
        %v406 = vpop.f32.mrf.mxu0
        %v407 = vadd.f32 %v294, %v406
        %v408 = vpop.f32.mrf.mxu0
        %409 = vmatprep.mubr.f32.mxu0 0.0
        %v410 = vand.u32 %v196, 4294901760
        %411 = vmatmul.mubr.f32.gmra.mxu0 %v410
        %v412 = vpop.f32.mrf.mxu0
        %v413 = vadd.f32 %v304, %v412
        %v414 = vpop.f32.mrf.mxu0
        %415 = vdwg.mxu0
        %416 = vmatprep.subr.mxu0 0.0
        %417 = vmatpush1.msra.mxu0 0.0
        %418 = vmatprep.subr.mxu0 0.0
        %419 = vmatpush1.msra.mxu0 0.0
        %420 = vmatprep.subr.mxu0 0.0
        %421 = vmatpush1.msra.mxu0 0.0
        %422 = vmatprep.subr.mxu0 0.0
        %423 = vmatpush1.msra.mxu0 0.0
        %424 = vmatprep.subr.mxu0 0.0
        %425 = vmatpush1.msra.mxu0 0.0
        %426 = vmatprep.subr.mxu0 0.0
        %427 = vmatpush1.msra.mxu0 0.0
        %428 = vmatprep.subr.mxu0 0.0
        %429 = vmatpush1.msra.mxu0 0.0
        %430 = vmatprep.subr.mxu0 0.0
        %431 = vmatpush1.msra.mxu0 0.0
        %432 = vmatprep.subr.mxu0 0.0
        %433 = vmatpush1.msra.mxu0 0.0
        %434 = vmatprep.subr.mxu0 0.0
        %435 = vmatpush1.msra.mxu0 0.0
        %436 = vmatprep.subr.mxu0 0.0
        %437 = vmatpush1.msra.mxu0 0.0
        %438 = vmatprep.subr.mxu0 0.0
        %439 = vmatpush1.msra.mxu0 0.0
        %440 = vmatprep.subr.mxu0 0.0
        %v441 = vand.u32 %v184, 4294901760
        %v442 = vsub.f32 %v184, %v441
        %443 = vmatpush1.msra.mxu0 %v442
        %444 = vmatprep.subr.mxu0 0.0
        %v445 = vand.u32 %v183, 4294901760
        %v446 = vsub.f32 %v183, %v445
        %447 = vmatpush1.msra.mxu0 %v446
        %448 = vmatprep.subr.mxu0 0.0
        %v449 = vand.u32 %v182, 4294901760
        %v450 = vsub.f32 %v182, %v449
        %451 = vmatpush1.msra.mxu0 %v450
        %452 = vmatprep.subr.mxu0 0.0
        %v453 = vand.u32 %v181, 4294901760
        %v454 = vsub.f32 %v181, %v453
        %455 = vmatpush1.msra.mxu0 %v454
        %456 = vmatprep.subr.mxu0 0.0
        %457 = vmatpush2.msra.mxu0 0.0
        %458 = vmatprep.subr.mxu0 0.0
        %459 = vmatpush2.msra.mxu0 0.0
        %460 = vmatprep.subr.mxu0 0.0
        %461 = vmatpush2.msra.mxu0 0.0
        %462 = vmatprep.subr.mxu0 0.0
        %463 = vmatpush2.msra.mxu0 0.0
        %464 = vmatprep.subr.mxu0 0.0
        %465 = vmatpush2.msra.mxu0 0.0
        %466 = vmatprep.subr.mxu0 0.0
        %467 = vmatpush2.msra.mxu0 0.0
        %468 = vmatprep.subr.mxu0 0.0
        %469 = vmatpush2.msra.mxu0 0.0
        %470 = vmatprep.subr.mxu0 0.0
        %471 = vmatpush2.msra.mxu0 0.0
        %472 = vmatprep.subr.mxu0 0.0
        %473 = vmatpush2.msra.mxu0 0.0
        %474 = vmatprep.subr.mxu0 0.0
        %475 = vmatpush2.msra.mxu0 0.0
        %476 = vmatprep.subr.mxu0 0.0
        %477 = vmatpush2.msra.mxu0 0.0
        %478 = vmatprep.subr.mxu0 0.0
        %479 = vmatpush2.msra.mxu0 0.0
        %480 = vmatprep.subr.mxu0 0.0
        %481 = vmatpush2.msra.mxu0 0.0
        %482 = vmatprep.subr.mxu0 0.0
        %483 = vmatpush2.msra.mxu0 0.0
        %484 = vmatprep.subr.mxu0 0.0
        %485 = vmatpush2.msra.mxu0 0.0
        %486 = vmatprep.subr.mxu0 0.0
        %487 = vmatpush2.msra.mxu0 0.0
        %488 = vmatprep.mubr.f32.mxu0 0.0
        %v489 = vand.u32 %v187, 4294901760
        %v490 = vsub.f32 %v187, %v489
        %491 = vmatmul.mubr.f32.gmra.mxu0 %v490
        %v492 = vpop.f32.mrf.mxu0
        %v493 = vadd.f32 %v395, %v492
        %v494 = vpop.f32.mrf.mxu0
        %495 = vmatprep.mubr.f32.mxu0 0.0
        %v496 = vand.u32 %v190, 4294901760
        %v497 = vsub.f32 %v190, %v496
        %498 = vmatmul.mubr.f32.gmra.mxu0 %v497
        %v499 = vpop.f32.mrf.mxu0
        %v500 = vadd.f32 %v401, %v499
        %v501 = vpop.f32.mrf.mxu0
        %502 = vmatprep.mubr.f32.mxu0 0.0
        %v503 = vand.u32 %v193, 4294901760
        %v504 = vsub.f32 %v193, %v503
        %505 = vmatmul.mubr.f32.gmra.mxu0 %v504
        %v506 = vpop.f32.mrf.mxu0
        %v507 = vadd.f32 %v407, %v506
        %v508 = vpop.f32.mrf.mxu0
        %509 = vmatprep.mubr.f32.mxu0 0.0
        %v510 = vand.u32 %v196, 4294901760
        %v511 = vsub.f32 %v196, %v510
        %512 = vmatmul.mubr.f32.gmra.mxu0 %v511
        %v513 = vpop.f32.mrf.mxu0
        %v514 = vadd.f32 %v413, %v513
        %v515 = vpop.f32.mrf.mxu0
        %516 = vdwg.mxu0
        %517 = vmatprep.subr.mxu0 0.0
        %518 = vmatpush1.msra.mxu0 0.0
        %519 = vmatprep.subr.mxu0 0.0
        %520 = vmatpush1.msra.mxu0 0.0
        %521 = vmatprep.subr.mxu0 0.0
        %522 = vmatpush1.msra.mxu0 0.0
        %523 = vmatprep.subr.mxu0 0.0
        %524 = vmatpush1.msra.mxu0 0.0
        %525 = vmatprep.subr.mxu0 0.0
        %526 = vmatpush1.msra.mxu0 0.0
        %527 = vmatprep.subr.mxu0 0.0
        %528 = vmatpush1.msra.mxu0 0.0
        %529 = vmatprep.subr.mxu0 0.0
        %530 = vmatpush1.msra.mxu0 0.0
        %531 = vmatprep.subr.mxu0 0.0
        %532 = vmatpush1.msra.mxu0 0.0
        %533 = vmatprep.subr.mxu0 0.0
        %534 = vmatpush1.msra.mxu0 0.0
        %535 = vmatprep.subr.mxu0 0.0
        %536 = vmatpush1.msra.mxu0 0.0
        %537 = vmatprep.subr.mxu0 0.0
        %538 = vmatpush1.msra.mxu0 0.0
        %539 = vmatprep.subr.mxu0 0.0
        %540 = vmatpush1.msra.mxu0 0.0
        %541 = vmatprep.subr.mxu0 0.0
        %v542 = vand.u32 %v184, 4294901760
        %543 = vmatpush1.msra.mxu0 %v542
        %544 = vmatprep.subr.mxu0 0.0
        %v545 = vand.u32 %v183, 4294901760
        %546 = vmatpush1.msra.mxu0 %v545
        %547 = vmatprep.subr.mxu0 0.0
        %v548 = vand.u32 %v182, 4294901760
        %549 = vmatpush1.msra.mxu0 %v548
        %550 = vmatprep.subr.mxu0 0.0
        %v551 = vand.u32 %v181, 4294901760
        %552 = vmatpush1.msra.mxu0 %v551
        %553 = vmatprep.subr.mxu0 0.0
        %554 = vmatpush2.msra.mxu0 0.0
        %555 = vmatprep.subr.mxu0 0.0
        %556 = vmatpush2.msra.mxu0 0.0
        %557 = vmatprep.subr.mxu0 0.0
        %558 = vmatpush2.msra.mxu0 0.0
        %559 = vmatprep.subr.mxu0 0.0
        %560 = vmatpush2.msra.mxu0 0.0
        %561 = vmatprep.subr.mxu0 0.0
        %562 = vmatpush2.msra.mxu0 0.0
        %563 = vmatprep.subr.mxu0 0.0
        %564 = vmatpush2.msra.mxu0 0.0
        %565 = vmatprep.subr.mxu0 0.0
        %566 = vmatpush2.msra.mxu0 0.0
        %567 = vmatprep.subr.mxu0 0.0
        %568 = vmatpush2.msra.mxu0 0.0
        %569 = vmatprep.subr.mxu0 0.0
        %570 = vmatpush2.msra.mxu0 0.0
        %571 = vmatprep.subr.mxu0 0.0
        %572 = vmatpush2.msra.mxu0 0.0
        %573 = vmatprep.subr.mxu0 0.0
        %574 = vmatpush2.msra.mxu0 0.0
        %575 = vmatprep.subr.mxu0 0.0
        %576 = vmatpush2.msra.mxu0 0.0
        %577 = vmatprep.subr.mxu0 0.0
        %578 = vmatpush2.msra.mxu0 0.0
        %579 = vmatprep.subr.mxu0 0.0
        %580 = vmatpush2.msra.mxu0 0.0
        %581 = vmatprep.subr.mxu0 0.0
        %582 = vmatpush2.msra.mxu0 0.0
        %583 = vmatprep.subr.mxu0 0.0
        %584 = vmatpush2.msra.mxu0 0.0
        %585 = vmatprep.mubr.f32.mxu0 0.0
        %v586 = vand.u32 %v187, 4294901760
        %v587 = vsub.f32 %v187, %v586
        %v588 = vand.u32 %v587, 4294901760
        %589 = vmatmul.mubr.f32.gmra.mxu0 %v588
        %v590 = vpop.f32.mrf.mxu0
        %v591 = vadd.f32 %v493, %v590
        %v592 = vpop.f32.mrf.mxu0
        %593 = vmatprep.mubr.f32.mxu0 0.0
        %v594 = vand.u32 %v190, 4294901760
        %v595 = vsub.f32 %v190, %v594
        %v596 = vand.u32 %v595, 4294901760
        %597 = vmatmul.mubr.f32.gmra.mxu0 %v596
        %v598 = vpop.f32.mrf.mxu0
        %v599 = vadd.f32 %v500, %v598
        %v600 = vpop.f32.mrf.mxu0
        %601 = vmatprep.mubr.f32.mxu0 0.0
        %v602 = vand.u32 %v193, 4294901760
        %v603 = vsub.f32 %v193, %v602
        %v604 = vand.u32 %v603, 4294901760
        %605 = vmatmul.mubr.f32.gmra.mxu0 %v604
        %v606 = vpop.f32.mrf.mxu0
        %v607 = vadd.f32 %v507, %v606
        %v608 = vpop.f32.mrf.mxu0
        %609 = vmatprep.mubr.f32.mxu0 0.0
        %v610 = vand.u32 %v196, 4294901760
        %v611 = vsub.f32 %v196, %v610
        %v612 = vand.u32 %v611, 4294901760
        %613 = vmatmul.mubr.f32.gmra.mxu0 %v612
        %v614 = vpop.f32.mrf.mxu0
        %v615 = vadd.f32 %v514, %v614
        %v616 = vpop.f32.mrf.mxu0
        %617 = vdwg.mxu0
        %618 = vmatprep.subr.mxu0 0.0
        %619 = vmatpush1.msra.mxu0 0.0
        %620 = vmatprep.subr.mxu0 0.0
        %621 = vmatpush1.msra.mxu0 0.0
        %622 = vmatprep.subr.mxu0 0.0
        %623 = vmatpush1.msra.mxu0 0.0
        %624 = vmatprep.subr.mxu0 0.0
        %625 = vmatpush1.msra.mxu0 0.0
        %626 = vmatprep.subr.mxu0 0.0
        %627 = vmatpush1.msra.mxu0 0.0
        %628 = vmatprep.subr.mxu0 0.0
        %629 = vmatpush1.msra.mxu0 0.0
        %630 = vmatprep.subr.mxu0 0.0
        %631 = vmatpush1.msra.mxu0 0.0
        %632 = vmatprep.subr.mxu0 0.0
        %633 = vmatpush1.msra.mxu0 0.0
        %634 = vmatprep.subr.mxu0 0.0
        %635 = vmatpush1.msra.mxu0 0.0
        %636 = vmatprep.subr.mxu0 0.0
        %637 = vmatpush1.msra.mxu0 0.0
        %638 = vmatprep.subr.mxu0 0.0
        %639 = vmatpush1.msra.mxu0 0.0
        %640 = vmatprep.subr.mxu0 0.0
        %641 = vmatpush1.msra.mxu0 0.0
        %642 = vmatprep.subr.mxu0 0.0
        %v643 = vand.u32 %v184, 4294901760
        %v644 = vsub.f32 %v184, %v643
        %v645 = vand.u32 %v644, 4294901760
        %646 = vmatpush1.msra.mxu0 %v645
        %647 = vmatprep.subr.mxu0 0.0
        %v648 = vand.u32 %v183, 4294901760
        %v649 = vsub.f32 %v183, %v648
        %v650 = vand.u32 %v649, 4294901760
        %651 = vmatpush1.msra.mxu0 %v650
        %652 = vmatprep.subr.mxu0 0.0
        %v653 = vand.u32 %v182, 4294901760
        %v654 = vsub.f32 %v182, %v653
        %v655 = vand.u32 %v654, 4294901760
        %656 = vmatpush1.msra.mxu0 %v655
        %657 = vmatprep.subr.mxu0 0.0
        %v658 = vand.u32 %v181, 4294901760
        %v659 = vsub.f32 %v181, %v658
        %v660 = vand.u32 %v659, 4294901760
        %661 = vmatpush1.msra.mxu0 %v660
        %662 = vmatprep.subr.mxu0 0.0
        %663 = vmatpush2.msra.mxu0 0.0
        %664 = vmatprep.subr.mxu0 0.0
        %665 = vmatpush2.msra.mxu0 0.0
        %666 = vmatprep.subr.mxu0 0.0
        %667 = vmatpush2.msra.mxu0 0.0
        %668 = vmatprep.subr.mxu0 0.0
        %669 = vmatpush2.msra.mxu0 0.0
        %670 = vmatprep.subr.mxu0 0.0
        %671 = vmatpush2.msra.mxu0 0.0
        %672 = vmatprep.subr.mxu0 0.0
        %673 = vmatpush2.msra.mxu0 0.0
        %674 = vmatprep.subr.mxu0 0.0
        %675 = vmatpush2.msra.mxu0 0.0
        %676 = vmatprep.subr.mxu0 0.0
        %677 = vmatpush2.msra.mxu0 0.0
        %678 = vmatprep.subr.mxu0 0.0
        %679 = vmatpush2.msra.mxu0 0.0
        %680 = vmatprep.subr.mxu0 0.0
        %681 = vmatpush2.msra.mxu0 0.0
        %682 = vmatprep.subr.mxu0 0.0
        %683 = vmatpush2.msra.mxu0 0.0
        %684 = vmatprep.subr.mxu0 0.0
        %685 = vmatpush2.msra.mxu0 0.0
        %686 = vmatprep.subr.mxu0 0.0
        %687 = vmatpush2.msra.mxu0 0.0
        %688 = vmatprep.subr.mxu0 0.0
        %689 = vmatpush2.msra.mxu0 0.0
        %690 = vmatprep.subr.mxu0 0.0
        %691 = vmatpush2.msra.mxu0 0.0
        %692 = vmatprep.subr.mxu0 0.0
        %693 = vmatpush2.msra.mxu0 0.0
        %694 = vmatprep.mubr.f32.mxu0 0.0
        %v695 = vand.u32 %v187, 4294901760
        %696 = vmatmul.mubr.f32.gmra.mxu0 %v695
        %v697 = vpop.f32.mrf.mxu0
        %v698 = vadd.f32 %v591, %v697
        %v699 = vpop.f32.mrf.mxu0
        %700 = vmatprep.mubr.f32.mxu0 0.0
        %v701 = vand.u32 %v190, 4294901760
        %702 = vmatmul.mubr.f32.gmra.mxu0 %v701
        %v703 = vpop.f32.mrf.mxu0
        %v704 = vadd.f32 %v599, %v703
        %v705 = vpop.f32.mrf.mxu0
        %706 = vmatprep.mubr.f32.mxu0 0.0
        %v707 = vand.u32 %v193, 4294901760
        %708 = vmatmul.mubr.f32.gmra.mxu0 %v707
        %v709 = vpop.f32.mrf.mxu0
        %v710 = vadd.f32 %v607, %v709
        %v711 = vpop.f32.mrf.mxu0
        %712 = vmatprep.mubr.f32.mxu0 0.0
        %v713 = vand.u32 %v196, 4294901760
        %714 = vmatmul.mubr.f32.gmra.mxu0 %v713
        %v715 = vpop.f32.mrf.mxu0
        %v716 = vadd.f32 %v615, %v715
        %v717 = vpop.f32.mrf.mxu0
        %718 = vdwg.mxu0
        %719 = vmatprep.subr.mxu0 0.0
        %720 = vmatpush1.msra.mxu0 0.0
        %721 = vmatprep.subr.mxu0 0.0
        %722 = vmatpush1.msra.mxu0 0.0
        %723 = vmatprep.subr.mxu0 0.0
        %724 = vmatpush1.msra.mxu0 0.0
        %725 = vmatprep.subr.mxu0 0.0
        %726 = vmatpush1.msra.mxu0 0.0
        %727 = vmatprep.subr.mxu0 0.0
        %728 = vmatpush1.msra.mxu0 0.0
        %729 = vmatprep.subr.mxu0 0.0
        %730 = vmatpush1.msra.mxu0 0.0
        %731 = vmatprep.subr.mxu0 0.0
        %732 = vmatpush1.msra.mxu0 0.0
        %733 = vmatprep.subr.mxu0 0.0
        %734 = vmatpush1.msra.mxu0 0.0
        %735 = vmatprep.subr.mxu0 0.0
        %736 = vmatpush1.msra.mxu0 0.0
        %737 = vmatprep.subr.mxu0 0.0
        %738 = vmatpush1.msra.mxu0 0.0
        %739 = vmatprep.subr.mxu0 0.0
        %740 = vmatpush1.msra.mxu0 0.0
        %741 = vmatprep.subr.mxu0 0.0
        %742 = vmatpush1.msra.mxu0 0.0
        %743 = vmatprep.subr.mxu0 0.0
        %v744 = vand.u32 %v184, 4294901760
        %745 = vmatpush1.msra.mxu0 %v744
        %746 = vmatprep.subr.mxu0 0.0
        %v747 = vand.u32 %v183, 4294901760
        %748 = vmatpush1.msra.mxu0 %v747
        %749 = vmatprep.subr.mxu0 0.0
        %v750 = vand.u32 %v182, 4294901760
        %751 = vmatpush1.msra.mxu0 %v750
        %752 = vmatprep.subr.mxu0 0.0
        %v753 = vand.u32 %v181, 4294901760
        %754 = vmatpush1.msra.mxu0 %v753
        %755 = vmatprep.subr.mxu0 0.0
        %756 = vmatpush2.msra.mxu0 0.0
        %757 = vmatprep.subr.mxu0 0.0
        %758 = vmatpush2.msra.mxu0 0.0
        %759 = vmatprep.subr.mxu0 0.0
        %760 = vmatpush2.msra.mxu0 0.0
        %761 = vmatprep.subr.mxu0 0.0
        %762 = vmatpush2.msra.mxu0 0.0
        %763 = vmatprep.subr.mxu0 0.0
        %764 = vmatpush2.msra.mxu0 0.0
        %765 = vmatprep.subr.mxu0 0.0
        %766 = vmatpush2.msra.mxu0 0.0
        %767 = vmatprep.subr.mxu0 0.0
        %768 = vmatpush2.msra.mxu0 0.0
        %769 = vmatprep.subr.mxu0 0.0
        %770 = vmatpush2.msra.mxu0 0.0
        %771 = vmatprep.subr.mxu0 0.0
        %772 = vmatpush2.msra.mxu0 0.0
        %773 = vmatprep.subr.mxu0 0.0
        %774 = vmatpush2.msra.mxu0 0.0
        %775 = vmatprep.subr.mxu0 0.0
        %776 = vmatpush2.msra.mxu0 0.0
        %777 = vmatprep.subr.mxu0 0.0
        %778 = vmatpush2.msra.mxu0 0.0
        %779 = vmatprep.subr.mxu0 0.0
        %780 = vmatpush2.msra.mxu0 0.0
        %781 = vmatprep.subr.mxu0 0.0
        %782 = vmatpush2.msra.mxu0 0.0
        %783 = vmatprep.subr.mxu0 0.0
        %784 = vmatpush2.msra.mxu0 0.0
        %785 = vmatprep.subr.mxu0 0.0
        %786 = vmatpush2.msra.mxu0 0.0
        %787 = vmatprep.mubr.f32.mxu0 0.0
        %v788 = vand.u32 %v187, 4294901760
        %789 = vmatmul.mubr.f32.gmra.mxu0 %v788
        %v790 = vpop.f32.mrf.mxu0
        %v791 = vadd.f32 %v698, %v790
        %v792 = vpop.f32.mrf.mxu0
        %793 = vmatprep.mubr.f32.mxu0 0.0
        %v794 = vand.u32 %v190, 4294901760
        %795 = vmatmul.mubr.f32.gmra.mxu0 %v794
        %v796 = vpop.f32.mrf.mxu0
        %v797 = vadd.f32 %v704, %v796
        %v798 = vpop.f32.mrf.mxu0
        %799 = vmatprep.mubr.f32.mxu0 0.0
        %v800 = vand.u32 %v193, 4294901760
        %801 = vmatmul.mubr.f32.gmra.mxu0 %v800
        %v802 = vpop.f32.mrf.mxu0
        %v803 = vadd.f32 %v710, %v802
        %v804 = vpop.f32.mrf.mxu0
        %805 = vmatprep.mubr.f32.mxu0 0.0
        %v806 = vand.u32 %v196, 4294901760
        %807 = vmatmul.mubr.f32.gmra.mxu0 %v806
        %v808 = vpop.f32.mrf.mxu0
        %v809 = vadd.f32 %v716, %v808
        %v810 = vpop.f32.mrf.mxu0
        %811 = vdwg.mxu0
        %v812 = vlaneseq
        %v813 = vshrl.u32 %v812, 7
        %v814 = vlaneseq
        %v815 = vand.u32 %v814, 127
        %v816 = vmul.u32 %v813, 8
        %vm817 = vcmp.ge.s32.totalorder %v815, %v816
        %v818 = vadd.s32 %v816, 8
        %vm819 = vcmp.lt.s32.totalorder %v815, %v818
        %vm820 = vmand %vm817, %vm819
        %v821 = vsel %vm820, 0.0, -1e+30
        %vm822 = vcmask 257024
        %v823 = vsel %vm822, %v821, -inf
        %824 = vmax.xlane.f32.xlu0 %v823
        %v825 = vpop.xlane.xlu0 %824
        %v826 = vsub.f32 %v821, %v825
        %v827 = vmul.f32 %v826, 1.442695
        %v828 = vpow.pop %v827
        %v829 = vsel %vm822, %v828, 0.0
        %830 = vadd.xlane.f32.xlu0 %v829
        %v831 = vpop.xlane.xlu0 %830
        %v832 = vrcp.pop %v831
        %v833 = vmul.f32 %v828, %v832
        %v835 = vsel %vm185, %v833, 0
        %837 = vmatprep.subr.mxu0 0.0
        %838 = vmatpush1.msra.mxu0 0.0
        %839 = vmatprep.subr.mxu0 0.0
        %840 = vmatpush1.msra.mxu0 0.0
        %841 = vmatprep.subr.mxu0 0.0
        %842 = vmatpush1.msra.mxu0 0.0
        %843 = vmatprep.subr.mxu0 0.0
        %844 = vmatpush1.msra.mxu0 0.0
        %845 = vmatprep.subr.mxu0 0.0
        %846 = vmatpush1.msra.mxu0 0.0
        %847 = vmatprep.subr.mxu0 0.0
        %848 = vmatpush1.msra.mxu0 0.0
        %849 = vmatprep.subr.mxu0 0.0
        %850 = vmatpush1.msra.mxu0 0.0
        %851 = vmatprep.subr.mxu0 0.0
        %852 = vmatpush1.msra.mxu0 0.0
        %853 = vmatprep.subr.mxu0 0.0
        %854 = vmatpush1.msra.mxu0 0.0
        %855 = vmatprep.subr.mxu0 0.0
        %856 = vmatpush1.msra.mxu0 0.0
        %857 = vmatprep.subr.mxu0 0.0
        %858 = vmatpush1.msra.mxu0 0.0
        %859 = vmatprep.subr.mxu0 0.0
        %860 = vmatpush1.msra.mxu0 0.0
        %861 = vmatprep.subr.mxu0 0.0
        %v862 = vand.u32 %v809, 4294901760
        %863 = vmatpush1.msra.mxu0 %v862
        %864 = vmatprep.subr.mxu0 0.0
        %v865 = vand.u32 %v803, 4294901760
        %866 = vmatpush1.msra.mxu0 %v865
        %867 = vmatprep.subr.mxu0 0.0
        %v868 = vand.u32 %v797, 4294901760
        %869 = vmatpush1.msra.mxu0 %v868
        %870 = vmatprep.subr.mxu0 0.0
        %v871 = vand.u32 %v791, 4294901760
        %872 = vmatpush1.msra.mxu0 %v871
        %873 = vmatprep.subr.mxu0 0.0
        %874 = vmatpush2.msra.mxu0 0.0
        %875 = vmatprep.subr.mxu0 0.0
        %876 = vmatpush2.msra.mxu0 0.0
        %877 = vmatprep.subr.mxu0 0.0
        %878 = vmatpush2.msra.mxu0 0.0
        %879 = vmatprep.subr.mxu0 0.0
        %880 = vmatpush2.msra.mxu0 0.0
        %881 = vmatprep.subr.mxu0 0.0
        %882 = vmatpush2.msra.mxu0 0.0
        %883 = vmatprep.subr.mxu0 0.0
        %884 = vmatpush2.msra.mxu0 0.0
        %885 = vmatprep.subr.mxu0 0.0
        %886 = vmatpush2.msra.mxu0 0.0
        %887 = vmatprep.subr.mxu0 0.0
        %888 = vmatpush2.msra.mxu0 0.0
        %889 = vmatprep.subr.mxu0 0.0
        %890 = vmatpush2.msra.mxu0 0.0
        %891 = vmatprep.subr.mxu0 0.0
        %892 = vmatpush2.msra.mxu0 0.0
        %893 = vmatprep.subr.mxu0 0.0
        %894 = vmatpush2.msra.mxu0 0.0
        %895 = vmatprep.subr.mxu0 0.0
        %896 = vmatpush2.msra.mxu0 0.0
        %897 = vmatprep.subr.mxu0 0.0
        %898 = vmatpush2.msra.mxu0 0.0
        %899 = vmatprep.subr.mxu0 0.0
        %900 = vmatpush2.msra.mxu0 0.0
        %901 = vmatprep.subr.mxu0 0.0
        %902 = vmatpush2.msra.mxu0 0.0
        %903 = vmatprep.subr.mxu0 0.0
        %904 = vmatpush2.msra.mxu0 0.0
        %905 = vmatprep.mubr.f32.mxu0 0.0
        %v906 = vand.u32 %v835, 4294901760
        %v907 = vsub.f32 %v835, %v906
        %v908 = vand.u32 %v907, 4294901760
        %v909 = vsub.f32 %v907, %v908
        %v910 = vand.u32 %v909, 4294901760
        %911 = vmatmul.mubr.f32.gmra.mxu0 %v910
        %v912 = vpop.f32.mrf.mxu0
        %v913 = vadd.f32 0.0, %v912
        %v914 = vpop.f32.mrf.mxu0
        %915 = vdwg.mxu0
        %916 = vmatprep.subr.mxu0 0.0
        %917 = vmatpush1.msra.mxu0 0.0
        %918 = vmatprep.subr.mxu0 0.0
        %919 = vmatpush1.msra.mxu0 0.0
        %920 = vmatprep.subr.mxu0 0.0
        %921 = vmatpush1.msra.mxu0 0.0
        %922 = vmatprep.subr.mxu0 0.0
        %923 = vmatpush1.msra.mxu0 0.0
        %924 = vmatprep.subr.mxu0 0.0
        %925 = vmatpush1.msra.mxu0 0.0
        %926 = vmatprep.subr.mxu0 0.0
        %927 = vmatpush1.msra.mxu0 0.0
        %928 = vmatprep.subr.mxu0 0.0
        %929 = vmatpush1.msra.mxu0 0.0
        %930 = vmatprep.subr.mxu0 0.0
        %931 = vmatpush1.msra.mxu0 0.0
        %932 = vmatprep.subr.mxu0 0.0
        %933 = vmatpush1.msra.mxu0 0.0
        %934 = vmatprep.subr.mxu0 0.0
        %935 = vmatpush1.msra.mxu0 0.0
        %936 = vmatprep.subr.mxu0 0.0
        %937 = vmatpush1.msra.mxu0 0.0
        %938 = vmatprep.subr.mxu0 0.0
        %939 = vmatpush1.msra.mxu0 0.0
        %940 = vmatprep.subr.mxu0 0.0
        %v941 = vand.u32 %v809, 4294901760
        %v942 = vsub.f32 %v809, %v941
        %v943 = vand.u32 %v942, 4294901760
        %v944 = vsub.f32 %v942, %v943
        %v945 = vand.u32 %v944, 4294901760
        %946 = vmatpush1.msra.mxu0 %v945
        %947 = vmatprep.subr.mxu0 0.0
        %v948 = vand.u32 %v803, 4294901760
        %v949 = vsub.f32 %v803, %v948
        %v950 = vand.u32 %v949, 4294901760
        %v951 = vsub.f32 %v949, %v950
        %v952 = vand.u32 %v951, 4294901760
        %953 = vmatpush1.msra.mxu0 %v952
        %954 = vmatprep.subr.mxu0 0.0
        %v955 = vand.u32 %v797, 4294901760
        %v956 = vsub.f32 %v797, %v955
        %v957 = vand.u32 %v956, 4294901760
        %v958 = vsub.f32 %v956, %v957
        %v959 = vand.u32 %v958, 4294901760
        %960 = vmatpush1.msra.mxu0 %v959
        %961 = vmatprep.subr.mxu0 0.0
        %v962 = vand.u32 %v791, 4294901760
        %v963 = vsub.f32 %v791, %v962
        %v964 = vand.u32 %v963, 4294901760
        %v965 = vsub.f32 %v963, %v964
        %v966 = vand.u32 %v965, 4294901760
        %967 = vmatpush1.msra.mxu0 %v966
        %968 = vmatprep.subr.mxu0 0.0
        %969 = vmatpush2.msra.mxu0 0.0
        %970 = vmatprep.subr.mxu0 0.0
        %971 = vmatpush2.msra.mxu0 0.0
        %972 = vmatprep.subr.mxu0 0.0
        %973 = vmatpush2.msra.mxu0 0.0
        %974 = vmatprep.subr.mxu0 0.0
        %975 = vmatpush2.msra.mxu0 0.0
        %976 = vmatprep.subr.mxu0 0.0
        %977 = vmatpush2.msra.mxu0 0.0
        %978 = vmatprep.subr.mxu0 0.0
        %979 = vmatpush2.msra.mxu0 0.0
        %980 = vmatprep.subr.mxu0 0.0
        %981 = vmatpush2.msra.mxu0 0.0
        %982 = vmatprep.subr.mxu0 0.0
        %983 = vmatpush2.msra.mxu0 0.0
        %984 = vmatprep.subr.mxu0 0.0
        %985 = vmatpush2.msra.mxu0 0.0
        %986 = vmatprep.subr.mxu0 0.0
        %987 = vmatpush2.msra.mxu0 0.0
        %988 = vmatprep.subr.mxu0 0.0
        %989 = vmatpush2.msra.mxu0 0.0
        %990 = vmatprep.subr.mxu0 0.0
        %991 = vmatpush2.msra.mxu0 0.0
        %992 = vmatprep.subr.mxu0 0.0
        %993 = vmatpush2.msra.mxu0 0.0
        %994 = vmatprep.subr.mxu0 0.0
        %995 = vmatpush2.msra.mxu0 0.0
        %996 = vmatprep.subr.mxu0 0.0
        %997 = vmatpush2.msra.mxu0 0.0
        %998 = vmatprep.subr.mxu0 0.0
        %999 = vmatpush2.msra.mxu0 0.0
        %1000 = vmatprep.mubr.f32.mxu0 0.0
        %v1001 = vand.u32 %v835, 4294901760
        %1002 = vmatmul.mubr.f32.gmra.mxu0 %v1001
        %v1003 = vpop.f32.mrf.mxu0
        %v1004 = vadd.f32 %v913, %v1003
        %v1005 = vpop.f32.mrf.mxu0
        %1006 = vdwg.mxu0
        %1007 = vmatprep.subr.mxu0 0.0
        %1008 = vmatpush1.msra.mxu0 0.0
        %1009 = vmatprep.subr.mxu0 0.0
        %1010 = vmatpush1.msra.mxu0 0.0
        %1011 = vmatprep.subr.mxu0 0.0
        %1012 = vmatpush1.msra.mxu0 0.0
        %1013 = vmatprep.subr.mxu0 0.0
        %1014 = vmatpush1.msra.mxu0 0.0
        %1015 = vmatprep.subr.mxu0 0.0
        %1016 = vmatpush1.msra.mxu0 0.0
        %1017 = vmatprep.subr.mxu0 0.0
        %1018 = vmatpush1.msra.mxu0 0.0
        %1019 = vmatprep.subr.mxu0 0.0
        %1020 = vmatpush1.msra.mxu0 0.0
        %1021 = vmatprep.subr.mxu0 0.0
        %1022 = vmatpush1.msra.mxu0 0.0
        %1023 = vmatprep.subr.mxu0 0.0
        %1024 = vmatpush1.msra.mxu0 0.0
        %1025 = vmatprep.subr.mxu0 0.0
        %1026 = vmatpush1.msra.mxu0 0.0
        %1027 = vmatprep.subr.mxu0 0.0
        %1028 = vmatpush1.msra.mxu0 0.0
        %1029 = vmatprep.subr.mxu0 0.0
        %1030 = vmatpush1.msra.mxu0 0.0
        %1031 = vmatprep.subr.mxu0 0.0
        %v1032 = vand.u32 %v809, 4294901760
        %v1033 = vsub.f32 %v809, %v1032
        %1034 = vmatpush1.msra.mxu0 %v1033
        %1035 = vmatprep.subr.mxu0 0.0
        %v1036 = vand.u32 %v803, 4294901760
        %v1037 = vsub.f32 %v803, %v1036
        %1038 = vmatpush1.msra.mxu0 %v1037
        %1039 = vmatprep.subr.mxu0 0.0
        %v1040 = vand.u32 %v797, 4294901760
        %v1041 = vsub.f32 %v797, %v1040
        %1042 = vmatpush1.msra.mxu0 %v1041
        %1043 = vmatprep.subr.mxu0 0.0
        %v1044 = vand.u32 %v791, 4294901760
        %v1045 = vsub.f32 %v791, %v1044
        %1046 = vmatpush1.msra.mxu0 %v1045
        %1047 = vmatprep.subr.mxu0 0.0
        %1048 = vmatpush2.msra.mxu0 0.0
        %1049 = vmatprep.subr.mxu0 0.0
        %1050 = vmatpush2.msra.mxu0 0.0
        %1051 = vmatprep.subr.mxu0 0.0
        %1052 = vmatpush2.msra.mxu0 0.0
        %1053 = vmatprep.subr.mxu0 0.0
        %1054 = vmatpush2.msra.mxu0 0.0
        %1055 = vmatprep.subr.mxu0 0.0
        %1056 = vmatpush2.msra.mxu0 0.0
        %1057 = vmatprep.subr.mxu0 0.0
        %1058 = vmatpush2.msra.mxu0 0.0
        %1059 = vmatprep.subr.mxu0 0.0
        %1060 = vmatpush2.msra.mxu0 0.0
        %1061 = vmatprep.subr.mxu0 0.0
        %1062 = vmatpush2.msra.mxu0 0.0
        %1063 = vmatprep.subr.mxu0 0.0
        %1064 = vmatpush2.msra.mxu0 0.0
        %1065 = vmatprep.subr.mxu0 0.0
        %1066 = vmatpush2.msra.mxu0 0.0
        %1067 = vmatprep.subr.mxu0 0.0
        %1068 = vmatpush2.msra.mxu0 0.0
        %1069 = vmatprep.subr.mxu0 0.0
        %1070 = vmatpush2.msra.mxu0 0.0
        %1071 = vmatprep.subr.mxu0 0.0
        %1072 = vmatpush2.msra.mxu0 0.0
        %1073 = vmatprep.subr.mxu0 0.0
        %1074 = vmatpush2.msra.mxu0 0.0
        %1075 = vmatprep.subr.mxu0 0.0
        %1076 = vmatpush2.msra.mxu0 0.0
        %1077 = vmatprep.subr.mxu0 0.0
        %1078 = vmatpush2.msra.mxu0 0.0
        %1079 = vmatprep.mubr.f32.mxu0 0.0
        %v1080 = vand.u32 %v835, 4294901760
        %v1081 = vsub.f32 %v835, %v1080
        %1082 = vmatmul.mubr.f32.gmra.mxu0 %v1081
        %v1083 = vpop.f32.mrf.mxu0
        %v1084 = vadd.f32 %v1004, %v1083
        %v1085 = vpop.f32.mrf.mxu0
        %1086 = vdwg.mxu0
        %1087 = vmatprep.subr.mxu0 0.0
        %1088 = vmatpush1.msra.mxu0 0.0
        %1089 = vmatprep.subr.mxu0 0.0
        %1090 = vmatpush1.msra.mxu0 0.0
        %1091 = vmatprep.subr.mxu0 0.0
        %1092 = vmatpush1.msra.mxu0 0.0
        %1093 = vmatprep.subr.mxu0 0.0
        %1094 = vmatpush1.msra.mxu0 0.0
        %1095 = vmatprep.subr.mxu0 0.0
        %1096 = vmatpush1.msra.mxu0 0.0
        %1097 = vmatprep.subr.mxu0 0.0
        %1098 = vmatpush1.msra.mxu0 0.0
        %1099 = vmatprep.subr.mxu0 0.0
        %1100 = vmatpush1.msra.mxu0 0.0
        %1101 = vmatprep.subr.mxu0 0.0
        %1102 = vmatpush1.msra.mxu0 0.0
        %1103 = vmatprep.subr.mxu0 0.0
        %1104 = vmatpush1.msra.mxu0 0.0
        %1105 = vmatprep.subr.mxu0 0.0
        %1106 = vmatpush1.msra.mxu0 0.0
        %1107 = vmatprep.subr.mxu0 0.0
        %1108 = vmatpush1.msra.mxu0 0.0
        %1109 = vmatprep.subr.mxu0 0.0
        %1110 = vmatpush1.msra.mxu0 0.0
        %1111 = vmatprep.subr.mxu0 0.0
        %v1112 = vand.u32 %v809, 4294901760
        %1113 = vmatpush1.msra.mxu0 %v1112
        %1114 = vmatprep.subr.mxu0 0.0
        %v1115 = vand.u32 %v803, 4294901760
        %1116 = vmatpush1.msra.mxu0 %v1115
        %1117 = vmatprep.subr.mxu0 0.0
        %v1118 = vand.u32 %v797, 4294901760
        %1119 = vmatpush1.msra.mxu0 %v1118
        %1120 = vmatprep.subr.mxu0 0.0
        %v1121 = vand.u32 %v791, 4294901760
        %1122 = vmatpush1.msra.mxu0 %v1121
        %1123 = vmatprep.subr.mxu0 0.0
        %1124 = vmatpush2.msra.mxu0 0.0
        %1125 = vmatprep.subr.mxu0 0.0
        %1126 = vmatpush2.msra.mxu0 0.0
        %1127 = vmatprep.subr.mxu0 0.0
        %1128 = vmatpush2.msra.mxu0 0.0
        %1129 = vmatprep.subr.mxu0 0.0
        %1130 = vmatpush2.msra.mxu0 0.0
        %1131 = vmatprep.subr.mxu0 0.0
        %1132 = vmatpush2.msra.mxu0 0.0
        %1133 = vmatprep.subr.mxu0 0.0
        %1134 = vmatpush2.msra.mxu0 0.0
        %1135 = vmatprep.subr.mxu0 0.0
        %1136 = vmatpush2.msra.mxu0 0.0
        %1137 = vmatprep.subr.mxu0 0.0
        %1138 = vmatpush2.msra.mxu0 0.0
        %1139 = vmatprep.subr.mxu0 0.0
        %1140 = vmatpush2.msra.mxu0 0.0
        %1141 = vmatprep.subr.mxu0 0.0
        %1142 = vmatpush2.msra.mxu0 0.0
        %1143 = vmatprep.subr.mxu0 0.0
        %1144 = vmatpush2.msra.mxu0 0.0
        %1145 = vmatprep.subr.mxu0 0.0
        %1146 = vmatpush2.msra.mxu0 0.0
        %1147 = vmatprep.subr.mxu0 0.0
        %1148 = vmatpush2.msra.mxu0 0.0
        %1149 = vmatprep.subr.mxu0 0.0
        %1150 = vmatpush2.msra.mxu0 0.0
        %1151 = vmatprep.subr.mxu0 0.0
        %1152 = vmatpush2.msra.mxu0 0.0
        %1153 = vmatprep.subr.mxu0 0.0
        %1154 = vmatpush2.msra.mxu0 0.0
        %1155 = vmatprep.mubr.f32.mxu0 0.0
        %v1156 = vand.u32 %v835, 4294901760
        %v1157 = vsub.f32 %v835, %v1156
        %v1158 = vand.u32 %v1157, 4294901760
        %1159 = vmatmul.mubr.f32.gmra.mxu0 %v1158
        %v1160 = vpop.f32.mrf.mxu0
        %v1161 = vadd.f32 %v1084, %v1160
        %v1162 = vpop.f32.mrf.mxu0
        %1163 = vdwg.mxu0
        %1164 = vmatprep.subr.mxu0 0.0
        %1165 = vmatpush1.msra.mxu0 0.0
        %1166 = vmatprep.subr.mxu0 0.0
        %1167 = vmatpush1.msra.mxu0 0.0
        %1168 = vmatprep.subr.mxu0 0.0
        %1169 = vmatpush1.msra.mxu0 0.0
        %1170 = vmatprep.subr.mxu0 0.0
        %1171 = vmatpush1.msra.mxu0 0.0
        %1172 = vmatprep.subr.mxu0 0.0
        %1173 = vmatpush1.msra.mxu0 0.0
        %1174 = vmatprep.subr.mxu0 0.0
        %1175 = vmatpush1.msra.mxu0 0.0
        %1176 = vmatprep.subr.mxu0 0.0
        %1177 = vmatpush1.msra.mxu0 0.0
        %1178 = vmatprep.subr.mxu0 0.0
        %1179 = vmatpush1.msra.mxu0 0.0
        %1180 = vmatprep.subr.mxu0 0.0
        %1181 = vmatpush1.msra.mxu0 0.0
        %1182 = vmatprep.subr.mxu0 0.0
        %1183 = vmatpush1.msra.mxu0 0.0
        %1184 = vmatprep.subr.mxu0 0.0
        %1185 = vmatpush1.msra.mxu0 0.0
        %1186 = vmatprep.subr.mxu0 0.0
        %1187 = vmatpush1.msra.mxu0 0.0
        %1188 = vmatprep.subr.mxu0 0.0
        %v1189 = vand.u32 %v809, 4294901760
        %v1190 = vsub.f32 %v809, %v1189
        %v1191 = vand.u32 %v1190, 4294901760
        %1192 = vmatpush1.msra.mxu0 %v1191
        %1193 = vmatprep.subr.mxu0 0.0
        %v1194 = vand.u32 %v803, 4294901760
        %v1195 = vsub.f32 %v803, %v1194
        %v1196 = vand.u32 %v1195, 4294901760
        %1197 = vmatpush1.msra.mxu0 %v1196
        %1198 = vmatprep.subr.mxu0 0.0
        %v1199 = vand.u32 %v797, 4294901760
        %v1200 = vsub.f32 %v797, %v1199
        %v1201 = vand.u32 %v1200, 4294901760
        %1202 = vmatpush1.msra.mxu0 %v1201
        %1203 = vmatprep.subr.mxu0 0.0
        %v1204 = vand.u32 %v791, 4294901760
        %v1205 = vsub.f32 %v791, %v1204
        %v1206 = vand.u32 %v1205, 4294901760
        %1207 = vmatpush1.msra.mxu0 %v1206
        %1208 = vmatprep.subr.mxu0 0.0
        %1209 = vmatpush2.msra.mxu0 0.0
        %1210 = vmatprep.subr.mxu0 0.0
        %1211 = vmatpush2.msra.mxu0 0.0
        %1212 = vmatprep.subr.mxu0 0.0
        %1213 = vmatpush2.msra.mxu0 0.0
        %1214 = vmatprep.subr.mxu0 0.0
        %1215 = vmatpush2.msra.mxu0 0.0
        %1216 = vmatprep.subr.mxu0 0.0
        %1217 = vmatpush2.msra.mxu0 0.0
        %1218 = vmatprep.subr.mxu0 0.0
        %1219 = vmatpush2.msra.mxu0 0.0
        %1220 = vmatprep.subr.mxu0 0.0
        %1221 = vmatpush2.msra.mxu0 0.0
        %1222 = vmatprep.subr.mxu0 0.0
        %1223 = vmatpush2.msra.mxu0 0.0
        %1224 = vmatprep.subr.mxu0 0.0
        %1225 = vmatpush2.msra.mxu0 0.0
        %1226 = vmatprep.subr.mxu0 0.0
        %1227 = vmatpush2.msra.mxu0 0.0
        %1228 = vmatprep.subr.mxu0 0.0
        %1229 = vmatpush2.msra.mxu0 0.0
        %1230 = vmatprep.subr.mxu0 0.0
        %1231 = vmatpush2.msra.mxu0 0.0
        %1232 = vmatprep.subr.mxu0 0.0
        %1233 = vmatpush2.msra.mxu0 0.0
        %1234 = vmatprep.subr.mxu0 0.0
        %1235 = vmatpush2.msra.mxu0 0.0
        %1236 = vmatprep.subr.mxu0 0.0
        %1237 = vmatpush2.msra.mxu0 0.0
        %1238 = vmatprep.subr.mxu0 0.0
        %1239 = vmatpush2.msra.mxu0 0.0
        %1240 = vmatprep.mubr.f32.mxu0 0.0
        %v1241 = vand.u32 %v835, 4294901760
        %1242 = vmatmul.mubr.f32.gmra.mxu0 %v1241
        %v1243 = vpop.f32.mrf.mxu0
        %v1244 = vadd.f32 %v1161, %v1243
        %v1245 = vpop.f32.mrf.mxu0
        %1246 = vdwg.mxu0
        %1247 = vmatprep.subr.mxu0 0.0
        %1248 = vmatpush1.msra.mxu0 0.0
        %1249 = vmatprep.subr.mxu0 0.0
        %1250 = vmatpush1.msra.mxu0 0.0
        %1251 = vmatprep.subr.mxu0 0.0
        %1252 = vmatpush1.msra.mxu0 0.0
        %1253 = vmatprep.subr.mxu0 0.0
        %1254 = vmatpush1.msra.mxu0 0.0
        %1255 = vmatprep.subr.mxu0 0.0
        %1256 = vmatpush1.msra.mxu0 0.0
        %1257 = vmatprep.subr.mxu0 0.0
        %1258 = vmatpush1.msra.mxu0 0.0
        %1259 = vmatprep.subr.mxu0 0.0
        %1260 = vmatpush1.msra.mxu0 0.0
        %1261 = vmatprep.subr.mxu0 0.0
        %1262 = vmatpush1.msra.mxu0 0.0
        %1263 = vmatprep.subr.mxu0 0.0
        %1264 = vmatpush1.msra.mxu0 0.0
        %1265 = vmatprep.subr.mxu0 0.0
        %1266 = vmatpush1.msra.mxu0 0.0
        %1267 = vmatprep.subr.mxu0 0.0
        %1268 = vmatpush1.msra.mxu0 0.0
        %1269 = vmatprep.subr.mxu0 0.0
        %1270 = vmatpush1.msra.mxu0 0.0
        %1271 = vmatprep.subr.mxu0 0.0
        %v1272 = vand.u32 %v809, 4294901760
        %1273 = vmatpush1.msra.mxu0 %v1272
        %1274 = vmatprep.subr.mxu0 0.0
        %v1275 = vand.u32 %v803, 4294901760
        %1276 = vmatpush1.msra.mxu0 %v1275
        %1277 = vmatprep.subr.mxu0 0.0
        %v1278 = vand.u32 %v797, 4294901760
        %1279 = vmatpush1.msra.mxu0 %v1278
        %1280 = vmatprep.subr.mxu0 0.0
        %v1281 = vand.u32 %v791, 4294901760
        %1282 = vmatpush1.msra.mxu0 %v1281
        %1283 = vmatprep.subr.mxu0 0.0
        %1284 = vmatpush2.msra.mxu0 0.0
        %1285 = vmatprep.subr.mxu0 0.0
        %1286 = vmatpush2.msra.mxu0 0.0
        %1287 = vmatprep.subr.mxu0 0.0
        %1288 = vmatpush2.msra.mxu0 0.0
        %1289 = vmatprep.subr.mxu0 0.0
        %1290 = vmatpush2.msra.mxu0 0.0
        %1291 = vmatprep.subr.mxu0 0.0
        %1292 = vmatpush2.msra.mxu0 0.0
        %1293 = vmatprep.subr.mxu0 0.0
        %1294 = vmatpush2.msra.mxu0 0.0
        %1295 = vmatprep.subr.mxu0 0.0
        %1296 = vmatpush2.msra.mxu0 0.0
        %1297 = vmatprep.subr.mxu0 0.0
        %1298 = vmatpush2.msra.mxu0 0.0
        %1299 = vmatprep.subr.mxu0 0.0
        %1300 = vmatpush2.msra.mxu0 0.0
        %1301 = vmatprep.subr.mxu0 0.0
        %1302 = vmatpush2.msra.mxu0 0.0
        %1303 = vmatprep.subr.mxu0 0.0
        %1304 = vmatpush2.msra.mxu0 0.0
        %1305 = vmatprep.subr.mxu0 0.0
        %1306 = vmatpush2.msra.mxu0 0.0
        %1307 = vmatprep.subr.mxu0 0.0
        %1308 = vmatpush2.msra.mxu0 0.0
        %1309 = vmatprep.subr.mxu0 0.0
        %1310 = vmatpush2.msra.mxu0 0.0
        %1311 = vmatprep.subr.mxu0 0.0
        %1312 = vmatpush2.msra.mxu0 0.0
        %1313 = vmatprep.subr.mxu0 0.0
        %1314 = vmatpush2.msra.mxu0 0.0
        %1315 = vmatprep.mubr.f32.mxu0 0.0
        %v1316 = vand.u32 %v835, 4294901760
        %1317 = vmatmul.mubr.f32.gmra.mxu0 %v1316
        %v1318 = vpop.f32.mrf.mxu0
        %v1319 = vadd.f32 %v1244, %v1318
        %v1320 = vpop.f32.mrf.mxu0
        %1321 = vdwg.mxu0
        %v1322 = vmul.f32 %v1319, %v1319
        %v1323 = vsel %vm822, %v1322, 0.0
        %1324 = vadd.xlane.f32.xlu0 %v1323
        %v1325 = vpop.xlane.xlu0 %1324
        %v1326 = vadd.f32 %v1325, 1.0
        %v1327 = vrcp.pop %v1326
        %v1328 = vmul.f32 %v1325, %v1327
        %v1329 = vadd.f32 %v1325, 1e-09
        %v1330 = vrsqrt.pop %v1329
        %v1331 = vmul.f32 %v1328, %v1330
        %v1332 = vmul.f32 %v1331, %v1319
        %v1334 = vsel %vm185, %v1332, 0
        %v1337 = vsel %vm185, %v791, 0
        %v1340 = vsel %vm185, %v797, 0
        %v1343 = vsel %vm185, %v803, 0
        %v1346 = vsel %vm185, %v809, 0
        %1348 = vmatprep.subr.mxu0 0.0
        %1349 = vmatpush1.xpose.msra.mxu0 0.0
        %1350 = vmatprep.subr.mxu0 0.0
        %1351 = vmatpush1.xpose.msra.mxu0 0.0
        %1352 = vmatprep.subr.mxu0 0.0
        %1353 = vmatpush1.xpose.msra.mxu0 0.0
        %1354 = vmatprep.subr.mxu0 0.0
        %1355 = vmatpush1.xpose.msra.mxu0 0.0
        %1356 = vmatprep.subr.mxu0 0.0
        %1357 = vmatpush1.xpose.msra.mxu0 0.0
        %1358 = vmatprep.subr.mxu0 0.0
        %1359 = vmatpush1.xpose.msra.mxu0 0.0
        %1360 = vmatprep.subr.mxu0 0.0
        %1361 = vmatpush1.xpose.msra.mxu0 0.0
        %1362 = vmatprep.subr.mxu0 0.0
        %1363 = vmatpush1.xpose.msra.mxu0 0.0
        %1364 = vmatprep.subr.mxu0 0.0
        %1365 = vmatpush1.xpose.msra.mxu0 0.0
        %1366 = vmatprep.subr.mxu0 0.0
        %1367 = vmatpush1.xpose.msra.mxu0 0.0
        %1368 = vmatprep.subr.mxu0 0.0
        %1369 = vmatpush1.xpose.msra.mxu0 0.0
        %1370 = vmatprep.subr.mxu0 0.0
        %1371 = vmatpush1.xpose.msra.mxu0 0.0
        %1372 = vmatprep.subr.mxu0 0.0
        %v1373 = vand.u32 %v1346, 4294901760
        %1374 = vmatpush1.xpose.msra.mxu0 %v1373
        %1375 = vmatprep.subr.mxu0 0.0
        %v1376 = vand.u32 %v1343, 4294901760
        %1377 = vmatpush1.xpose.msra.mxu0 %v1376
        %1378 = vmatprep.subr.mxu0 0.0
        %v1379 = vand.u32 %v1340, 4294901760
        %1380 = vmatpush1.xpose.msra.mxu0 %v1379
        %1381 = vmatprep.subr.mxu0 0.0
        %v1382 = vand.u32 %v1337, 4294901760
        %1383 = vmatpush1.xpose.msra.mxu0 %v1382
        %1384 = vmatprep.subr.mxu0 0.0
        %1385 = vmatpush2.xpose.msra.mxu0 0.0
        %1386 = vmatprep.subr.mxu0 0.0
        %1387 = vmatpush2.xpose.msra.mxu0 0.0
        %1388 = vmatprep.subr.mxu0 0.0
        %1389 = vmatpush2.xpose.msra.mxu0 0.0
        %1390 = vmatprep.subr.mxu0 0.0
        %1391 = vmatpush2.xpose.msra.mxu0 0.0
        %1392 = vmatprep.subr.mxu0 0.0
        %1393 = vmatpush2.xpose.msra.mxu0 0.0
        %1394 = vmatprep.subr.mxu0 0.0
        %1395 = vmatpush2.xpose.msra.mxu0 0.0
        %1396 = vmatprep.subr.mxu0 0.0
        %1397 = vmatpush2.xpose.msra.mxu0 0.0
        %1398 = vmatprep.subr.mxu0 0.0
        %1399 = vmatpush2.xpose.msra.mxu0 0.0
        %1400 = vmatprep.subr.mxu0 0.0
        %1401 = vmatpush2.xpose.msra.mxu0 0.0
        %1402 = vmatprep.subr.mxu0 0.0
        %1403 = vmatpush2.xpose.msra.mxu0 0.0
        %1404 = vmatprep.subr.mxu0 0.0
        %1405 = vmatpush2.xpose.msra.mxu0 0.0
        %1406 = vmatprep.subr.mxu0 0.0
        %1407 = vmatpush2.xpose.msra.mxu0 0.0
        %1408 = vmatprep.subr.mxu0 0.0
        %1409 = vmatpush2.xpose.msra.mxu0 0.0
        %1410 = vmatprep.subr.mxu0 0.0
        %1411 = vmatpush2.xpose.msra.mxu0 0.0
        %1412 = vmatprep.subr.mxu0 0.0
        %1413 = vmatpush2.xpose.msra.mxu0 0.0
        %1414 = vmatprep.subr.mxu0 0.0
        %1415 = vmatpush2.xpose.msra.mxu0 0.0
        %1416 = vmatprep.mubr.f32.mxu0 0.0
        %v1417 = vand.u32 %v1334, 4294901760
        %v1418 = vsub.f32 %v1334, %v1417
        %v1419 = vand.u32 %v1418, 4294901760
        %v1420 = vsub.f32 %v1418, %v1419
        %v1421 = vand.u32 %v1420, 4294901760
        %1422 = vmatmul.mubr.f32.gmra.mxu0 %v1421
        %v1423 = vpop.f32.mrf.mxu0
        %v1424 = vadd.f32 0.0, %v1423
        %v1425 = vpop.f32.mrf.mxu0
        %1426 = vdwg.mxu0
        %1427 = vmatprep.subr.mxu0 0.0
        %1428 = vmatpush1.xpose.msra.mxu0 0.0
        %1429 = vmatprep.subr.mxu0 0.0
        %1430 = vmatpush1.xpose.msra.mxu0 0.0
        %1431 = vmatprep.subr.mxu0 0.0
        %1432 = vmatpush1.xpose.msra.mxu0 0.0
        %1433 = vmatprep.subr.mxu0 0.0
        %1434 = vmatpush1.xpose.msra.mxu0 0.0
        %1435 = vmatprep.subr.mxu0 0.0
        %1436 = vmatpush1.xpose.msra.mxu0 0.0
        %1437 = vmatprep.subr.mxu0 0.0
        %1438 = vmatpush1.xpose.msra.mxu0 0.0
        %1439 = vmatprep.subr.mxu0 0.0
        %1440 = vmatpush1.xpose.msra.mxu0 0.0
        %1441 = vmatprep.subr.mxu0 0.0
        %1442 = vmatpush1.xpose.msra.mxu0 0.0
        %1443 = vmatprep.subr.mxu0 0.0
        %1444 = vmatpush1.xpose.msra.mxu0 0.0
        %1445 = vmatprep.subr.mxu0 0.0
        %1446 = vmatpush1.xpose.msra.mxu0 0.0
        %1447 = vmatprep.subr.mxu0 0.0
        %1448 = vmatpush1.xpose.msra.mxu0 0.0
        %1449 = vmatprep.subr.mxu0 0.0
        %1450 = vmatpush1.xpose.msra.mxu0 0.0
        %1451 = vmatprep.subr.mxu0 0.0
        %v1452 = vand.u32 %v1346, 4294901760
        %v1453 = vsub.f32 %v1346, %v1452
        %v1454 = vand.u32 %v1453, 4294901760
        %v1455 = vsub.f32 %v1453, %v1454
        %v1456 = vand.u32 %v1455, 4294901760
        %1457 = vmatpush1.xpose.msra.mxu0 %v1456
        %1458 = vmatprep.subr.mxu0 0.0
        %v1459 = vand.u32 %v1343, 4294901760
        %v1460 = vsub.f32 %v1343, %v1459
        %v1461 = vand.u32 %v1460, 4294901760
        %v1462 = vsub.f32 %v1460, %v1461
        %v1463 = vand.u32 %v1462, 4294901760
        %1464 = vmatpush1.xpose.msra.mxu0 %v1463
        %1465 = vmatprep.subr.mxu0 0.0
        %v1466 = vand.u32 %v1340, 4294901760
        %v1467 = vsub.f32 %v1340, %v1466
        %v1468 = vand.u32 %v1467, 4294901760
        %v1469 = vsub.f32 %v1467, %v1468
        %v1470 = vand.u32 %v1469, 4294901760
        %1471 = vmatpush1.xpose.msra.mxu0 %v1470
        %1472 = vmatprep.subr.mxu0 0.0
        %v1473 = vand.u32 %v1337, 4294901760
        %v1474 = vsub.f32 %v1337, %v1473
        %v1475 = vand.u32 %v1474, 4294901760
        %v1476 = vsub.f32 %v1474, %v1475
        %v1477 = vand.u32 %v1476, 4294901760
        %1478 = vmatpush1.xpose.msra.mxu0 %v1477
        %1479 = vmatprep.subr.mxu0 0.0
        %1480 = vmatpush2.xpose.msra.mxu0 0.0
        %1481 = vmatprep.subr.mxu0 0.0
        %1482 = vmatpush2.xpose.msra.mxu0 0.0
        %1483 = vmatprep.subr.mxu0 0.0
        %1484 = vmatpush2.xpose.msra.mxu0 0.0
        %1485 = vmatprep.subr.mxu0 0.0
        %1486 = vmatpush2.xpose.msra.mxu0 0.0
        %1487 = vmatprep.subr.mxu0 0.0
        %1488 = vmatpush2.xpose.msra.mxu0 0.0
        %1489 = vmatprep.subr.mxu0 0.0
        %1490 = vmatpush2.xpose.msra.mxu0 0.0
        %1491 = vmatprep.subr.mxu0 0.0
        %1492 = vmatpush2.xpose.msra.mxu0 0.0
        %1493 = vmatprep.subr.mxu0 0.0
        %1494 = vmatpush2.xpose.msra.mxu0 0.0
        %1495 = vmatprep.subr.mxu0 0.0
        %1496 = vmatpush2.xpose.msra.mxu0 0.0
        %1497 = vmatprep.subr.mxu0 0.0
        %1498 = vmatpush2.xpose.msra.mxu0 0.0
        %1499 = vmatprep.subr.mxu0 0.0
        %1500 = vmatpush2.xpose.msra.mxu0 0.0
        %1501 = vmatprep.subr.mxu0 0.0
        %1502 = vmatpush2.xpose.msra.mxu0 0.0
        %1503 = vmatprep.subr.mxu0 0.0
        %1504 = vmatpush2.xpose.msra.mxu0 0.0
        %1505 = vmatprep.subr.mxu0 0.0
        %1506 = vmatpush2.xpose.msra.mxu0 0.0
        %1507 = vmatprep.subr.mxu0 0.0
        %1508 = vmatpush2.xpose.msra.mxu0 0.0
        %1509 = vmatprep.subr.mxu0 0.0
        %1510 = vmatpush2.xpose.msra.mxu0 0.0
        %1511 = vmatprep.mubr.f32.mxu0 0.0
        %v1512 = vand.u32 %v1334, 4294901760
        %1513 = vmatmul.mubr.f32.gmra.mxu0 %v1512
        %v1514 = vpop.f32.mrf.mxu0
        %v1515 = vadd.f32 %v1424, %v1514
        %v1516 = vpop.f32.mrf.mxu0
        %1517 = vdwg.mxu0
        %1518 = vmatprep.subr.mxu0 0.0
        %1519 = vmatpush1.xpose.msra.mxu0 0.0
        %1520 = vmatprep.subr.mxu0 0.0
        %1521 = vmatpush1.xpose.msra.mxu0 0.0
        %1522 = vmatprep.subr.mxu0 0.0
        %1523 = vmatpush1.xpose.msra.mxu0 0.0
        %1524 = vmatprep.subr.mxu0 0.0
        %1525 = vmatpush1.xpose.msra.mxu0 0.0
        %1526 = vmatprep.subr.mxu0 0.0
        %1527 = vmatpush1.xpose.msra.mxu0 0.0
        %1528 = vmatprep.subr.mxu0 0.0
        %1529 = vmatpush1.xpose.msra.mxu0 0.0
        %1530 = vmatprep.subr.mxu0 0.0
        %1531 = vmatpush1.xpose.msra.mxu0 0.0
        %1532 = vmatprep.subr.mxu0 0.0
        %1533 = vmatpush1.xpose.msra.mxu0 0.0
        %1534 = vmatprep.subr.mxu0 0.0
        %1535 = vmatpush1.xpose.msra.mxu0 0.0
        %1536 = vmatprep.subr.mxu0 0.0
        %1537 = vmatpush1.xpose.msra.mxu0 0.0
        %1538 = vmatprep.subr.mxu0 0.0
        %1539 = vmatpush1.xpose.msra.mxu0 0.0
        %1540 = vmatprep.subr.mxu0 0.0
        %1541 = vmatpush1.xpose.msra.mxu0 0.0
        %1542 = vmatprep.subr.mxu0 0.0
        %v1543 = vand.u32 %v1346, 4294901760
        %v1544 = vsub.f32 %v1346, %v1543
        %1545 = vmatpush1.xpose.msra.mxu0 %v1544
        %1546 = vmatprep.subr.mxu0 0.0
        %v1547 = vand.u32 %v1343, 4294901760
        %v1548 = vsub.f32 %v1343, %v1547
        %1549 = vmatpush1.xpose.msra.mxu0 %v1548
        %1550 = vmatprep.subr.mxu0 0.0
        %v1551 = vand.u32 %v1340, 4294901760
        %v1552 = vsub.f32 %v1340, %v1551
        %1553 = vmatpush1.xpose.msra.mxu0 %v1552
        %1554 = vmatprep.subr.mxu0 0.0
        %v1555 = vand.u32 %v1337, 4294901760
        %v1556 = vsub.f32 %v1337, %v1555
        %1557 = vmatpush1.xpose.msra.mxu0 %v1556
        %1558 = vmatprep.subr.mxu0 0.0
        %1559 = vmatpush2.xpose.msra.mxu0 0.0
        %1560 = vmatprep.subr.mxu0 0.0
        %1561 = vmatpush2.xpose.msra.mxu0 0.0
        %1562 = vmatprep.subr.mxu0 0.0
        %1563 = vmatpush2.xpose.msra.mxu0 0.0
        %1564 = vmatprep.subr.mxu0 0.0
        %1565 = vmatpush2.xpose.msra.mxu0 0.0
        %1566 = vmatprep.subr.mxu0 0.0
        %1567 = vmatpush2.xpose.msra.mxu0 0.0
        %1568 = vmatprep.subr.mxu0 0.0
        %1569 = vmatpush2.xpose.msra.mxu0 0.0
        %1570 = vmatprep.subr.mxu0 0.0
        %1571 = vmatpush2.xpose.msra.mxu0 0.0
        %1572 = vmatprep.subr.mxu0 0.0
        %1573 = vmatpush2.xpose.msra.mxu0 0.0
        %1574 = vmatprep.subr.mxu0 0.0
        %1575 = vmatpush2.xpose.msra.mxu0 0.0
        %1576 = vmatprep.subr.mxu0 0.0
        %1577 = vmatpush2.xpose.msra.mxu0 0.0
        %1578 = vmatprep.subr.mxu0 0.0
        %1579 = vmatpush2.xpose.msra.mxu0 0.0
        %1580 = vmatprep.subr.mxu0 0.0
        %1581 = vmatpush2.xpose.msra.mxu0 0.0
        %1582 = vmatprep.subr.mxu0 0.0
        %1583 = vmatpush2.xpose.msra.mxu0 0.0
        %1584 = vmatprep.subr.mxu0 0.0
        %1585 = vmatpush2.xpose.msra.mxu0 0.0
        %1586 = vmatprep.subr.mxu0 0.0
        %1587 = vmatpush2.xpose.msra.mxu0 0.0
        %1588 = vmatprep.subr.mxu0 0.0
        %1589 = vmatpush2.xpose.msra.mxu0 0.0
        %1590 = vmatprep.mubr.f32.mxu0 0.0
        %v1591 = vand.u32 %v1334, 4294901760
        %v1592 = vsub.f32 %v1334, %v1591
        %1593 = vmatmul.mubr.f32.gmra.mxu0 %v1592
        %v1594 = vpop.f32.mrf.mxu0
        %v1595 = vadd.f32 %v1515, %v1594
        %v1596 = vpop.f32.mrf.mxu0
        %1597 = vdwg.mxu0
        %1598 = vmatprep.subr.mxu0 0.0
        %1599 = vmatpush1.xpose.msra.mxu0 0.0
        %1600 = vmatprep.subr.mxu0 0.0
        %1601 = vmatpush1.xpose.msra.mxu0 0.0
        %1602 = vmatprep.subr.mxu0 0.0
        %1603 = vmatpush1.xpose.msra.mxu0 0.0
        %1604 = vmatprep.subr.mxu0 0.0
        %1605 = vmatpush1.xpose.msra.mxu0 0.0
        %1606 = vmatprep.subr.mxu0 0.0
        %1607 = vmatpush1.xpose.msra.mxu0 0.0
        %1608 = vmatprep.subr.mxu0 0.0
        %1609 = vmatpush1.xpose.msra.mxu0 0.0
        %1610 = vmatprep.subr.mxu0 0.0
        %1611 = vmatpush1.xpose.msra.mxu0 0.0
        %1612 = vmatprep.subr.mxu0 0.0
        %1613 = vmatpush1.xpose.msra.mxu0 0.0
        %1614 = vmatprep.subr.mxu0 0.0
        %1615 = vmatpush1.xpose.msra.mxu0 0.0
        %1616 = vmatprep.subr.mxu0 0.0
        %1617 = vmatpush1.xpose.msra.mxu0 0.0
        %1618 = vmatprep.subr.mxu0 0.0
        %1619 = vmatpush1.xpose.msra.mxu0 0.0
        %1620 = vmatprep.subr.mxu0 0.0
        %1621 = vmatpush1.xpose.msra.mxu0 0.0
        %1622 = vmatprep.subr.mxu0 0.0
        %v1623 = vand.u32 %v1346, 4294901760
        %1624 = vmatpush1.xpose.msra.mxu0 %v1623
        %1625 = vmatprep.subr.mxu0 0.0
        %v1626 = vand.u32 %v1343, 4294901760
        %1627 = vmatpush1.xpose.msra.mxu0 %v1626
        %1628 = vmatprep.subr.mxu0 0.0
        %v1629 = vand.u32 %v1340, 4294901760
        %1630 = vmatpush1.xpose.msra.mxu0 %v1629
        %1631 = vmatprep.subr.mxu0 0.0
        %v1632 = vand.u32 %v1337, 4294901760
        %1633 = vmatpush1.xpose.msra.mxu0 %v1632
        %1634 = vmatprep.subr.mxu0 0.0
        %1635 = vmatpush2.xpose.msra.mxu0 0.0
        %1636 = vmatprep.subr.mxu0 0.0
        %1637 = vmatpush2.xpose.msra.mxu0 0.0
        %1638 = vmatprep.subr.mxu0 0.0
        %1639 = vmatpush2.xpose.msra.mxu0 0.0
        %1640 = vmatprep.subr.mxu0 0.0
        %1641 = vmatpush2.xpose.msra.mxu0 0.0
        %1642 = vmatprep.subr.mxu0 0.0
        %1643 = vmatpush2.xpose.msra.mxu0 0.0
        %1644 = vmatprep.subr.mxu0 0.0
        %1645 = vmatpush2.xpose.msra.mxu0 0.0
        %1646 = vmatprep.subr.mxu0 0.0
        %1647 = vmatpush2.xpose.msra.mxu0 0.0
        %1648 = vmatprep.subr.mxu0 0.0
        %1649 = vmatpush2.xpose.msra.mxu0 0.0
        %1650 = vmatprep.subr.mxu0 0.0
        %1651 = vmatpush2.xpose.msra.mxu0 0.0
        %1652 = vmatprep.subr.mxu0 0.0
        %1653 = vmatpush2.xpose.msra.mxu0 0.0
        %1654 = vmatprep.subr.mxu0 0.0
        %1655 = vmatpush2.xpose.msra.mxu0 0.0
        %1656 = vmatprep.subr.mxu0 0.0
        %1657 = vmatpush2.xpose.msra.mxu0 0.0
        %1658 = vmatprep.subr.mxu0 0.0
        %1659 = vmatpush2.xpose.msra.mxu0 0.0
        %1660 = vmatprep.subr.mxu0 0.0
        %1661 = vmatpush2.xpose.msra.mxu0 0.0
        %1662 = vmatprep.subr.mxu0 0.0
        %1663 = vmatpush2.xpose.msra.mxu0 0.0
        %1664 = vmatprep.subr.mxu0 0.0
        %1665 = vmatpush2.xpose.msra.mxu0 0.0
        %1666 = vmatprep.mubr.f32.mxu0 0.0
        %v1667 = vand.u32 %v1334, 4294901760
        %v1668 = vsub.f32 %v1334, %v1667
        %v1669 = vand.u32 %v1668, 4294901760
        %1670 = vmatmul.mubr.f32.gmra.mxu0 %v1669
        %v1671 = vpop.f32.mrf.mxu0
        %v1672 = vadd.f32 %v1595, %v1671
        %v1673 = vpop.f32.mrf.mxu0
        %1674 = vdwg.mxu0
        %1675 = vmatprep.subr.mxu0 0.0
        %1676 = vmatpush1.xpose.msra.mxu0 0.0
        %1677 = vmatprep.subr.mxu0 0.0
        %1678 = vmatpush1.xpose.msra.mxu0 0.0
        %1679 = vmatprep.subr.mxu0 0.0
        %1680 = vmatpush1.xpose.msra.mxu0 0.0
        %1681 = vmatprep.subr.mxu0 0.0
        %1682 = vmatpush1.xpose.msra.mxu0 0.0
        %1683 = vmatprep.subr.mxu0 0.0
        %1684 = vmatpush1.xpose.msra.mxu0 0.0
        %1685 = vmatprep.subr.mxu0 0.0
        %1686 = vmatpush1.xpose.msra.mxu0 0.0
        %1687 = vmatprep.subr.mxu0 0.0
        %1688 = vmatpush1.xpose.msra.mxu0 0.0
        %1689 = vmatprep.subr.mxu0 0.0
        %1690 = vmatpush1.xpose.msra.mxu0 0.0
        %1691 = vmatprep.subr.mxu0 0.0
        %1692 = vmatpush1.xpose.msra.mxu0 0.0
        %1693 = vmatprep.subr.mxu0 0.0
        %1694 = vmatpush1.xpose.msra.mxu0 0.0
        %1695 = vmatprep.subr.mxu0 0.0
        %1696 = vmatpush1.xpose.msra.mxu0 0.0
        %1697 = vmatprep.subr.mxu0 0.0
        %1698 = vmatpush1.xpose.msra.mxu0 0.0
        %1699 = vmatprep.subr.mxu0 0.0
        %v1700 = vand.u32 %v1346, 4294901760
        %v1701 = vsub.f32 %v1346, %v1700
        %v1702 = vand.u32 %v1701, 4294901760
        %1703 = vmatpush1.xpose.msra.mxu0 %v1702
        %1704 = vmatprep.subr.mxu0 0.0
        %v1705 = vand.u32 %v1343, 4294901760
        %v1706 = vsub.f32 %v1343, %v1705
        %v1707 = vand.u32 %v1706, 4294901760
        %1708 = vmatpush1.xpose.msra.mxu0 %v1707
        %1709 = vmatprep.subr.mxu0 0.0
        %v1710 = vand.u32 %v1340, 4294901760
        %v1711 = vsub.f32 %v1340, %v1710
        %v1712 = vand.u32 %v1711, 4294901760
        %1713 = vmatpush1.xpose.msra.mxu0 %v1712
        %1714 = vmatprep.subr.mxu0 0.0
        %v1715 = vand.u32 %v1337, 4294901760
        %v1716 = vsub.f32 %v1337, %v1715
        %v1717 = vand.u32 %v1716, 4294901760
        %1718 = vmatpush1.xpose.msra.mxu0 %v1717
        %1719 = vmatprep.subr.mxu0 0.0
        %1720 = vmatpush2.xpose.msra.mxu0 0.0
        %1721 = vmatprep.subr.mxu0 0.0
        %1722 = vmatpush2.xpose.msra.mxu0 0.0
        %1723 = vmatprep.subr.mxu0 0.0
        %1724 = vmatpush2.xpose.msra.mxu0 0.0
        %1725 = vmatprep.subr.mxu0 0.0
        %1726 = vmatpush2.xpose.msra.mxu0 0.0
        %1727 = vmatprep.subr.mxu0 0.0
        %1728 = vmatpush2.xpose.msra.mxu0 0.0
        %1729 = vmatprep.subr.mxu0 0.0
        %1730 = vmatpush2.xpose.msra.mxu0 0.0
        %1731 = vmatprep.subr.mxu0 0.0
        %1732 = vmatpush2.xpose.msra.mxu0 0.0
        %1733 = vmatprep.subr.mxu0 0.0
        %1734 = vmatpush2.xpose.msra.mxu0 0.0
        %1735 = vmatprep.subr.mxu0 0.0
        %1736 = vmatpush2.xpose.msra.mxu0 0.0
        %1737 = vmatprep.subr.mxu0 0.0
        %1738 = vmatpush2.xpose.msra.mxu0 0.0
        %1739 = vmatprep.subr.mxu0 0.0
        %1740 = vmatpush2.xpose.msra.mxu0 0.0
        %1741 = vmatprep.subr.mxu0 0.0
        %1742 = vmatpush2.xpose.msra.mxu0 0.0
        %1743 = vmatprep.subr.mxu0 0.0
        %1744 = vmatpush2.xpose.msra.mxu0 0.0
        %1745 = vmatprep.subr.mxu0 0.0
        %1746 = vmatpush2.xpose.msra.mxu0 0.0
        %1747 = vmatprep.subr.mxu0 0.0
        %1748 = vmatpush2.xpose.msra.mxu0 0.0
        %1749 = vmatprep.subr.mxu0 0.0
        %1750 = vmatpush2.xpose.msra.mxu0 0.0
        %1751 = vmatprep.mubr.f32.mxu0 0.0
        %v1752 = vand.u32 %v1334, 4294901760
        %1753 = vmatmul.mubr.f32.gmra.mxu0 %v1752
        %v1754 = vpop.f32.mrf.mxu0
        %v1755 = vadd.f32 %v1672, %v1754
        %v1756 = vpop.f32.mrf.mxu0
        %1757 = vdwg.mxu0
        %1758 = vmatprep.subr.mxu0 0.0
        %1759 = vmatpush1.xpose.msra.mxu0 0.0
        %1760 = vmatprep.subr.mxu0 0.0
        %1761 = vmatpush1.xpose.msra.mxu0 0.0
        %1762 = vmatprep.subr.mxu0 0.0
        %1763 = vmatpush1.xpose.msra.mxu0 0.0
        %1764 = vmatprep.subr.mxu0 0.0
        %1765 = vmatpush1.xpose.msra.mxu0 0.0
        %1766 = vmatprep.subr.mxu0 0.0
        %1767 = vmatpush1.xpose.msra.mxu0 0.0
        %1768 = vmatprep.subr.mxu0 0.0
        %1769 = vmatpush1.xpose.msra.mxu0 0.0
        %1770 = vmatprep.subr.mxu0 0.0
        %1771 = vmatpush1.xpose.msra.mxu0 0.0
        %1772 = vmatprep.subr.mxu0 0.0
        %1773 = vmatpush1.xpose.msra.mxu0 0.0
        %1774 = vmatprep.subr.mxu0 0.0
        %1775 = vmatpush1.xpose.msra.mxu0 0.0
        %1776 = vmatprep.subr.mxu0 0.0
        %1777 = vmatpush1.xpose.msra.mxu0 0.0
        %1778 = vmatprep.subr.mxu0 0.0
        %1779 = vmatpush1.xpose.msra.mxu0 0.0
        %1780 = vmatprep.subr.mxu0 0.0
        %1781 = vmatpush1.xpose.msra.mxu0 0.0
        %1782 = vmatprep.subr.mxu0 0.0
        %v1783 = vand.u32 %v1346, 4294901760
        %1784 = vmatpush1.xpose.msra.mxu0 %v1783
        %1785 = vmatprep.subr.mxu0 0.0
        %v1786 = vand.u32 %v1343, 4294901760
        %1787 = vmatpush1.xpose.msra.mxu0 %v1786
        %1788 = vmatprep.subr.mxu0 0.0
        %v1789 = vand.u32 %v1340, 4294901760
        %1790 = vmatpush1.xpose.msra.mxu0 %v1789
        %1791 = vmatprep.subr.mxu0 0.0
        %v1792 = vand.u32 %v1337, 4294901760
        %1793 = vmatpush1.xpose.msra.mxu0 %v1792
        %1794 = vmatprep.subr.mxu0 0.0
        %1795 = vmatpush2.xpose.msra.mxu0 0.0
        %1796 = vmatprep.subr.mxu0 0.0
        %1797 = vmatpush2.xpose.msra.mxu0 0.0
        %1798 = vmatprep.subr.mxu0 0.0
        %1799 = vmatpush2.xpose.msra.mxu0 0.0
        %1800 = vmatprep.subr.mxu0 0.0
        %1801 = vmatpush2.xpose.msra.mxu0 0.0
        %1802 = vmatprep.subr.mxu0 0.0
        %1803 = vmatpush2.xpose.msra.mxu0 0.0
        %1804 = vmatprep.subr.mxu0 0.0
        %1805 = vmatpush2.xpose.msra.mxu0 0.0
        %1806 = vmatprep.subr.mxu0 0.0
        %1807 = vmatpush2.xpose.msra.mxu0 0.0
        %1808 = vmatprep.subr.mxu0 0.0
        %1809 = vmatpush2.xpose.msra.mxu0 0.0
        %1810 = vmatprep.subr.mxu0 0.0
        %1811 = vmatpush2.xpose.msra.mxu0 0.0
        %1812 = vmatprep.subr.mxu0 0.0
        %1813 = vmatpush2.xpose.msra.mxu0 0.0
        %1814 = vmatprep.subr.mxu0 0.0
        %1815 = vmatpush2.xpose.msra.mxu0 0.0
        %1816 = vmatprep.subr.mxu0 0.0
        %1817 = vmatpush2.xpose.msra.mxu0 0.0
        %1818 = vmatprep.subr.mxu0 0.0
        %1819 = vmatpush2.xpose.msra.mxu0 0.0
        %1820 = vmatprep.subr.mxu0 0.0
        %1821 = vmatpush2.xpose.msra.mxu0 0.0
        %1822 = vmatprep.subr.mxu0 0.0
        %1823 = vmatpush2.xpose.msra.mxu0 0.0
        %1824 = vmatprep.subr.mxu0 0.0
        %1825 = vmatpush2.xpose.msra.mxu0 0.0
        %1826 = vmatprep.mubr.f32.mxu0 0.0
        %v1827 = vand.u32 %v1334, 4294901760
        %1828 = vmatmul.mubr.f32.gmra.mxu0 %v1827
        %v1829 = vpop.f32.mrf.mxu0
        %v1830 = vadd.f32 %v1755, %v1829
        %v1831 = vpop.f32.mrf.mxu0
        %1832 = vdwg.mxu0
        %v1833 = vadd.f32 %v821, %v1830
        %v1834 = vsel %vm822, %v1833, -inf
        %1835 = vmax.xlane.f32.xlu0 %v1834
        %v1836 = vpop.xlane.xlu0 %1835
        %v1837 = vsub.f32 %v1833, %v1836
        %v1838 = vmul.f32 %v1837, 1.442695
        %v1839 = vpow.pop %v1838
        %v1840 = vsel %vm822, %v1839, 0.0
        %1841 = vadd.xlane.f32.xlu0 %v1840
        %v1842 = vpop.xlane.xlu0 %1841
        %v1843 = vrcp.pop %v1842
        %v1844 = vmul.f32 %v1839, %v1843
        %v1846 = vsel %vm185, %v1844, 0
        %1848 = vmatprep.subr.mxu0 0.0
        %1849 = vmatpush1.msra.mxu0 0.0
        %1850 = vmatprep.subr.mxu0 0.0
        %1851 = vmatpush1.msra.mxu0 0.0
        %1852 = vmatprep.subr.mxu0 0.0
        %1853 = vmatpush1.msra.mxu0 0.0
        %1854 = vmatprep.subr.mxu0 0.0
        %1855 = vmatpush1.msra.mxu0 0.0
        %1856 = vmatprep.subr.mxu0 0.0
        %1857 = vmatpush1.msra.mxu0 0.0
        %1858 = vmatprep.subr.mxu0 0.0
        %1859 = vmatpush1.msra.mxu0 0.0
        %1860 = vmatprep.subr.mxu0 0.0
        %1861 = vmatpush1.msra.mxu0 0.0
        %1862 = vmatprep.subr.mxu0 0.0
        %1863 = vmatpush1.msra.mxu0 0.0
        %1864 = vmatprep.subr.mxu0 0.0
        %1865 = vmatpush1.msra.mxu0 0.0
        %1866 = vmatprep.subr.mxu0 0.0
        %1867 = vmatpush1.msra.mxu0 0.0
        %1868 = vmatprep.subr.mxu0 0.0
        %1869 = vmatpush1.msra.mxu0 0.0
        %1870 = vmatprep.subr.mxu0 0.0
        %1871 = vmatpush1.msra.mxu0 0.0
        %1872 = vmatprep.subr.mxu0 0.0
        %v1873 = vand.u32 %v809, 4294901760
        %1874 = vmatpush1.msra.mxu0 %v1873
        %1875 = vmatprep.subr.mxu0 0.0
        %v1876 = vand.u32 %v803, 4294901760
        %1877 = vmatpush1.msra.mxu0 %v1876
        %1878 = vmatprep.subr.mxu0 0.0
        %v1879 = vand.u32 %v797, 4294901760
        %1880 = vmatpush1.msra.mxu0 %v1879
        %1881 = vmatprep.subr.mxu0 0.0
        %v1882 = vand.u32 %v791, 4294901760
        %1883 = vmatpush1.msra.mxu0 %v1882
        %1884 = vmatprep.subr.mxu0 0.0
        %1885 = vmatpush2.msra.mxu0 0.0
        %1886 = vmatprep.subr.mxu0 0.0
        %1887 = vmatpush2.msra.mxu0 0.0
        %1888 = vmatprep.subr.mxu0 0.0
        %1889 = vmatpush2.msra.mxu0 0.0
        %1890 = vmatprep.subr.mxu0 0.0
        %1891 = vmatpush2.msra.mxu0 0.0
        %1892 = vmatprep.subr.mxu0 0.0
        %1893 = vmatpush2.msra.mxu0 0.0
        %1894 = vmatprep.subr.mxu0 0.0
        %1895 = vmatpush2.msra.mxu0 0.0
        %1896 = vmatprep.subr.mxu0 0.0
        %1897 = vmatpush2.msra.mxu0 0.0
        %1898 = vmatprep.subr.mxu0 0.0
        %1899 = vmatpush2.msra.mxu0 0.0
        %1900 = vmatprep.subr.mxu0 0.0
        %1901 = vmatpush2.msra.mxu0 0.0
        %1902 = vmatprep.subr.mxu0 0.0
        %1903 = vmatpush2.msra.mxu0 0.0
        %1904 = vmatprep.subr.mxu0 0.0
        %1905 = vmatpush2.msra.mxu0 0.0
        %1906 = vmatprep.subr.mxu0 0.0
        %1907 = vmatpush2.msra.mxu0 0.0
        %1908 = vmatprep.subr.mxu0 0.0
        %1909 = vmatpush2.msra.mxu0 0.0
        %1910 = vmatprep.subr.mxu0 0.0
        %1911 = vmatpush2.msra.mxu0 0.0
        %1912 = vmatprep.subr.mxu0 0.0
        %1913 = vmatpush2.msra.mxu0 0.0
        %1914 = vmatprep.subr.mxu0 0.0
        %1915 = vmatpush2.msra.mxu0 0.0
        %1916 = vmatprep.mubr.f32.mxu0 0.0
        %v1917 = vand.u32 %v1846, 4294901760
        %v1918 = vsub.f32 %v1846, %v1917
        %v1919 = vand.u32 %v1918, 4294901760
        %v1920 = vsub.f32 %v1918, %v1919
        %v1921 = vand.u32 %v1920, 4294901760
        %1922 = vmatmul.mubr.f32.gmra.mxu0 %v1921
        %v1923 = vpop.f32.mrf.mxu0
        %v1924 = vadd.f32 0.0, %v1923
        %v1925 = vpop.f32.mrf.mxu0
        %1926 = vdwg.mxu0
        %1927 = vmatprep.subr.mxu0 0.0
        %1928 = vmatpush1.msra.mxu0 0.0
        %1929 = vmatprep.subr.mxu0 0.0
        %1930 = vmatpush1.msra.mxu0 0.0
        %1931 = vmatprep.subr.mxu0 0.0
        %1932 = vmatpush1.msra.mxu0 0.0
        %1933 = vmatprep.subr.mxu0 0.0
        %1934 = vmatpush1.msra.mxu0 0.0
        %1935 = vmatprep.subr.mxu0 0.0
        %1936 = vmatpush1.msra.mxu0 0.0
        %1937 = vmatprep.subr.mxu0 0.0
        %1938 = vmatpush1.msra.mxu0 0.0
        %1939 = vmatprep.subr.mxu0 0.0
        %1940 = vmatpush1.msra.mxu0 0.0
        %1941 = vmatprep.subr.mxu0 0.0
        %1942 = vmatpush1.msra.mxu0 0.0
        %1943 = vmatprep.subr.mxu0 0.0
        %1944 = vmatpush1.msra.mxu0 0.0
        %1945 = vmatprep.subr.mxu0 0.0
        %1946 = vmatpush1.msra.mxu0 0.0
        %1947 = vmatprep.subr.mxu0 0.0
        %1948 = vmatpush1.msra.mxu0 0.0
        %1949 = vmatprep.subr.mxu0 0.0
        %1950 = vmatpush1.msra.mxu0 0.0
        %1951 = vmatprep.subr.mxu0 0.0
        %v1952 = vand.u32 %v809, 4294901760
        %v1953 = vsub.f32 %v809, %v1952
        %v1954 = vand.u32 %v1953, 4294901760
        %v1955 = vsub.f32 %v1953, %v1954
        %v1956 = vand.u32 %v1955, 4294901760
        %1957 = vmatpush1.msra.mxu0 %v1956
        %1958 = vmatprep.subr.mxu0 0.0
        %v1959 = vand.u32 %v803, 4294901760
        %v1960 = vsub.f32 %v803, %v1959
        %v1961 = vand.u32 %v1960, 4294901760
        %v1962 = vsub.f32 %v1960, %v1961
        %v1963 = vand.u32 %v1962, 4294901760
        %1964 = vmatpush1.msra.mxu0 %v1963
        %1965 = vmatprep.subr.mxu0 0.0
        %v1966 = vand.u32 %v797, 4294901760
        %v1967 = vsub.f32 %v797, %v1966
        %v1968 = vand.u32 %v1967, 4294901760
        %v1969 = vsub.f32 %v1967, %v1968
        %v1970 = vand.u32 %v1969, 4294901760
        %1971 = vmatpush1.msra.mxu0 %v1970
        %1972 = vmatprep.subr.mxu0 0.0
        %v1973 = vand.u32 %v791, 4294901760
        %v1974 = vsub.f32 %v791, %v1973
        %v1975 = vand.u32 %v1974, 4294901760
        %v1976 = vsub.f32 %v1974, %v1975
        %v1977 = vand.u32 %v1976, 4294901760
        %1978 = vmatpush1.msra.mxu0 %v1977
        %1979 = vmatprep.subr.mxu0 0.0
        %1980 = vmatpush2.msra.mxu0 0.0
        %1981 = vmatprep.subr.mxu0 0.0
        %1982 = vmatpush2.msra.mxu0 0.0
        %1983 = vmatprep.subr.mxu0 0.0
        %1984 = vmatpush2.msra.mxu0 0.0
        %1985 = vmatprep.subr.mxu0 0.0
        %1986 = vmatpush2.msra.mxu0 0.0
        %1987 = vmatprep.subr.mxu0 0.0
        %1988 = vmatpush2.msra.mxu0 0.0
        %1989 = vmatprep.subr.mxu0 0.0
        %1990 = vmatpush2.msra.mxu0 0.0
        %1991 = vmatprep.subr.mxu0 0.0
        %1992 = vmatpush2.msra.mxu0 0.0
        %1993 = vmatprep.subr.mxu0 0.0
        %1994 = vmatpush2.msra.mxu0 0.0
        %1995 = vmatprep.subr.mxu0 0.0
        %1996 = vmatpush2.msra.mxu0 0.0
        %1997 = vmatprep.subr.mxu0 0.0
        %1998 = vmatpush2.msra.mxu0 0.0
        %1999 = vmatprep.subr.mxu0 0.0
        %2000 = vmatpush2.msra.mxu0 0.0
        %2001 = vmatprep.subr.mxu0 0.0
        %2002 = vmatpush2.msra.mxu0 0.0
        %2003 = vmatprep.subr.mxu0 0.0
        %2004 = vmatpush2.msra.mxu0 0.0
        %2005 = vmatprep.subr.mxu0 0.0
        %2006 = vmatpush2.msra.mxu0 0.0
        %2007 = vmatprep.subr.mxu0 0.0
        %2008 = vmatpush2.msra.mxu0 0.0
        %2009 = vmatprep.subr.mxu0 0.0
        %2010 = vmatpush2.msra.mxu0 0.0
        %2011 = vmatprep.mubr.f32.mxu0 0.0
        %v2012 = vand.u32 %v1846, 4294901760
        %2013 = vmatmul.mubr.f32.gmra.mxu0 %v2012
        %v2014 = vpop.f32.mrf.mxu0
        %v2015 = vadd.f32 %v1924, %v2014
        %v2016 = vpop.f32.mrf.mxu0
        %2017 = vdwg.mxu0
        %2018 = vmatprep.subr.mxu0 0.0
        %2019 = vmatpush1.msra.mxu0 0.0
        %2020 = vmatprep.subr.mxu0 0.0
        %2021 = vmatpush1.msra.mxu0 0.0
        %2022 = vmatprep.subr.mxu0 0.0
        %2023 = vmatpush1.msra.mxu0 0.0
        %2024 = vmatprep.subr.mxu0 0.0
        %2025 = vmatpush1.msra.mxu0 0.0
        %2026 = vmatprep.subr.mxu0 0.0
        %2027 = vmatpush1.msra.mxu0 0.0
        %2028 = vmatprep.subr.mxu0 0.0
        %2029 = vmatpush1.msra.mxu0 0.0
        %2030 = vmatprep.subr.mxu0 0.0
        %2031 = vmatpush1.msra.mxu0 0.0
        %2032 = vmatprep.subr.mxu0 0.0
        %2033 = vmatpush1.msra.mxu0 0.0
        %2034 = vmatprep.subr.mxu0 0.0
        %2035 = vmatpush1.msra.mxu0 0.0
        %2036 = vmatprep.subr.mxu0 0.0
        %2037 = vmatpush1.msra.mxu0 0.0
        %2038 = vmatprep.subr.mxu0 0.0
        %2039 = vmatpush1.msra.mxu0 0.0
        %2040 = vmatprep.subr.mxu0 0.0
        %2041 = vmatpush1.msra.mxu0 0.0
        %2042 = vmatprep.subr.mxu0 0.0
        %v2043 = vand.u32 %v809, 4294901760
        %v2044 = vsub.f32 %v809, %v2043
        %2045 = vmatpush1.msra.mxu0 %v2044
        %2046 = vmatprep.subr.mxu0 0.0
        %v2047 = vand.u32 %v803, 4294901760
        %v2048 = vsub.f32 %v803, %v2047
        %2049 = vmatpush1.msra.mxu0 %v2048
        %2050 = vmatprep.subr.mxu0 0.0
        %v2051 = vand.u32 %v797, 4294901760
        %v2052 = vsub.f32 %v797, %v2051
        %2053 = vmatpush1.msra.mxu0 %v2052
        %2054 = vmatprep.subr.mxu0 0.0
        %v2055 = vand.u32 %v791, 4294901760
        %v2056 = vsub.f32 %v791, %v2055
        %2057 = vmatpush1.msra.mxu0 %v2056
        %2058 = vmatprep.subr.mxu0 0.0
        %2059 = vmatpush2.msra.mxu0 0.0
        %2060 = vmatprep.subr.mxu0 0.0
        %2061 = vmatpush2.msra.mxu0 0.0
        %2062 = vmatprep.subr.mxu0 0.0
        %2063 = vmatpush2.msra.mxu0 0.0
        %2064 = vmatprep.subr.mxu0 0.0
        %2065 = vmatpush2.msra.mxu0 0.0
        %2066 = vmatprep.subr.mxu0 0.0
        %2067 = vmatpush2.msra.mxu0 0.0
        %2068 = vmatprep.subr.mxu0 0.0
        %2069 = vmatpush2.msra.mxu0 0.0
        %2070 = vmatprep.subr.mxu0 0.0
        %2071 = vmatpush2.msra.mxu0 0.0
        %2072 = vmatprep.subr.mxu0 0.0
        %2073 = vmatpush2.msra.mxu0 0.0
        %2074 = vmatprep.subr.mxu0 0.0
        %2075 = vmatpush2.msra.mxu0 0.0
        %2076 = vmatprep.subr.mxu0 0.0
        %2077 = vmatpush2.msra.mxu0 0.0
        %2078 = vmatprep.subr.mxu0 0.0
        %2079 = vmatpush2.msra.mxu0 0.0
        %2080 = vmatprep.subr.mxu0 0.0
        %2081 = vmatpush2.msra.mxu0 0.0
        %2082 = vmatprep.subr.mxu0 0.0
        %2083 = vmatpush2.msra.mxu0 0.0
        %2084 = vmatprep.subr.mxu0 0.0
        %2085 = vmatpush2.msra.mxu0 0.0
        %2086 = vmatprep.subr.mxu0 0.0
        %2087 = vmatpush2.msra.mxu0 0.0
        %2088 = vmatprep.subr.mxu0 0.0
        %2089 = vmatpush2.msra.mxu0 0.0
        %2090 = vmatprep.mubr.f32.mxu0 0.0
        %v2091 = vand.u32 %v1846, 4294901760
        %v2092 = vsub.f32 %v1846, %v2091
        %2093 = vmatmul.mubr.f32.gmra.mxu0 %v2092
        %v2094 = vpop.f32.mrf.mxu0
        %v2095 = vadd.f32 %v2015, %v2094
        %v2096 = vpop.f32.mrf.mxu0
        %2097 = vdwg.mxu0
        %2098 = vmatprep.subr.mxu0 0.0
        %2099 = vmatpush1.msra.mxu0 0.0
        %2100 = vmatprep.subr.mxu0 0.0
        %2101 = vmatpush1.msra.mxu0 0.0
        %2102 = vmatprep.subr.mxu0 0.0
        %2103 = vmatpush1.msra.mxu0 0.0
        %2104 = vmatprep.subr.mxu0 0.0
        %2105 = vmatpush1.msra.mxu0 0.0
        %2106 = vmatprep.subr.mxu0 0.0
        %2107 = vmatpush1.msra.mxu0 0.0
        %2108 = vmatprep.subr.mxu0 0.0
        %2109 = vmatpush1.msra.mxu0 0.0
        %2110 = vmatprep.subr.mxu0 0.0
        %2111 = vmatpush1.msra.mxu0 0.0
        %2112 = vmatprep.subr.mxu0 0.0
        %2113 = vmatpush1.msra.mxu0 0.0
        %2114 = vmatprep.subr.mxu0 0.0
        %2115 = vmatpush1.msra.mxu0 0.0
        %2116 = vmatprep.subr.mxu0 0.0
        %2117 = vmatpush1.msra.mxu0 0.0
        %2118 = vmatprep.subr.mxu0 0.0
        %2119 = vmatpush1.msra.mxu0 0.0
        %2120 = vmatprep.subr.mxu0 0.0
        %2121 = vmatpush1.msra.mxu0 0.0
        %2122 = vmatprep.subr.mxu0 0.0
        %v2123 = vand.u32 %v809, 4294901760
        %2124 = vmatpush1.msra.mxu0 %v2123
        %2125 = vmatprep.subr.mxu0 0.0
        %v2126 = vand.u32 %v803, 4294901760
        %2127 = vmatpush1.msra.mxu0 %v2126
        %2128 = vmatprep.subr.mxu0 0.0
        %v2129 = vand.u32 %v797, 4294901760
        %2130 = vmatpush1.msra.mxu0 %v2129
        %2131 = vmatprep.subr.mxu0 0.0
        %v2132 = vand.u32 %v791, 4294901760
        %2133 = vmatpush1.msra.mxu0 %v2132
        %2134 = vmatprep.subr.mxu0 0.0
        %2135 = vmatpush2.msra.mxu0 0.0
        %2136 = vmatprep.subr.mxu0 0.0
        %2137 = vmatpush2.msra.mxu0 0.0
        %2138 = vmatprep.subr.mxu0 0.0
        %2139 = vmatpush2.msra.mxu0 0.0
        %2140 = vmatprep.subr.mxu0 0.0
        %2141 = vmatpush2.msra.mxu0 0.0
        %2142 = vmatprep.subr.mxu0 0.0
        %2143 = vmatpush2.msra.mxu0 0.0
        %2144 = vmatprep.subr.mxu0 0.0
        %2145 = vmatpush2.msra.mxu0 0.0
        %2146 = vmatprep.subr.mxu0 0.0
        %2147 = vmatpush2.msra.mxu0 0.0
        %2148 = vmatprep.subr.mxu0 0.0
        %2149 = vmatpush2.msra.mxu0 0.0
        %2150 = vmatprep.subr.mxu0 0.0
        %2151 = vmatpush2.msra.mxu0 0.0
        %2152 = vmatprep.subr.mxu0 0.0
        %2153 = vmatpush2.msra.mxu0 0.0
        %2154 = vmatprep.subr.mxu0 0.0
        %2155 = vmatpush2.msra.mxu0 0.0
        %2156 = vmatprep.subr.mxu0 0.0
        %2157 = vmatpush2.msra.mxu0 0.0
        %2158 = vmatprep.subr.mxu0 0.0
        %2159 = vmatpush2.msra.mxu0 0.0
        %2160 = vmatprep.subr.mxu0 0.0
        %2161 = vmatpush2.msra.mxu0 0.0
        %2162 = vmatprep.subr.mxu0 0.0
        %2163 = vmatpush2.msra.mxu0 0.0
        %2164 = vmatprep.subr.mxu0 0.0
        %2165 = vmatpush2.msra.mxu0 0.0
        %2166 = vmatprep.mubr.f32.mxu0 0.0
        %v2167 = vand.u32 %v1846, 4294901760
        %v2168 = vsub.f32 %v1846, %v2167
        %v2169 = vand.u32 %v2168, 4294901760
        %2170 = vmatmul.mubr.f32.gmra.mxu0 %v2169
        %v2171 = vpop.f32.mrf.mxu0
        %v2172 = vadd.f32 %v2095, %v2171
        %v2173 = vpop.f32.mrf.mxu0
        %2174 = vdwg.mxu0
        %2175 = vmatprep.subr.mxu0 0.0
        %2176 = vmatpush1.msra.mxu0 0.0
        %2177 = vmatprep.subr.mxu0 0.0
        %2178 = vmatpush1.msra.mxu0 0.0
        %2179 = vmatprep.subr.mxu0 0.0
        %2180 = vmatpush1.msra.mxu0 0.0
        %2181 = vmatprep.subr.mxu0 0.0
        %2182 = vmatpush1.msra.mxu0 0.0
        %2183 = vmatprep.subr.mxu0 0.0
        %2184 = vmatpush1.msra.mxu0 0.0
        %2185 = vmatprep.subr.mxu0 0.0
        %2186 = vmatpush1.msra.mxu0 0.0
        %2187 = vmatprep.subr.mxu0 0.0
        %2188 = vmatpush1.msra.mxu0 0.0
        %2189 = vmatprep.subr.mxu0 0.0
        %2190 = vmatpush1.msra.mxu0 0.0
        %2191 = vmatprep.subr.mxu0 0.0
        %2192 = vmatpush1.msra.mxu0 0.0
        %2193 = vmatprep.subr.mxu0 0.0
        %2194 = vmatpush1.msra.mxu0 0.0
        %2195 = vmatprep.subr.mxu0 0.0
        %2196 = vmatpush1.msra.mxu0 0.0
        %2197 = vmatprep.subr.mxu0 0.0
        %2198 = vmatpush1.msra.mxu0 0.0
        %2199 = vmatprep.subr.mxu0 0.0
        %v2200 = vand.u32 %v809, 4294901760
        %v2201 = vsub.f32 %v809, %v2200
        %v2202 = vand.u32 %v2201, 4294901760
        %2203 = vmatpush1.msra.mxu0 %v2202
        %2204 = vmatprep.subr.mxu0 0.0
        %v2205 = vand.u32 %v803, 4294901760
        %v2206 = vsub.f32 %v803, %v2205
        %v2207 = vand.u32 %v2206, 4294901760
        %2208 = vmatpush1.msra.mxu0 %v2207
        %2209 = vmatprep.subr.mxu0 0.0
        %v2210 = vand.u32 %v797, 4294901760
        %v2211 = vsub.f32 %v797, %v2210
        %v2212 = vand.u32 %v2211, 4294901760
        %2213 = vmatpush1.msra.mxu0 %v2212
        %2214 = vmatprep.subr.mxu0 0.0
        %v2215 = vand.u32 %v791, 4294901760
        %v2216 = vsub.f32 %v791, %v2215
        %v2217 = vand.u32 %v2216, 4294901760
        %2218 = vmatpush1.msra.mxu0 %v2217
        %2219 = vmatprep.subr.mxu0 0.0
        %2220 = vmatpush2.msra.mxu0 0.0
        %2221 = vmatprep.subr.mxu0 0.0
        %2222 = vmatpush2.msra.mxu0 0.0
        %2223 = vmatprep.subr.mxu0 0.0
        %2224 = vmatpush2.msra.mxu0 0.0
        %2225 = vmatprep.subr.mxu0 0.0
        %2226 = vmatpush2.msra.mxu0 0.0
        %2227 = vmatprep.subr.mxu0 0.0
        %2228 = vmatpush2.msra.mxu0 0.0
        %2229 = vmatprep.subr.mxu0 0.0
        %2230 = vmatpush2.msra.mxu0 0.0
        %2231 = vmatprep.subr.mxu0 0.0
        %2232 = vmatpush2.msra.mxu0 0.0
        %2233 = vmatprep.subr.mxu0 0.0
        %2234 = vmatpush2.msra.mxu0 0.0
        %2235 = vmatprep.subr.mxu0 0.0
        %2236 = vmatpush2.msra.mxu0 0.0
        %2237 = vmatprep.subr.mxu0 0.0
        %2238 = vmatpush2.msra.mxu0 0.0
        %2239 = vmatprep.subr.mxu0 0.0
        %2240 = vmatpush2.msra.mxu0 0.0
        %2241 = vmatprep.subr.mxu0 0.0
        %2242 = vmatpush2.msra.mxu0 0.0
        %2243 = vmatprep.subr.mxu0 0.0
        %2244 = vmatpush2.msra.mxu0 0.0
        %2245 = vmatprep.subr.mxu0 0.0
        %2246 = vmatpush2.msra.mxu0 0.0
        %2247 = vmatprep.subr.mxu0 0.0
        %2248 = vmatpush2.msra.mxu0 0.0
        %2249 = vmatprep.subr.mxu0 0.0
        %2250 = vmatpush2.msra.mxu0 0.0
        %2251 = vmatprep.mubr.f32.mxu0 0.0
        %v2252 = vand.u32 %v1846, 4294901760
        %2253 = vmatmul.mubr.f32.gmra.mxu0 %v2252
        %v2254 = vpop.f32.mrf.mxu0
        %v2255 = vadd.f32 %v2172, %v2254
        %v2256 = vpop.f32.mrf.mxu0
        %2257 = vdwg.mxu0
        %2258 = vmatprep.subr.mxu0 0.0
        %2259 = vmatpush1.msra.mxu0 0.0
        %2260 = vmatprep.subr.mxu0 0.0
        %2261 = vmatpush1.msra.mxu0 0.0
        %2262 = vmatprep.subr.mxu0 0.0
        %2263 = vmatpush1.msra.mxu0 0.0
        %2264 = vmatprep.subr.mxu0 0.0
        %2265 = vmatpush1.msra.mxu0 0.0
        %2266 = vmatprep.subr.mxu0 0.0
        %2267 = vmatpush1.msra.mxu0 0.0
        %2268 = vmatprep.subr.mxu0 0.0
        %2269 = vmatpush1.msra.mxu0 0.0
        %2270 = vmatprep.subr.mxu0 0.0
        %2271 = vmatpush1.msra.mxu0 0.0
        %2272 = vmatprep.subr.mxu0 0.0
        %2273 = vmatpush1.msra.mxu0 0.0
        %2274 = vmatprep.subr.mxu0 0.0
        %2275 = vmatpush1.msra.mxu0 0.0
        %2276 = vmatprep.subr.mxu0 0.0
        %2277 = vmatpush1.msra.mxu0 0.0
        %2278 = vmatprep.subr.mxu0 0.0
        %2279 = vmatpush1.msra.mxu0 0.0
        %2280 = vmatprep.subr.mxu0 0.0
        %2281 = vmatpush1.msra.mxu0 0.0
        %2282 = vmatprep.subr.mxu0 0.0
        %v2283 = vand.u32 %v809, 4294901760
        %2284 = vmatpush1.msra.mxu0 %v2283
        %2285 = vmatprep.subr.mxu0 0.0
        %v2286 = vand.u32 %v803, 4294901760
        %2287 = vmatpush1.msra.mxu0 %v2286
        %2288 = vmatprep.subr.mxu0 0.0
        %v2289 = vand.u32 %v797, 4294901760
        %2290 = vmatpush1.msra.mxu0 %v2289
        %2291 = vmatprep.subr.mxu0 0.0
        %v2292 = vand.u32 %v791, 4294901760
        %2293 = vmatpush1.msra.mxu0 %v2292
        %2294 = vmatprep.subr.mxu0 0.0
        %2295 = vmatpush2.msra.mxu0 0.0
        %2296 = vmatprep.subr.mxu0 0.0
        %2297 = vmatpush2.msra.mxu0 0.0
        %2298 = vmatprep.subr.mxu0 0.0
        %2299 = vmatpush2.msra.mxu0 0.0
        %2300 = vmatprep.subr.mxu0 0.0
        %2301 = vmatpush2.msra.mxu0 0.0
        %2302 = vmatprep.subr.mxu0 0.0
        %2303 = vmatpush2.msra.mxu0 0.0
        %2304 = vmatprep.subr.mxu0 0.0
        %2305 = vmatpush2.msra.mxu0 0.0
        %2306 = vmatprep.subr.mxu0 0.0
        %2307 = vmatpush2.msra.mxu0 0.0
        %2308 = vmatprep.subr.mxu0 0.0
        %2309 = vmatpush2.msra.mxu0 0.0
        %2310 = vmatprep.subr.mxu0 0.0
        %2311 = vmatpush2.msra.mxu0 0.0
        %2312 = vmatprep.subr.mxu0 0.0
        %2313 = vmatpush2.msra.mxu0 0.0
        %2314 = vmatprep.subr.mxu0 0.0
        %2315 = vmatpush2.msra.mxu0 0.0
        %2316 = vmatprep.subr.mxu0 0.0
        %2317 = vmatpush2.msra.mxu0 0.0
        %2318 = vmatprep.subr.mxu0 0.0
        %2319 = vmatpush2.msra.mxu0 0.0
        %2320 = vmatprep.subr.mxu0 0.0
        %2321 = vmatpush2.msra.mxu0 0.0
        %2322 = vmatprep.subr.mxu0 0.0
        %2323 = vmatpush2.msra.mxu0 0.0
        %2324 = vmatprep.subr.mxu0 0.0
        %2325 = vmatpush2.msra.mxu0 0.0
        %2326 = vmatprep.mubr.f32.mxu0 0.0
        %v2327 = vand.u32 %v1846, 4294901760
        %2328 = vmatmul.mubr.f32.gmra.mxu0 %v2327
        %v2329 = vpop.f32.mrf.mxu0
        %v2330 = vadd.f32 %v2255, %v2329
        %v2331 = vpop.f32.mrf.mxu0
        %2332 = vdwg.mxu0
        %v2333 = vmul.f32 %v2330, %v2330
        %v2334 = vsel %vm822, %v2333, 0.0
        %2335 = vadd.xlane.f32.xlu0 %v2334
        %v2336 = vpop.xlane.xlu0 %2335
        %v2337 = vadd.f32 %v2336, 1.0
        %v2338 = vrcp.pop %v2337
        %v2339 = vmul.f32 %v2336, %v2338
        %v2340 = vadd.f32 %v2336, 1e-09
        %v2341 = vrsqrt.pop %v2340
        %v2342 = vmul.f32 %v2339, %v2341
        %v2343 = vmul.f32 %v2342, %v2330
        %v2345 = vsel %vm185, %v2343, 0
        %2347 = vmatprep.subr.mxu0 0.0
        %2348 = vmatpush1.xpose.msra.mxu0 0.0
        %2349 = vmatprep.subr.mxu0 0.0
        %2350 = vmatpush1.xpose.msra.mxu0 0.0
        %2351 = vmatprep.subr.mxu0 0.0
        %2352 = vmatpush1.xpose.msra.mxu0 0.0
        %2353 = vmatprep.subr.mxu0 0.0
        %2354 = vmatpush1.xpose.msra.mxu0 0.0
        %2355 = vmatprep.subr.mxu0 0.0
        %2356 = vmatpush1.xpose.msra.mxu0 0.0
        %2357 = vmatprep.subr.mxu0 0.0
        %2358 = vmatpush1.xpose.msra.mxu0 0.0
        %2359 = vmatprep.subr.mxu0 0.0
        %2360 = vmatpush1.xpose.msra.mxu0 0.0
        %2361 = vmatprep.subr.mxu0 0.0
        %2362 = vmatpush1.xpose.msra.mxu0 0.0
        %2363 = vmatprep.subr.mxu0 0.0
        %2364 = vmatpush1.xpose.msra.mxu0 0.0
        %2365 = vmatprep.subr.mxu0 0.0
        %2366 = vmatpush1.xpose.msra.mxu0 0.0
        %2367 = vmatprep.subr.mxu0 0.0
        %2368 = vmatpush1.xpose.msra.mxu0 0.0
        %2369 = vmatprep.subr.mxu0 0.0
        %2370 = vmatpush1.xpose.msra.mxu0 0.0
        %2371 = vmatprep.subr.mxu0 0.0
        %v2372 = vand.u32 %v1346, 4294901760
        %2373 = vmatpush1.xpose.msra.mxu0 %v2372
        %2374 = vmatprep.subr.mxu0 0.0
        %v2375 = vand.u32 %v1343, 4294901760
        %2376 = vmatpush1.xpose.msra.mxu0 %v2375
        %2377 = vmatprep.subr.mxu0 0.0
        %v2378 = vand.u32 %v1340, 4294901760
        %2379 = vmatpush1.xpose.msra.mxu0 %v2378
        %2380 = vmatprep.subr.mxu0 0.0
        %v2381 = vand.u32 %v1337, 4294901760
        %2382 = vmatpush1.xpose.msra.mxu0 %v2381
        %2383 = vmatprep.subr.mxu0 0.0
        %2384 = vmatpush2.xpose.msra.mxu0 0.0
        %2385 = vmatprep.subr.mxu0 0.0
        %2386 = vmatpush2.xpose.msra.mxu0 0.0
        %2387 = vmatprep.subr.mxu0 0.0
        %2388 = vmatpush2.xpose.msra.mxu0 0.0
        %2389 = vmatprep.subr.mxu0 0.0
        %2390 = vmatpush2.xpose.msra.mxu0 0.0
        %2391 = vmatprep.subr.mxu0 0.0
        %2392 = vmatpush2.xpose.msra.mxu0 0.0
        %2393 = vmatprep.subr.mxu0 0.0
        %2394 = vmatpush2.xpose.msra.mxu0 0.0
        %2395 = vmatprep.subr.mxu0 0.0
        %2396 = vmatpush2.xpose.msra.mxu0 0.0
        %2397 = vmatprep.subr.mxu0 0.0
        %2398 = vmatpush2.xpose.msra.mxu0 0.0
        %2399 = vmatprep.subr.mxu0 0.0
        %2400 = vmatpush2.xpose.msra.mxu0 0.0
        %2401 = vmatprep.subr.mxu0 0.0
        %2402 = vmatpush2.xpose.msra.mxu0 0.0
        %2403 = vmatprep.subr.mxu0 0.0
        %2404 = vmatpush2.xpose.msra.mxu0 0.0
        %2405 = vmatprep.subr.mxu0 0.0
        %2406 = vmatpush2.xpose.msra.mxu0 0.0
        %2407 = vmatprep.subr.mxu0 0.0
        %2408 = vmatpush2.xpose.msra.mxu0 0.0
        %2409 = vmatprep.subr.mxu0 0.0
        %2410 = vmatpush2.xpose.msra.mxu0 0.0
        %2411 = vmatprep.subr.mxu0 0.0
        %2412 = vmatpush2.xpose.msra.mxu0 0.0
        %2413 = vmatprep.subr.mxu0 0.0
        %2414 = vmatpush2.xpose.msra.mxu0 0.0
        %2415 = vmatprep.mubr.f32.mxu0 0.0
        %v2416 = vand.u32 %v2345, 4294901760
        %v2417 = vsub.f32 %v2345, %v2416
        %v2418 = vand.u32 %v2417, 4294901760
        %v2419 = vsub.f32 %v2417, %v2418
        %v2420 = vand.u32 %v2419, 4294901760
        %2421 = vmatmul.mubr.f32.gmra.mxu0 %v2420
        %v2422 = vpop.f32.mrf.mxu0
        %v2423 = vadd.f32 0.0, %v2422
        %v2424 = vpop.f32.mrf.mxu0
        %2425 = vdwg.mxu0
        %2426 = vmatprep.subr.mxu0 0.0
        %2427 = vmatpush1.xpose.msra.mxu0 0.0
        %2428 = vmatprep.subr.mxu0 0.0
        %2429 = vmatpush1.xpose.msra.mxu0 0.0
        %2430 = vmatprep.subr.mxu0 0.0
        %2431 = vmatpush1.xpose.msra.mxu0 0.0
        %2432 = vmatprep.subr.mxu0 0.0
        %2433 = vmatpush1.xpose.msra.mxu0 0.0
        %2434 = vmatprep.subr.mxu0 0.0
        %2435 = vmatpush1.xpose.msra.mxu0 0.0
        %2436 = vmatprep.subr.mxu0 0.0
        %2437 = vmatpush1.xpose.msra.mxu0 0.0
        %2438 = vmatprep.subr.mxu0 0.0
        %2439 = vmatpush1.xpose.msra.mxu0 0.0
        %2440 = vmatprep.subr.mxu0 0.0
        %2441 = vmatpush1.xpose.msra.mxu0 0.0
        %2442 = vmatprep.subr.mxu0 0.0
        %2443 = vmatpush1.xpose.msra.mxu0 0.0
        %2444 = vmatprep.subr.mxu0 0.0
        %2445 = vmatpush1.xpose.msra.mxu0 0.0
        %2446 = vmatprep.subr.mxu0 0.0
        %2447 = vmatpush1.xpose.msra.mxu0 0.0
        %2448 = vmatprep.subr.mxu0 0.0
        %2449 = vmatpush1.xpose.msra.mxu0 0.0
        %2450 = vmatprep.subr.mxu0 0.0
        %v2451 = vand.u32 %v1346, 4294901760
        %v2452 = vsub.f32 %v1346, %v2451
        %v2453 = vand.u32 %v2452, 4294901760
        %v2454 = vsub.f32 %v2452, %v2453
        %v2455 = vand.u32 %v2454, 4294901760
        %2456 = vmatpush1.xpose.msra.mxu0 %v2455
        %2457 = vmatprep.subr.mxu0 0.0
        %v2458 = vand.u32 %v1343, 4294901760
        %v2459 = vsub.f32 %v1343, %v2458
        %v2460 = vand.u32 %v2459, 4294901760
        %v2461 = vsub.f32 %v2459, %v2460
        %v2462 = vand.u32 %v2461, 4294901760
        %2463 = vmatpush1.xpose.msra.mxu0 %v2462
        %2464 = vmatprep.subr.mxu0 0.0
        %v2465 = vand.u32 %v1340, 4294901760
        %v2466 = vsub.f32 %v1340, %v2465
        %v2467 = vand.u32 %v2466, 4294901760
        %v2468 = vsub.f32 %v2466, %v2467
        %v2469 = vand.u32 %v2468, 4294901760
        %2470 = vmatpush1.xpose.msra.mxu0 %v2469
        %2471 = vmatprep.subr.mxu0 0.0
        %v2472 = vand.u32 %v1337, 4294901760
        %v2473 = vsub.f32 %v1337, %v2472
        %v2474 = vand.u32 %v2473, 4294901760
        %v2475 = vsub.f32 %v2473, %v2474
        %v2476 = vand.u32 %v2475, 4294901760
        %2477 = vmatpush1.xpose.msra.mxu0 %v2476
        %2478 = vmatprep.subr.mxu0 0.0
        %2479 = vmatpush2.xpose.msra.mxu0 0.0
        %2480 = vmatprep.subr.mxu0 0.0
        %2481 = vmatpush2.xpose.msra.mxu0 0.0
        %2482 = vmatprep.subr.mxu0 0.0
        %2483 = vmatpush2.xpose.msra.mxu0 0.0
        %2484 = vmatprep.subr.mxu0 0.0
        %2485 = vmatpush2.xpose.msra.mxu0 0.0
        %2486 = vmatprep.subr.mxu0 0.0
        %2487 = vmatpush2.xpose.msra.mxu0 0.0
        %2488 = vmatprep.subr.mxu0 0.0
        %2489 = vmatpush2.xpose.msra.mxu0 0.0
        %2490 = vmatprep.subr.mxu0 0.0
        %2491 = vmatpush2.xpose.msra.mxu0 0.0
        %2492 = vmatprep.subr.mxu0 0.0
        %2493 = vmatpush2.xpose.msra.mxu0 0.0
        %2494 = vmatprep.subr.mxu0 0.0
        %2495 = vmatpush2.xpose.msra.mxu0 0.0
        %2496 = vmatprep.subr.mxu0 0.0
        %2497 = vmatpush2.xpose.msra.mxu0 0.0
        %2498 = vmatprep.subr.mxu0 0.0
        %2499 = vmatpush2.xpose.msra.mxu0 0.0
        %2500 = vmatprep.subr.mxu0 0.0
        %2501 = vmatpush2.xpose.msra.mxu0 0.0
        %2502 = vmatprep.subr.mxu0 0.0
        %2503 = vmatpush2.xpose.msra.mxu0 0.0
        %2504 = vmatprep.subr.mxu0 0.0
        %2505 = vmatpush2.xpose.msra.mxu0 0.0
        %2506 = vmatprep.subr.mxu0 0.0
        %2507 = vmatpush2.xpose.msra.mxu0 0.0
        %2508 = vmatprep.subr.mxu0 0.0
        %2509 = vmatpush2.xpose.msra.mxu0 0.0
        %2510 = vmatprep.mubr.f32.mxu0 0.0
        %v2511 = vand.u32 %v2345, 4294901760
        %2512 = vmatmul.mubr.f32.gmra.mxu0 %v2511
        %v2513 = vpop.f32.mrf.mxu0
        %v2514 = vadd.f32 %v2423, %v2513
        %v2515 = vpop.f32.mrf.mxu0
        %2516 = vdwg.mxu0
        %2517 = vmatprep.subr.mxu0 0.0
        %2518 = vmatpush1.xpose.msra.mxu0 0.0
        %2519 = vmatprep.subr.mxu0 0.0
        %2520 = vmatpush1.xpose.msra.mxu0 0.0
        %2521 = vmatprep.subr.mxu0 0.0
        %2522 = vmatpush1.xpose.msra.mxu0 0.0
        %2523 = vmatprep.subr.mxu0 0.0
        %2524 = vmatpush1.xpose.msra.mxu0 0.0
        %2525 = vmatprep.subr.mxu0 0.0
        %2526 = vmatpush1.xpose.msra.mxu0 0.0
        %2527 = vmatprep.subr.mxu0 0.0
        %2528 = vmatpush1.xpose.msra.mxu0 0.0
        %2529 = vmatprep.subr.mxu0 0.0
        %2530 = vmatpush1.xpose.msra.mxu0 0.0
        %2531 = vmatprep.subr.mxu0 0.0
        %2532 = vmatpush1.xpose.msra.mxu0 0.0
        %2533 = vmatprep.subr.mxu0 0.0
        %2534 = vmatpush1.xpose.msra.mxu0 0.0
        %2535 = vmatprep.subr.mxu0 0.0
        %2536 = vmatpush1.xpose.msra.mxu0 0.0
        %2537 = vmatprep.subr.mxu0 0.0
        %2538 = vmatpush1.xpose.msra.mxu0 0.0
        %2539 = vmatprep.subr.mxu0 0.0
        %2540 = vmatpush1.xpose.msra.mxu0 0.0
        %2541 = vmatprep.subr.mxu0 0.0
        %v2542 = vand.u32 %v1346, 4294901760
        %v2543 = vsub.f32 %v1346, %v2542
        %2544 = vmatpush1.xpose.msra.mxu0 %v2543
        %2545 = vmatprep.subr.mxu0 0.0
        %v2546 = vand.u32 %v1343, 4294901760
        %v2547 = vsub.f32 %v1343, %v2546
        %2548 = vmatpush1.xpose.msra.mxu0 %v2547
        %2549 = vmatprep.subr.mxu0 0.0
        %v2550 = vand.u32 %v1340, 4294901760
        %v2551 = vsub.f32 %v1340, %v2550
        %2552 = vmatpush1.xpose.msra.mxu0 %v2551
        %2553 = vmatprep.subr.mxu0 0.0
        %v2554 = vand.u32 %v1337, 4294901760
        %v2555 = vsub.f32 %v1337, %v2554
        %2556 = vmatpush1.xpose.msra.mxu0 %v2555
        %2557 = vmatprep.subr.mxu0 0.0
        %2558 = vmatpush2.xpose.msra.mxu0 0.0
        %2559 = vmatprep.subr.mxu0 0.0
        %2560 = vmatpush2.xpose.msra.mxu0 0.0
        %2561 = vmatprep.subr.mxu0 0.0
        %2562 = vmatpush2.xpose.msra.mxu0 0.0
        %2563 = vmatprep.subr.mxu0 0.0
        %2564 = vmatpush2.xpose.msra.mxu0 0.0
        %2565 = vmatprep.subr.mxu0 0.0
        %2566 = vmatpush2.xpose.msra.mxu0 0.0
        %2567 = vmatprep.subr.mxu0 0.0
        %2568 = vmatpush2.xpose.msra.mxu0 0.0
        %2569 = vmatprep.subr.mxu0 0.0
        %2570 = vmatpush2.xpose.msra.mxu0 0.0
        %2571 = vmatprep.subr.mxu0 0.0
        %2572 = vmatpush2.xpose.msra.mxu0 0.0
        %2573 = vmatprep.subr.mxu0 0.0
        %2574 = vmatpush2.xpose.msra.mxu0 0.0
        %2575 = vmatprep.subr.mxu0 0.0
        %2576 = vmatpush2.xpose.msra.mxu0 0.0
        %2577 = vmatprep.subr.mxu0 0.0
        %2578 = vmatpush2.xpose.msra.mxu0 0.0
        %2579 = vmatprep.subr.mxu0 0.0
        %2580 = vmatpush2.xpose.msra.mxu0 0.0
        %2581 = vmatprep.subr.mxu0 0.0
        %2582 = vmatpush2.xpose.msra.mxu0 0.0
        %2583 = vmatprep.subr.mxu0 0.0
        %2584 = vmatpush2.xpose.msra.mxu0 0.0
        %2585 = vmatprep.subr.mxu0 0.0
        %2586 = vmatpush2.xpose.msra.mxu0 0.0
        %2587 = vmatprep.subr.mxu0 0.0
        %2588 = vmatpush2.xpose.msra.mxu0 0.0
        %2589 = vmatprep.mubr.f32.mxu0 0.0
        %v2590 = vand.u32 %v2345, 4294901760
        %v2591 = vsub.f32 %v2345, %v2590
        %2592 = vmatmul.mubr.f32.gmra.mxu0 %v2591
        %v2593 = vpop.f32.mrf.mxu0
        %v2594 = vadd.f32 %v2514, %v2593
        %v2595 = vpop.f32.mrf.mxu0
        %2596 = vdwg.mxu0
        %2597 = vmatprep.subr.mxu0 0.0
        %2598 = vmatpush1.xpose.msra.mxu0 0.0
        %2599 = vmatprep.subr.mxu0 0.0
        %2600 = vmatpush1.xpose.msra.mxu0 0.0
        %2601 = vmatprep.subr.mxu0 0.0
        %2602 = vmatpush1.xpose.msra.mxu0 0.0
        %2603 = vmatprep.subr.mxu0 0.0
        %2604 = vmatpush1.xpose.msra.mxu0 0.0
        %2605 = vmatprep.subr.mxu0 0.0
        %2606 = vmatpush1.xpose.msra.mxu0 0.0
        %2607 = vmatprep.subr.mxu0 0.0
        %2608 = vmatpush1.xpose.msra.mxu0 0.0
        %2609 = vmatprep.subr.mxu0 0.0
        %2610 = vmatpush1.xpose.msra.mxu0 0.0
        %2611 = vmatprep.subr.mxu0 0.0
        %2612 = vmatpush1.xpose.msra.mxu0 0.0
        %2613 = vmatprep.subr.mxu0 0.0
        %2614 = vmatpush1.xpose.msra.mxu0 0.0
        %2615 = vmatprep.subr.mxu0 0.0
        %2616 = vmatpush1.xpose.msra.mxu0 0.0
        %2617 = vmatprep.subr.mxu0 0.0
        %2618 = vmatpush1.xpose.msra.mxu0 0.0
        %2619 = vmatprep.subr.mxu0 0.0
        %2620 = vmatpush1.xpose.msra.mxu0 0.0
        %2621 = vmatprep.subr.mxu0 0.0
        %v2622 = vand.u32 %v1346, 4294901760
        %2623 = vmatpush1.xpose.msra.mxu0 %v2622
        %2624 = vmatprep.subr.mxu0 0.0
        %v2625 = vand.u32 %v1343, 4294901760
        %2626 = vmatpush1.xpose.msra.mxu0 %v2625
        %2627 = vmatprep.subr.mxu0 0.0
        %v2628 = vand.u32 %v1340, 4294901760
        %2629 = vmatpush1.xpose.msra.mxu0 %v2628
        %2630 = vmatprep.subr.mxu0 0.0
        %v2631 = vand.u32 %v1337, 4294901760
        %2632 = vmatpush1.xpose.msra.mxu0 %v2631
        %2633 = vmatprep.subr.mxu0 0.0
        %2634 = vmatpush2.xpose.msra.mxu0 0.0
        %2635 = vmatprep.subr.mxu0 0.0
        %2636 = vmatpush2.xpose.msra.mxu0 0.0
        %2637 = vmatprep.subr.mxu0 0.0
        %2638 = vmatpush2.xpose.msra.mxu0 0.0
        %2639 = vmatprep.subr.mxu0 0.0
        %2640 = vmatpush2.xpose.msra.mxu0 0.0
        %2641 = vmatprep.subr.mxu0 0.0
        %2642 = vmatpush2.xpose.msra.mxu0 0.0
        %2643 = vmatprep.subr.mxu0 0.0
        %2644 = vmatpush2.xpose.msra.mxu0 0.0
        %2645 = vmatprep.subr.mxu0 0.0
        %2646 = vmatpush2.xpose.msra.mxu0 0.0
        %2647 = vmatprep.subr.mxu0 0.0
        %2648 = vmatpush2.xpose.msra.mxu0 0.0
        %2649 = vmatprep.subr.mxu0 0.0
        %2650 = vmatpush2.xpose.msra.mxu0 0.0
        %2651 = vmatprep.subr.mxu0 0.0
        %2652 = vmatpush2.xpose.msra.mxu0 0.0
        %2653 = vmatprep.subr.mxu0 0.0
        %2654 = vmatpush2.xpose.msra.mxu0 0.0
        %2655 = vmatprep.subr.mxu0 0.0
        %2656 = vmatpush2.xpose.msra.mxu0 0.0
        %2657 = vmatprep.subr.mxu0 0.0
        %2658 = vmatpush2.xpose.msra.mxu0 0.0
        %2659 = vmatprep.subr.mxu0 0.0
        %2660 = vmatpush2.xpose.msra.mxu0 0.0
        %2661 = vmatprep.subr.mxu0 0.0
        %2662 = vmatpush2.xpose.msra.mxu0 0.0
        %2663 = vmatprep.subr.mxu0 0.0
        %2664 = vmatpush2.xpose.msra.mxu0 0.0
        %2665 = vmatprep.mubr.f32.mxu0 0.0
        %v2666 = vand.u32 %v2345, 4294901760
        %v2667 = vsub.f32 %v2345, %v2666
        %v2668 = vand.u32 %v2667, 4294901760
        %2669 = vmatmul.mubr.f32.gmra.mxu0 %v2668
        %v2670 = vpop.f32.mrf.mxu0
        %v2671 = vadd.f32 %v2594, %v2670
        %v2672 = vpop.f32.mrf.mxu0
        %2673 = vdwg.mxu0
        %2674 = vmatprep.subr.mxu0 0.0
        %2675 = vmatpush1.xpose.msra.mxu0 0.0
        %2676 = vmatprep.subr.mxu0 0.0
        %2677 = vmatpush1.xpose.msra.mxu0 0.0
        %2678 = vmatprep.subr.mxu0 0.0
        %2679 = vmatpush1.xpose.msra.mxu0 0.0
        %2680 = vmatprep.subr.mxu0 0.0
        %2681 = vmatpush1.xpose.msra.mxu0 0.0
        %2682 = vmatprep.subr.mxu0 0.0
        %2683 = vmatpush1.xpose.msra.mxu0 0.0
        %2684 = vmatprep.subr.mxu0 0.0
        %2685 = vmatpush1.xpose.msra.mxu0 0.0
        %2686 = vmatprep.subr.mxu0 0.0
        %2687 = vmatpush1.xpose.msra.mxu0 0.0
        %2688 = vmatprep.subr.mxu0 0.0
        %2689 = vmatpush1.xpose.msra.mxu0 0.0
        %2690 = vmatprep.subr.mxu0 0.0
        %2691 = vmatpush1.xpose.msra.mxu0 0.0
        %2692 = vmatprep.subr.mxu0 0.0
        %2693 = vmatpush1.xpose.msra.mxu0 0.0
        %2694 = vmatprep.subr.mxu0 0.0
        %2695 = vmatpush1.xpose.msra.mxu0 0.0
        %2696 = vmatprep.subr.mxu0 0.0
        %2697 = vmatpush1.xpose.msra.mxu0 0.0
        %2698 = vmatprep.subr.mxu0 0.0
        %v2699 = vand.u32 %v1346, 4294901760
        %v2700 = vsub.f32 %v1346, %v2699
        %v2701 = vand.u32 %v2700, 4294901760
        %2702 = vmatpush1.xpose.msra.mxu0 %v2701
        %2703 = vmatprep.subr.mxu0 0.0
        %v2704 = vand.u32 %v1343, 4294901760
        %v2705 = vsub.f32 %v1343, %v2704
        %v2706 = vand.u32 %v2705, 4294901760
        %2707 = vmatpush1.xpose.msra.mxu0 %v2706
        %2708 = vmatprep.subr.mxu0 0.0
        %v2709 = vand.u32 %v1340, 4294901760
        %v2710 = vsub.f32 %v1340, %v2709
        %v2711 = vand.u32 %v2710, 4294901760
        %2712 = vmatpush1.xpose.msra.mxu0 %v2711
        %2713 = vmatprep.subr.mxu0 0.0
        %v2714 = vand.u32 %v1337, 4294901760
        %v2715 = vsub.f32 %v1337, %v2714
        %v2716 = vand.u32 %v2715, 4294901760
        %2717 = vmatpush1.xpose.msra.mxu0 %v2716
        %2718 = vmatprep.subr.mxu0 0.0
        %2719 = vmatpush2.xpose.msra.mxu0 0.0
        %2720 = vmatprep.subr.mxu0 0.0
        %2721 = vmatpush2.xpose.msra.mxu0 0.0
        %2722 = vmatprep.subr.mxu0 0.0
        %2723 = vmatpush2.xpose.msra.mxu0 0.0
        %2724 = vmatprep.subr.mxu0 0.0
        %2725 = vmatpush2.xpose.msra.mxu0 0.0
        %2726 = vmatprep.subr.mxu0 0.0
        %2727 = vmatpush2.xpose.msra.mxu0 0.0
        %2728 = vmatprep.subr.mxu0 0.0
        %2729 = vmatpush2.xpose.msra.mxu0 0.0
        %2730 = vmatprep.subr.mxu0 0.0
        %2731 = vmatpush2.xpose.msra.mxu0 0.0
        %2732 = vmatprep.subr.mxu0 0.0
        %2733 = vmatpush2.xpose.msra.mxu0 0.0
        %2734 = vmatprep.subr.mxu0 0.0
        %2735 = vmatpush2.xpose.msra.mxu0 0.0
        %2736 = vmatprep.subr.mxu0 0.0
        %2737 = vmatpush2.xpose.msra.mxu0 0.0
        %2738 = vmatprep.subr.mxu0 0.0
        %2739 = vmatpush2.xpose.msra.mxu0 0.0
        %2740 = vmatprep.subr.mxu0 0.0
        %2741 = vmatpush2.xpose.msra.mxu0 0.0
        %2742 = vmatprep.subr.mxu0 0.0
        %2743 = vmatpush2.xpose.msra.mxu0 0.0
        %2744 = vmatprep.subr.mxu0 0.0
        %2745 = vmatpush2.xpose.msra.mxu0 0.0
        %2746 = vmatprep.subr.mxu0 0.0
        %2747 = vmatpush2.xpose.msra.mxu0 0.0
        %2748 = vmatprep.subr.mxu0 0.0
        %2749 = vmatpush2.xpose.msra.mxu0 0.0
        %2750 = vmatprep.mubr.f32.mxu0 0.0
        %v2751 = vand.u32 %v2345, 4294901760
        %2752 = vmatmul.mubr.f32.gmra.mxu0 %v2751
        %v2753 = vpop.f32.mrf.mxu0
        %v2754 = vadd.f32 %v2671, %v2753
        %v2755 = vpop.f32.mrf.mxu0
        %2756 = vdwg.mxu0
        %2757 = vmatprep.subr.mxu0 0.0
        %2758 = vmatpush1.xpose.msra.mxu0 0.0
        %2759 = vmatprep.subr.mxu0 0.0
        %2760 = vmatpush1.xpose.msra.mxu0 0.0
        %2761 = vmatprep.subr.mxu0 0.0
        %2762 = vmatpush1.xpose.msra.mxu0 0.0
        %2763 = vmatprep.subr.mxu0 0.0
        %2764 = vmatpush1.xpose.msra.mxu0 0.0
        %2765 = vmatprep.subr.mxu0 0.0
        %2766 = vmatpush1.xpose.msra.mxu0 0.0
        %2767 = vmatprep.subr.mxu0 0.0
        %2768 = vmatpush1.xpose.msra.mxu0 0.0
        %2769 = vmatprep.subr.mxu0 0.0
        %2770 = vmatpush1.xpose.msra.mxu0 0.0
        %2771 = vmatprep.subr.mxu0 0.0
        %2772 = vmatpush1.xpose.msra.mxu0 0.0
        %2773 = vmatprep.subr.mxu0 0.0
        %2774 = vmatpush1.xpose.msra.mxu0 0.0
        %2775 = vmatprep.subr.mxu0 0.0
        %2776 = vmatpush1.xpose.msra.mxu0 0.0
        %2777 = vmatprep.subr.mxu0 0.0
        %2778 = vmatpush1.xpose.msra.mxu0 0.0
        %2779 = vmatprep.subr.mxu0 0.0
        %2780 = vmatpush1.xpose.msra.mxu0 0.0
        %2781 = vmatprep.subr.mxu0 0.0
        %v2782 = vand.u32 %v1346, 4294901760
        %2783 = vmatpush1.xpose.msra.mxu0 %v2782
        %2784 = vmatprep.subr.mxu0 0.0
        %v2785 = vand.u32 %v1343, 4294901760
        %2786 = vmatpush1.xpose.msra.mxu0 %v2785
        %2787 = vmatprep.subr.mxu0 0.0
        %v2788 = vand.u32 %v1340, 4294901760
        %2789 = vmatpush1.xpose.msra.mxu0 %v2788
        %2790 = vmatprep.subr.mxu0 0.0
        %v2791 = vand.u32 %v1337, 4294901760
        %2792 = vmatpush1.xpose.msra.mxu0 %v2791
        %2793 = vmatprep.subr.mxu0 0.0
        %2794 = vmatpush2.xpose.msra.mxu0 0.0
        %2795 = vmatprep.subr.mxu0 0.0
        %2796 = vmatpush2.xpose.msra.mxu0 0.0
        %2797 = vmatprep.subr.mxu0 0.0
        %2798 = vmatpush2.xpose.msra.mxu0 0.0
        %2799 = vmatprep.subr.mxu0 0.0
        %2800 = vmatpush2.xpose.msra.mxu0 0.0
        %2801 = vmatprep.subr.mxu0 0.0
        %2802 = vmatpush2.xpose.msra.mxu0 0.0
        %2803 = vmatprep.subr.mxu0 0.0
        %2804 = vmatpush2.xpose.msra.mxu0 0.0
        %2805 = vmatprep.subr.mxu0 0.0
        %2806 = vmatpush2.xpose.msra.mxu0 0.0
        %2807 = vmatprep.subr.mxu0 0.0
        %2808 = vmatpush2.xpose.msra.mxu0 0.0
        %2809 = vmatprep.subr.mxu0 0.0
        %2810 = vmatpush2.xpose.msra.mxu0 0.0
        %2811 = vmatprep.subr.mxu0 0.0
        %2812 = vmatpush2.xpose.msra.mxu0 0.0
        %2813 = vmatprep.subr.mxu0 0.0
        %2814 = vmatpush2.xpose.msra.mxu0 0.0
        %2815 = vmatprep.subr.mxu0 0.0
        %2816 = vmatpush2.xpose.msra.mxu0 0.0
        %2817 = vmatprep.subr.mxu0 0.0
        %2818 = vmatpush2.xpose.msra.mxu0 0.0
        %2819 = vmatprep.subr.mxu0 0.0
        %2820 = vmatpush2.xpose.msra.mxu0 0.0
        %2821 = vmatprep.subr.mxu0 0.0
        %2822 = vmatpush2.xpose.msra.mxu0 0.0
        %2823 = vmatprep.subr.mxu0 0.0
        %2824 = vmatpush2.xpose.msra.mxu0 0.0
        %2825 = vmatprep.mubr.f32.mxu0 0.0
        %v2826 = vand.u32 %v2345, 4294901760
        %2827 = vmatmul.mubr.f32.gmra.mxu0 %v2826
        %v2828 = vpop.f32.mrf.mxu0
        %v2829 = vadd.f32 %v2754, %v2828
        %v2830 = vpop.f32.mrf.mxu0
        %2831 = vdwg.mxu0
        %v2832 = vadd.f32 %v1833, %v2829
        %v2833 = vsel %vm822, %v2832, -inf
        %2834 = vmax.xlane.f32.xlu0 %v2833
        %v2835 = vpop.xlane.xlu0 %2834
        %v2836 = vsub.f32 %v2832, %v2835
        %v2837 = vmul.f32 %v2836, 1.442695
        %v2838 = vpow.pop %v2837
        %v2839 = vsel %vm822, %v2838, 0.0
        %2840 = vadd.xlane.f32.xlu0 %v2839
        %v2841 = vpop.xlane.xlu0 %2840
        %v2842 = vrcp.pop %v2841
        %v2843 = vmul.f32 %v2838, %v2842
        %v2845 = vsel %vm185, %v2843, 0
        %2847 = vmatprep.subr.mxu0 0.0
        %2848 = vmatpush1.msra.mxu0 0.0
        %2849 = vmatprep.subr.mxu0 0.0
        %2850 = vmatpush1.msra.mxu0 0.0
        %2851 = vmatprep.subr.mxu0 0.0
        %2852 = vmatpush1.msra.mxu0 0.0
        %2853 = vmatprep.subr.mxu0 0.0
        %2854 = vmatpush1.msra.mxu0 0.0
        %2855 = vmatprep.subr.mxu0 0.0
        %2856 = vmatpush1.msra.mxu0 0.0
        %2857 = vmatprep.subr.mxu0 0.0
        %2858 = vmatpush1.msra.mxu0 0.0
        %2859 = vmatprep.subr.mxu0 0.0
        %2860 = vmatpush1.msra.mxu0 0.0
        %2861 = vmatprep.subr.mxu0 0.0
        %2862 = vmatpush1.msra.mxu0 0.0
        %2863 = vmatprep.subr.mxu0 0.0
        %2864 = vmatpush1.msra.mxu0 0.0
        %2865 = vmatprep.subr.mxu0 0.0
        %2866 = vmatpush1.msra.mxu0 0.0
        %2867 = vmatprep.subr.mxu0 0.0
        %2868 = vmatpush1.msra.mxu0 0.0
        %2869 = vmatprep.subr.mxu0 0.0
        %2870 = vmatpush1.msra.mxu0 0.0
        %2871 = vmatprep.subr.mxu0 0.0
        %v2872 = vand.u32 %v809, 4294901760
        %2873 = vmatpush1.msra.mxu0 %v2872
        %2874 = vmatprep.subr.mxu0 0.0
        %v2875 = vand.u32 %v803, 4294901760
        %2876 = vmatpush1.msra.mxu0 %v2875
        %2877 = vmatprep.subr.mxu0 0.0
        %v2878 = vand.u32 %v797, 4294901760
        %2879 = vmatpush1.msra.mxu0 %v2878
        %2880 = vmatprep.subr.mxu0 0.0
        %v2881 = vand.u32 %v791, 4294901760
        %2882 = vmatpush1.msra.mxu0 %v2881
        %2883 = vmatprep.subr.mxu0 0.0
        %2884 = vmatpush2.msra.mxu0 0.0
        %2885 = vmatprep.subr.mxu0 0.0
        %2886 = vmatpush2.msra.mxu0 0.0
        %2887 = vmatprep.subr.mxu0 0.0
        %2888 = vmatpush2.msra.mxu0 0.0
        %2889 = vmatprep.subr.mxu0 0.0
        %2890 = vmatpush2.msra.mxu0 0.0
        %2891 = vmatprep.subr.mxu0 0.0
        %2892 = vmatpush2.msra.mxu0 0.0
        %2893 = vmatprep.subr.mxu0 0.0
        %2894 = vmatpush2.msra.mxu0 0.0
        %2895 = vmatprep.subr.mxu0 0.0
        %2896 = vmatpush2.msra.mxu0 0.0
        %2897 = vmatprep.subr.mxu0 0.0
        %2898 = vmatpush2.msra.mxu0 0.0
        %2899 = vmatprep.subr.mxu0 0.0
        %2900 = vmatpush2.msra.mxu0 0.0
        %2901 = vmatprep.subr.mxu0 0.0
        %2902 = vmatpush2.msra.mxu0 0.0
        %2903 = vmatprep.subr.mxu0 0.0
        %2904 = vmatpush2.msra.mxu0 0.0
        %2905 = vmatprep.subr.mxu0 0.0
        %2906 = vmatpush2.msra.mxu0 0.0
        %2907 = vmatprep.subr.mxu0 0.0
        %2908 = vmatpush2.msra.mxu0 0.0
        %2909 = vmatprep.subr.mxu0 0.0
        %2910 = vmatpush2.msra.mxu0 0.0
        %2911 = vmatprep.subr.mxu0 0.0
        %2912 = vmatpush2.msra.mxu0 0.0
        %2913 = vmatprep.subr.mxu0 0.0
        %2914 = vmatpush2.msra.mxu0 0.0
        %2915 = vmatprep.mubr.f32.mxu0 0.0
        %v2916 = vand.u32 %v2845, 4294901760
        %v2917 = vsub.f32 %v2845, %v2916
        %v2918 = vand.u32 %v2917, 4294901760
        %v2919 = vsub.f32 %v2917, %v2918
        %v2920 = vand.u32 %v2919, 4294901760
        %2921 = vmatmul.mubr.f32.gmra.mxu0 %v2920
        %v2922 = vpop.f32.mrf.mxu0
        %v2923 = vadd.f32 0.0, %v2922
        %v2924 = vpop.f32.mrf.mxu0
        %2925 = vdwg.mxu0
        %2926 = vmatprep.subr.mxu0 0.0
        %2927 = vmatpush1.msra.mxu0 0.0
        %2928 = vmatprep.subr.mxu0 0.0
        %2929 = vmatpush1.msra.mxu0 0.0
        %2930 = vmatprep.subr.mxu0 0.0
        %2931 = vmatpush1.msra.mxu0 0.0
        %2932 = vmatprep.subr.mxu0 0.0
        %2933 = vmatpush1.msra.mxu0 0.0
        %2934 = vmatprep.subr.mxu0 0.0
        %2935 = vmatpush1.msra.mxu0 0.0
        %2936 = vmatprep.subr.mxu0 0.0
        %2937 = vmatpush1.msra.mxu0 0.0
        %2938 = vmatprep.subr.mxu0 0.0
        %2939 = vmatpush1.msra.mxu0 0.0
        %2940 = vmatprep.subr.mxu0 0.0
        %2941 = vmatpush1.msra.mxu0 0.0
        %2942 = vmatprep.subr.mxu0 0.0
        %2943 = vmatpush1.msra.mxu0 0.0
        %2944 = vmatprep.subr.mxu0 0.0
        %2945 = vmatpush1.msra.mxu0 0.0
        %2946 = vmatprep.subr.mxu0 0.0
        %2947 = vmatpush1.msra.mxu0 0.0
        %2948 = vmatprep.subr.mxu0 0.0
        %2949 = vmatpush1.msra.mxu0 0.0
        %2950 = vmatprep.subr.mxu0 0.0
        %v2951 = vand.u32 %v809, 4294901760
        %v2952 = vsub.f32 %v809, %v2951
        %v2953 = vand.u32 %v2952, 4294901760
        %v2954 = vsub.f32 %v2952, %v2953
        %v2955 = vand.u32 %v2954, 4294901760
        %2956 = vmatpush1.msra.mxu0 %v2955
        %2957 = vmatprep.subr.mxu0 0.0
        %v2958 = vand.u32 %v803, 4294901760
        %v2959 = vsub.f32 %v803, %v2958
        %v2960 = vand.u32 %v2959, 4294901760
        %v2961 = vsub.f32 %v2959, %v2960
        %v2962 = vand.u32 %v2961, 4294901760
        %2963 = vmatpush1.msra.mxu0 %v2962
        %2964 = vmatprep.subr.mxu0 0.0
        %v2965 = vand.u32 %v797, 4294901760
        %v2966 = vsub.f32 %v797, %v2965
        %v2967 = vand.u32 %v2966, 4294901760
        %v2968 = vsub.f32 %v2966, %v2967
        %v2969 = vand.u32 %v2968, 4294901760
        %2970 = vmatpush1.msra.mxu0 %v2969
        %2971 = vmatprep.subr.mxu0 0.0
        %v2972 = vand.u32 %v791, 4294901760
        %v2973 = vsub.f32 %v791, %v2972
        %v2974 = vand.u32 %v2973, 4294901760
        %v2975 = vsub.f32 %v2973, %v2974
        %v2976 = vand.u32 %v2975, 4294901760
        %2977 = vmatpush1.msra.mxu0 %v2976
        %2978 = vmatprep.subr.mxu0 0.0
        %2979 = vmatpush2.msra.mxu0 0.0
        %2980 = vmatprep.subr.mxu0 0.0
        %2981 = vmatpush2.msra.mxu0 0.0
        %2982 = vmatprep.subr.mxu0 0.0
        %2983 = vmatpush2.msra.mxu0 0.0
        %2984 = vmatprep.subr.mxu0 0.0
        %2985 = vmatpush2.msra.mxu0 0.0
        %2986 = vmatprep.subr.mxu0 0.0
        %2987 = vmatpush2.msra.mxu0 0.0
        %2988 = vmatprep.subr.mxu0 0.0
        %2989 = vmatpush2.msra.mxu0 0.0
        %2990 = vmatprep.subr.mxu0 0.0
        %2991 = vmatpush2.msra.mxu0 0.0
        %2992 = vmatprep.subr.mxu0 0.0
        %2993 = vmatpush2.msra.mxu0 0.0
        %2994 = vmatprep.subr.mxu0 0.0
        %2995 = vmatpush2.msra.mxu0 0.0
        %2996 = vmatprep.subr.mxu0 0.0
        %2997 = vmatpush2.msra.mxu0 0.0
        %2998 = vmatprep.subr.mxu0 0.0
        %2999 = vmatpush2.msra.mxu0 0.0
        %3000 = vmatprep.subr.mxu0 0.0
        %3001 = vmatpush2.msra.mxu0 0.0
        %3002 = vmatprep.subr.mxu0 0.0
        %3003 = vmatpush2.msra.mxu0 0.0
        %3004 = vmatprep.subr.mxu0 0.0
        %3005 = vmatpush2.msra.mxu0 0.0
        %3006 = vmatprep.subr.mxu0 0.0
        %3007 = vmatpush2.msra.mxu0 0.0
        %3008 = vmatprep.subr.mxu0 0.0
        %3009 = vmatpush2.msra.mxu0 0.0
        %3010 = vmatprep.mubr.f32.mxu0 0.0
        %v3011 = vand.u32 %v2845, 4294901760
        %3012 = vmatmul.mubr.f32.gmra.mxu0 %v3011
        %v3013 = vpop.f32.mrf.mxu0
        %v3014 = vadd.f32 %v2923, %v3013
        %v3015 = vpop.f32.mrf.mxu0
        %3016 = vdwg.mxu0
        %3017 = vmatprep.subr.mxu0 0.0
        %3018 = vmatpush1.msra.mxu0 0.0
        %3019 = vmatprep.subr.mxu0 0.0
        %3020 = vmatpush1.msra.mxu0 0.0
        %3021 = vmatprep.subr.mxu0 0.0
        %3022 = vmatpush1.msra.mxu0 0.0
        %3023 = vmatprep.subr.mxu0 0.0
        %3024 = vmatpush1.msra.mxu0 0.0
        %3025 = vmatprep.subr.mxu0 0.0
        %3026 = vmatpush1.msra.mxu0 0.0
        %3027 = vmatprep.subr.mxu0 0.0
        %3028 = vmatpush1.msra.mxu0 0.0
        %3029 = vmatprep.subr.mxu0 0.0
        %3030 = vmatpush1.msra.mxu0 0.0
        %3031 = vmatprep.subr.mxu0 0.0
        %3032 = vmatpush1.msra.mxu0 0.0
        %3033 = vmatprep.subr.mxu0 0.0
        %3034 = vmatpush1.msra.mxu0 0.0
        %3035 = vmatprep.subr.mxu0 0.0
        %3036 = vmatpush1.msra.mxu0 0.0
        %3037 = vmatprep.subr.mxu0 0.0
        %3038 = vmatpush1.msra.mxu0 0.0
        %3039 = vmatprep.subr.mxu0 0.0
        %3040 = vmatpush1.msra.mxu0 0.0
        %3041 = vmatprep.subr.mxu0 0.0
        %v3042 = vand.u32 %v809, 4294901760
        %v3043 = vsub.f32 %v809, %v3042
        %3044 = vmatpush1.msra.mxu0 %v3043
        %3045 = vmatprep.subr.mxu0 0.0
        %v3046 = vand.u32 %v803, 4294901760
        %v3047 = vsub.f32 %v803, %v3046
        %3048 = vmatpush1.msra.mxu0 %v3047
        %3049 = vmatprep.subr.mxu0 0.0
        %v3050 = vand.u32 %v797, 4294901760
        %v3051 = vsub.f32 %v797, %v3050
        %3052 = vmatpush1.msra.mxu0 %v3051
        %3053 = vmatprep.subr.mxu0 0.0
        %v3054 = vand.u32 %v791, 4294901760
        %v3055 = vsub.f32 %v791, %v3054
        %3056 = vmatpush1.msra.mxu0 %v3055
        %3057 = vmatprep.subr.mxu0 0.0
        %3058 = vmatpush2.msra.mxu0 0.0
        %3059 = vmatprep.subr.mxu0 0.0
        %3060 = vmatpush2.msra.mxu0 0.0
        %3061 = vmatprep.subr.mxu0 0.0
        %3062 = vmatpush2.msra.mxu0 0.0
        %3063 = vmatprep.subr.mxu0 0.0
        %3064 = vmatpush2.msra.mxu0 0.0
        %3065 = vmatprep.subr.mxu0 0.0
        %3066 = vmatpush2.msra.mxu0 0.0
        %3067 = vmatprep.subr.mxu0 0.0
        %3068 = vmatpush2.msra.mxu0 0.0
        %3069 = vmatprep.subr.mxu0 0.0
        %3070 = vmatpush2.msra.mxu0 0.0
        %3071 = vmatprep.subr.mxu0 0.0
        %3072 = vmatpush2.msra.mxu0 0.0
        %3073 = vmatprep.subr.mxu0 0.0
        %3074 = vmatpush2.msra.mxu0 0.0
        %3075 = vmatprep.subr.mxu0 0.0
        %3076 = vmatpush2.msra.mxu0 0.0
        %3077 = vmatprep.subr.mxu0 0.0
        %3078 = vmatpush2.msra.mxu0 0.0
        %3079 = vmatprep.subr.mxu0 0.0
        %3080 = vmatpush2.msra.mxu0 0.0
        %3081 = vmatprep.subr.mxu0 0.0
        %3082 = vmatpush2.msra.mxu0 0.0
        %3083 = vmatprep.subr.mxu0 0.0
        %3084 = vmatpush2.msra.mxu0 0.0
        %3085 = vmatprep.subr.mxu0 0.0
        %3086 = vmatpush2.msra.mxu0 0.0
        %3087 = vmatprep.subr.mxu0 0.0
        %3088 = vmatpush2.msra.mxu0 0.0
        %3089 = vmatprep.mubr.f32.mxu0 0.0
        %v3090 = vand.u32 %v2845, 4294901760
        %v3091 = vsub.f32 %v2845, %v3090
        %3092 = vmatmul.mubr.f32.gmra.mxu0 %v3091
        %v3093 = vpop.f32.mrf.mxu0
        %v3094 = vadd.f32 %v3014, %v3093
        %v3095 = vpop.f32.mrf.mxu0
        %3096 = vdwg.mxu0
        %3097 = vmatprep.subr.mxu0 0.0
        %3098 = vmatpush1.msra.mxu0 0.0
        %3099 = vmatprep.subr.mxu0 0.0
        %3100 = vmatpush1.msra.mxu0 0.0
        %3101 = vmatprep.subr.mxu0 0.0
        %3102 = vmatpush1.msra.mxu0 0.0
        %3103 = vmatprep.subr.mxu0 0.0
        %3104 = vmatpush1.msra.mxu0 0.0
        %3105 = vmatprep.subr.mxu0 0.0
        %3106 = vmatpush1.msra.mxu0 0.0
        %3107 = vmatprep.subr.mxu0 0.0
        %3108 = vmatpush1.msra.mxu0 0.0
        %3109 = vmatprep.subr.mxu0 0.0
        %3110 = vmatpush1.msra.mxu0 0.0
        %3111 = vmatprep.subr.mxu0 0.0
        %3112 = vmatpush1.msra.mxu0 0.0
        %3113 = vmatprep.subr.mxu0 0.0
        %3114 = vmatpush1.msra.mxu0 0.0
        %3115 = vmatprep.subr.mxu0 0.0
        %3116 = vmatpush1.msra.mxu0 0.0
        %3117 = vmatprep.subr.mxu0 0.0
        %3118 = vmatpush1.msra.mxu0 0.0
        %3119 = vmatprep.subr.mxu0 0.0
        %3120 = vmatpush1.msra.mxu0 0.0
        %3121 = vmatprep.subr.mxu0 0.0
        %v3122 = vand.u32 %v809, 4294901760
        %3123 = vmatpush1.msra.mxu0 %v3122
        %3124 = vmatprep.subr.mxu0 0.0
        %v3125 = vand.u32 %v803, 4294901760
        %3126 = vmatpush1.msra.mxu0 %v3125
        %3127 = vmatprep.subr.mxu0 0.0
        %v3128 = vand.u32 %v797, 4294901760
        %3129 = vmatpush1.msra.mxu0 %v3128
        %3130 = vmatprep.subr.mxu0 0.0
        %v3131 = vand.u32 %v791, 4294901760
        %3132 = vmatpush1.msra.mxu0 %v3131
        %3133 = vmatprep.subr.mxu0 0.0
        %3134 = vmatpush2.msra.mxu0 0.0
        %3135 = vmatprep.subr.mxu0 0.0
        %3136 = vmatpush2.msra.mxu0 0.0
        %3137 = vmatprep.subr.mxu0 0.0
        %3138 = vmatpush2.msra.mxu0 0.0
        %3139 = vmatprep.subr.mxu0 0.0
        %3140 = vmatpush2.msra.mxu0 0.0
        %3141 = vmatprep.subr.mxu0 0.0
        %3142 = vmatpush2.msra.mxu0 0.0
        %3143 = vmatprep.subr.mxu0 0.0
        %3144 = vmatpush2.msra.mxu0 0.0
        %3145 = vmatprep.subr.mxu0 0.0
        %3146 = vmatpush2.msra.mxu0 0.0
        %3147 = vmatprep.subr.mxu0 0.0
        %3148 = vmatpush2.msra.mxu0 0.0
        %3149 = vmatprep.subr.mxu0 0.0
        %3150 = vmatpush2.msra.mxu0 0.0
        %3151 = vmatprep.subr.mxu0 0.0
        %3152 = vmatpush2.msra.mxu0 0.0
        %3153 = vmatprep.subr.mxu0 0.0
        %3154 = vmatpush2.msra.mxu0 0.0
        %3155 = vmatprep.subr.mxu0 0.0
        %3156 = vmatpush2.msra.mxu0 0.0
        %3157 = vmatprep.subr.mxu0 0.0
        %3158 = vmatpush2.msra.mxu0 0.0
        %3159 = vmatprep.subr.mxu0 0.0
        %3160 = vmatpush2.msra.mxu0 0.0
        %3161 = vmatprep.subr.mxu0 0.0
        %3162 = vmatpush2.msra.mxu0 0.0
        %3163 = vmatprep.subr.mxu0 0.0
        %3164 = vmatpush2.msra.mxu0 0.0
        %3165 = vmatprep.mubr.f32.mxu0 0.0
        %v3166 = vand.u32 %v2845, 4294901760
        %v3167 = vsub.f32 %v2845, %v3166
        %v3168 = vand.u32 %v3167, 4294901760
        %3169 = vmatmul.mubr.f32.gmra.mxu0 %v3168
        %v3170 = vpop.f32.mrf.mxu0
        %v3171 = vadd.f32 %v3094, %v3170
        %v3172 = vpop.f32.mrf.mxu0
        %3173 = vdwg.mxu0
        %3174 = vmatprep.subr.mxu0 0.0
        %3175 = vmatpush1.msra.mxu0 0.0
        %3176 = vmatprep.subr.mxu0 0.0
        %3177 = vmatpush1.msra.mxu0 0.0
        %3178 = vmatprep.subr.mxu0 0.0
        %3179 = vmatpush1.msra.mxu0 0.0
        %3180 = vmatprep.subr.mxu0 0.0
        %3181 = vmatpush1.msra.mxu0 0.0
        %3182 = vmatprep.subr.mxu0 0.0
        %3183 = vmatpush1.msra.mxu0 0.0
        %3184 = vmatprep.subr.mxu0 0.0
        %3185 = vmatpush1.msra.mxu0 0.0
        %3186 = vmatprep.subr.mxu0 0.0
        %3187 = vmatpush1.msra.mxu0 0.0
        %3188 = vmatprep.subr.mxu0 0.0
        %3189 = vmatpush1.msra.mxu0 0.0
        %3190 = vmatprep.subr.mxu0 0.0
        %3191 = vmatpush1.msra.mxu0 0.0
        %3192 = vmatprep.subr.mxu0 0.0
        %3193 = vmatpush1.msra.mxu0 0.0
        %3194 = vmatprep.subr.mxu0 0.0
        %3195 = vmatpush1.msra.mxu0 0.0
        %3196 = vmatprep.subr.mxu0 0.0
        %3197 = vmatpush1.msra.mxu0 0.0
        %3198 = vmatprep.subr.mxu0 0.0
        %v3199 = vand.u32 %v809, 4294901760
        %v3200 = vsub.f32 %v809, %v3199
        %v3201 = vand.u32 %v3200, 4294901760
        %3202 = vmatpush1.msra.mxu0 %v3201
        %3203 = vmatprep.subr.mxu0 0.0
        %v3204 = vand.u32 %v803, 4294901760
        %v3205 = vsub.f32 %v803, %v3204
        %v3206 = vand.u32 %v3205, 4294901760
        %3207 = vmatpush1.msra.mxu0 %v3206
        %3208 = vmatprep.subr.mxu0 0.0
        %v3209 = vand.u32 %v797, 4294901760
        %v3210 = vsub.f32 %v797, %v3209
        %v3211 = vand.u32 %v3210, 4294901760
        %3212 = vmatpush1.msra.mxu0 %v3211
        %3213 = vmatprep.subr.mxu0 0.0
        %v3214 = vand.u32 %v791, 4294901760
        %v3215 = vsub.f32 %v791, %v3214
        %v3216 = vand.u32 %v3215, 4294901760
        %3217 = vmatpush1.msra.mxu0 %v3216
        %3218 = vmatprep.subr.mxu0 0.0
        %3219 = vmatpush2.msra.mxu0 0.0
        %3220 = vmatprep.subr.mxu0 0.0
        %3221 = vmatpush2.msra.mxu0 0.0
        %3222 = vmatprep.subr.mxu0 0.0
        %3223 = vmatpush2.msra.mxu0 0.0
        %3224 = vmatprep.subr.mxu0 0.0
        %3225 = vmatpush2.msra.mxu0 0.0
        %3226 = vmatprep.subr.mxu0 0.0
        %3227 = vmatpush2.msra.mxu0 0.0
        %3228 = vmatprep.subr.mxu0 0.0
        %3229 = vmatpush2.msra.mxu0 0.0
        %3230 = vmatprep.subr.mxu0 0.0
        %3231 = vmatpush2.msra.mxu0 0.0
        %3232 = vmatprep.subr.mxu0 0.0
        %3233 = vmatpush2.msra.mxu0 0.0
        %3234 = vmatprep.subr.mxu0 0.0
        %3235 = vmatpush2.msra.mxu0 0.0
        %3236 = vmatprep.subr.mxu0 0.0
        %3237 = vmatpush2.msra.mxu0 0.0
        %3238 = vmatprep.subr.mxu0 0.0
        %3239 = vmatpush2.msra.mxu0 0.0
        %3240 = vmatprep.subr.mxu0 0.0
        %3241 = vmatpush2.msra.mxu0 0.0
        %3242 = vmatprep.subr.mxu0 0.0
        %3243 = vmatpush2.msra.mxu0 0.0
        %3244 = vmatprep.subr.mxu0 0.0
        %3245 = vmatpush2.msra.mxu0 0.0
        %3246 = vmatprep.subr.mxu0 0.0
        %3247 = vmatpush2.msra.mxu0 0.0
        %3248 = vmatprep.subr.mxu0 0.0
        %3249 = vmatpush2.msra.mxu0 0.0
        %3250 = vmatprep.mubr.f32.mxu0 0.0
        %v3251 = vand.u32 %v2845, 4294901760
        %3252 = vmatmul.mubr.f32.gmra.mxu0 %v3251
        %v3253 = vpop.f32.mrf.mxu0
        %v3254 = vadd.f32 %v3171, %v3253
        %v3255 = vpop.f32.mrf.mxu0
        %3256 = vdwg.mxu0
        %3257 = vmatprep.subr.mxu0 0.0
        %3258 = vmatpush1.msra.mxu0 0.0
        %3259 = vmatprep.subr.mxu0 0.0
        %3260 = vmatpush1.msra.mxu0 0.0
        %3261 = vmatprep.subr.mxu0 0.0
        %3262 = vmatpush1.msra.mxu0 0.0
        %3263 = vmatprep.subr.mxu0 0.0
        %3264 = vmatpush1.msra.mxu0 0.0
        %3265 = vmatprep.subr.mxu0 0.0
        %3266 = vmatpush1.msra.mxu0 0.0
        %3267 = vmatprep.subr.mxu0 0.0
        %3268 = vmatpush1.msra.mxu0 0.0
        %3269 = vmatprep.subr.mxu0 0.0
        %3270 = vmatpush1.msra.mxu0 0.0
        %3271 = vmatprep.subr.mxu0 0.0
        %3272 = vmatpush1.msra.mxu0 0.0
        %3273 = vmatprep.subr.mxu0 0.0
        %3274 = vmatpush1.msra.mxu0 0.0
        %3275 = vmatprep.subr.mxu0 0.0
        %3276 = vmatpush1.msra.mxu0 0.0
        %3277 = vmatprep.subr.mxu0 0.0
        %3278 = vmatpush1.msra.mxu0 0.0
        %3279 = vmatprep.subr.mxu0 0.0
        %3280 = vmatpush1.msra.mxu0 0.0
        %3281 = vmatprep.subr.mxu0 0.0
        %v3282 = vand.u32 %v809, 4294901760
        %3283 = vmatpush1.msra.mxu0 %v3282
        %3284 = vmatprep.subr.mxu0 0.0
        %v3285 = vand.u32 %v803, 4294901760
        %3286 = vmatpush1.msra.mxu0 %v3285
        %3287 = vmatprep.subr.mxu0 0.0
        %v3288 = vand.u32 %v797, 4294901760
        %3289 = vmatpush1.msra.mxu0 %v3288
        %3290 = vmatprep.subr.mxu0 0.0
        %v3291 = vand.u32 %v791, 4294901760
        %3292 = vmatpush1.msra.mxu0 %v3291
        %3293 = vmatprep.subr.mxu0 0.0
        %3294 = vmatpush2.msra.mxu0 0.0
        %3295 = vmatprep.subr.mxu0 0.0
        %3296 = vmatpush2.msra.mxu0 0.0
        %3297 = vmatprep.subr.mxu0 0.0
        %3298 = vmatpush2.msra.mxu0 0.0
        %3299 = vmatprep.subr.mxu0 0.0
        %3300 = vmatpush2.msra.mxu0 0.0
        %3301 = vmatprep.subr.mxu0 0.0
        %3302 = vmatpush2.msra.mxu0 0.0
        %3303 = vmatprep.subr.mxu0 0.0
        %3304 = vmatpush2.msra.mxu0 0.0
        %3305 = vmatprep.subr.mxu0 0.0
        %3306 = vmatpush2.msra.mxu0 0.0
        %3307 = vmatprep.subr.mxu0 0.0
        %3308 = vmatpush2.msra.mxu0 0.0
        %3309 = vmatprep.subr.mxu0 0.0
        %3310 = vmatpush2.msra.mxu0 0.0
        %3311 = vmatprep.subr.mxu0 0.0
        %3312 = vmatpush2.msra.mxu0 0.0
        %3313 = vmatprep.subr.mxu0 0.0
        %3314 = vmatpush2.msra.mxu0 0.0
        %3315 = vmatprep.subr.mxu0 0.0
        %3316 = vmatpush2.msra.mxu0 0.0
        %3317 = vmatprep.subr.mxu0 0.0
        %3318 = vmatpush2.msra.mxu0 0.0
        %3319 = vmatprep.subr.mxu0 0.0
        %3320 = vmatpush2.msra.mxu0 0.0
        %3321 = vmatprep.subr.mxu0 0.0
        %3322 = vmatpush2.msra.mxu0 0.0
        %3323 = vmatprep.subr.mxu0 0.0
        %3324 = vmatpush2.msra.mxu0 0.0
        %3325 = vmatprep.mubr.f32.mxu0 0.0
        %v3326 = vand.u32 %v2845, 4294901760
        %3327 = vmatmul.mubr.f32.gmra.mxu0 %v3326
        %v3328 = vpop.f32.mrf.mxu0
        %v3329 = vadd.f32 %v3254, %v3328
        %v3330 = vpop.f32.mrf.mxu0
        %3331 = vdwg.mxu0
        %v3332 = vmul.f32 %v3329, %v3329
        %v3333 = vsel %vm822, %v3332, 0.0
        %3334 = vadd.xlane.f32.xlu0 %v3333
        %v3335 = vpop.xlane.xlu0 %3334
        %v3336 = vadd.f32 %v3335, 1.0
        %v3337 = vrcp.pop %v3336
        %v3338 = vmul.f32 %v3335, %v3337
        %v3339 = vadd.f32 %v3335, 1e-09
        %v3340 = vrsqrt.pop %v3339
        %v3341 = vmul.f32 %v3338, %v3340
        %v3342 = vmul.f32 %v3341, %v3329
        %3343 = vst.msk [vmem:[%s176] sm:$0xf] %vm822, %v3342
        %s3344 = sand.u32 %s75, 1
        %s3345 = scalar_lea.sflag [#allocation4], %s3344
        %s3346 = sand.u32 %s75, 1
        %s3347 = smul.addr %s3346, 4
        %s3348 = scalar_lea.vmem [#allocation7], %s3347
        // Predicated region
        $region37: #{tpu_custom_call.1} parent=27 // pred_check
          %p3349 = pneg %p85
        $region38: #{tpu_custom_call.1} parent=27 // pred_check_branch
          %3351 = sbr.rel (%p3349) target = $region40
        $region39: #{tpu_custom_call.1} parent=27 // pred_region
          %s3353 = ssub.s32 64, 64
          %3354 = vsyncadd %s3345, %s3353
          %s3355 = smul.addr %s20, 64
          %s3356 = scalar_lea.hbm %s2, %s3355
          %s3358 = sshll.u32 %s3348, 4
          %s3359 = int_to_ptr.vmem [resolvable:$true] %s3358
          %3361 = dma.vmem_to_hbm [thread:$0]  %s3359, 64, %s3356, %s3345
        $region40: #{tpu_custom_call.1} parent=27 // pred_fallthru
          _
      $region28: #{tpu_custom_call.1} parent=5 // pred_fallthru
        _
      %p3362 = scmp.le.s32.totalorder 2, %s15
      // Predicated region
      $region41: #{tpu_custom_call.1} parent=5 // pred_check
        %p3363 = pneg %p3362
      $region42: #{tpu_custom_call.1} parent=5 // pred_check_branch
        %3365 = sbr.rel (%p3363) target = $region44
      $region43: #{tpu_custom_call.1} parent=5 // pred_region
        %s3366 = ssub.s32 %s15, 2
        // Predicated region
        $region45: #{tpu_custom_call.1} parent=43 // pred_check
          %p3367 = pneg %p91
        $region46: #{tpu_custom_call.1} parent=43 // pred_check_branch
          %3369 = sbr.rel (%p3367) target = $region48
        $region47: #{tpu_custom_call.1} parent=43 // pred_region
          %s3370 = sand.u32 %s76, 1
          %s3371 = scalar_lea.sflag [#allocation4], %s3370
          %s3372 = sand.u32 %s76, 1
          %s3373 = smul.addr %s3372, 4
          %s3374 = scalar_lea.vmem [#allocation7], %s3373
          %3375 = dma.done %s3371, 64
        $region48: #{tpu_custom_call.1} parent=43 // pred_fallthru
          _
      $region44: #{tpu_custom_call.1} parent=5 // pred_fallthru
        _
    $region6: #{tpu_custom_call.1} parent=1 // loop_footer
      %s19 = sadd.s32 1, %s15
    $region7: #{tpu_custom_call.1} parent=1 // loop_footer_branch
      %14 = sbr.rel target = $region3
    $region8: #{tpu_custom_call.1} parent=1 // loop_exit
      _
    %3376 = vsyncpa [#allocation3], 1
    %s3377 = scalar_lea.sflag [#allocation3], 1
    %3378 = vsyncpa %s3377, 1
    %3379 = vsyncpa [#allocation6], 1
    %3380 = vsyncpa [#allocation4], 1
    %s3381 = scalar_lea.sflag [#allocation4], 1
    %3382 = vsyncpa %s3381, 1

</llo_original>
